<compile_context>
chip_gen: v6e
topology: v6e:2x2x1
jax: 0.10.0
libtpu: 0.0.40
codegen_flags: <defaults>
</compile_context>

<pallas_src>
import math

import jax
import jax.numpy as jnp
from jax.experimental import pallas as pl
from jax.experimental.pallas import tpu as pltpu


HEAD_TK = 640  # K tile for the fused head matmul (multiple of 128; 5 * 640 = 3200)


# ---------------------------------------------------------------------------
# Conv matmul kernel (im2col GEMM + bias + ReLU), M tiled over a parallel grid
# ---------------------------------------------------------------------------

def _matmul_bias_relu_kernel(x_ref, w_ref, b_ref, o_ref):
    y = jnp.dot(x_ref[...], w_ref[...], preferred_element_type=jnp.float32)
    o_ref[...] = jnp.maximum(y + b_ref[...], 0.0)


def _pick_block_m(m, target=256):
    """Largest multiple-of-8 divisor of m that is <= target (else the full m)."""
    if m % 8:
        return m
    best = 8
    for d in range(8, min(m, target) + 1, 8):
        if m % d == 0:
            best = d
    return best


def matmul_bias_relu(x, w, b):
    """relu(x @ w + b); M tiled on a 'parallel' grid axis (lets v7x use both TCs)."""
    M, K = x.shape
    N = w.shape[1]
    bm = _pick_block_m(M)
    return pl.pallas_call(
        _matmul_bias_relu_kernel,
        out_shape=jax.ShapeDtypeStruct((M, N), jnp.float32),
        grid=(M // bm,),
        in_specs=[
            pl.BlockSpec((bm, K), lambda i: (i, 0)),
            pl.BlockSpec((K, N), lambda i: (0, 0)),
            pl.BlockSpec((1, N), lambda i: (0, 0)),
        ],
        out_specs=pl.BlockSpec((bm, N), lambda i: (i, 0)),
        compiler_params=pltpu.CompilerParams(
            dimension_semantics=("parallel",)),
    )(x, w, b.reshape(1, N))


# ---------------------------------------------------------------------------
# im2col in NHWC order (no transposes between conv layers)
# ---------------------------------------------------------------------------

def im2col_nhwc(x, kh, kw, stride):
    """Patches of an NHWC tensor as (B*OH*OW, kh*kw*C); K-order = (kh, kw, c)."""
    B, H, W, C = x.shape
    OH = (H - kh) // stride + 1
    OW = (W - kw) // stride + 1
    taps = []
    for i in range(kh):
        for j in range(kw):
            taps.append(x[:, i:i + stride * OH:stride, j:j + stride * OW:stride, :])
    cols = jnp.stack(taps, axis=3)                   # (B, OH, OW, kh*kw, C)
    return cols.reshape(B * OH * OW, kh * kw * C), OH, OW


def conv_weight_matrix(w):
    """Torch Conv2d weight (Cout,Cin,kh,kw) -> (kh*kw*Cin, Cout) matching im2col_nhwc."""
    cout, cin, kh, kw = w.shape
    return jnp.transpose(w, (2, 3, 1, 0)).reshape(kh * kw * cin, cout)


def conv2d_relu_nhwc(x, wmat, b, kh, kw, stride):
    """PyTorch-semantics Conv2d + ReLU on an NHWC tensor (weight pre-reshaped)."""
    B = x.shape[0]
    cout = wmat.shape[1]
    cols, OH, OW = im2col_nhwc(x, kh, kw, stride)
    out = matmul_bias_relu(cols, wmat, b)            # (B*OH*OW, Cout)
    return out.reshape(B, OH, OW, cout)


# ---------------------------------------------------------------------------
# Fused noisy dueling head: K-tiled bf16 matmul + accumulator + dueling combine
# ---------------------------------------------------------------------------

def dueling_head(conv_out, params, hidden, n_actions):
    B, k_pad = conv_out.shape
    nh = 2 * hidden
    n_k = k_pad // HEAD_TK

    def kernel(x_ref, w1_ref, b1_ref, wov_ref, bov_ref, woa_ref, boa_ref,
               q_ref, acc_ref):
        k = pl.program_id(0)

        @pl.when(k == 0)
        def _init():
            acc_ref[...] = jnp.zeros_like(acc_ref)

        # Fused value|advantage hidden layer, K-tiled; bf16 feeds the MXU,
        # accumulation stays f32.
        acc_ref[...] += jnp.dot(x_ref[...].astype(jnp.bfloat16), w1_ref[...],
                                preferred_element_type=jnp.float32)

        @pl.when(k == pl.num_programs(0) - 1)
        def _finalize():
            h = jnp.maximum(acc_ref[...] + b1_ref[...], 0.0)
            hv = h[:, :hidden]            # 128-aligned lane slices
            ha = h[:, hidden:]
            v = jnp.dot(hv, wov_ref[...],
                        preferred_element_type=jnp.float32) + bov_ref[...]
            a = jnp.dot(ha, woa_ref[...],
                        preferred_element_type=jnp.float32) + boa_ref[...]
            q_ref[...] = v + a - jnp.mean(a, axis=-1, keepdims=True)

    return pl.pallas_call(
        kernel,
        out_shape=jax.ShapeDtypeStruct((B, n_actions), jnp.float32),
        grid=(n_k,),
        in_specs=[
            pl.BlockSpec((B, HEAD_TK), lambda k: (0, k)),
            pl.BlockSpec((HEAD_TK, nh), lambda k: (k, 0)),
            pl.BlockSpec((1, nh), lambda k: (0, 0)),
            pl.BlockSpec((hidden, 1), lambda k: (0, 0)),
            pl.BlockSpec((1, 1), lambda k: (0, 0)),
            pl.BlockSpec((hidden, n_actions), lambda k: (0, 0)),
            pl.BlockSpec((1, n_actions), lambda k: (0, 0)),
        ],
        out_specs=pl.BlockSpec((B, n_actions), lambda k: (0, 0)),
        scratch_shapes=[pltpu.VMEM((B, nh), jnp.float32)],
        compiler_params=pltpu.CompilerParams(
            dimension_semantics=("arbitrary",)),
    )(conv_out, params["w1"], params["b1"], params["wov"], params["bov"],
      params["woa"], params["boa"])


# ---------------------------------------------------------------------------
# Deterministic parameter construction (done once, outside jit)
# ---------------------------------------------------------------------------

def conv_params(key, cout, cin, k):
    k1, k2 = jax.random.split(key)
    fan_in = cin * k * k
    bound = 1.0 / math.sqrt(fan_in)
    w = jax.random.uniform(k1, (cout, cin, k, k), minval=-bound, maxval=bound,
                           dtype=jnp.float32)
    b = jax.random.uniform(k2, (cout,), minval=-bound, maxval=bound,
                           dtype=jnp.float32)
    return w, b


def _scale_noise(key, size):
    x = jax.random.normal(key, (size,), dtype=jnp.float32)
    return jnp.sign(x) * jnp.sqrt(jnp.abs(x))


def noisy_linear_eff(key, in_f, out_f, std_init):
    """Training-mode effective NoisyLinear weights, torch layout (out, in)."""
    k1, k2, k3, k4 = jax.random.split(key, 4)
    mu_range = 1.0 / math.sqrt(in_f)
    weight_mu = jax.random.uniform(k1, (out_f, in_f), minval=-mu_range,
                                   maxval=mu_range, dtype=jnp.float32)
    weight_sigma = jnp.full((out_f, in_f), std_init / math.sqrt(in_f), jnp.float32)
    bias_mu = jax.random.uniform(k2, (out_f,), minval=-mu_range,
                                 maxval=mu_range, dtype=jnp.float32)
    bias_sigma = jnp.full((out_f,), std_init / math.sqrt(out_f), jnp.float32)
    eps_in = _scale_noise(k3, in_f)
    eps_out = _scale_noise(k4, out_f)
    w_eff = weight_mu + weight_sigma * jnp.outer(eps_out, eps_in)
    b_eff = bias_mu + bias_sigma * eps_out
    return w_eff, b_eff


def build_head_params(kv_h, kv_o, ka_h, ka_o, *, conv_c, conv_h, conv_w,
                      hidden, n_actions, std, k_pad):
    in_f = conv_c * conv_h * conv_w
    whv, bhv = noisy_linear_eff(kv_h, in_f, hidden, std)
    wov, bov = noisy_linear_eff(kv_o, hidden, 1, std)
    wha, bha = noisy_linear_eff(ka_h, in_f, hidden, std)
    woa, boa = noisy_linear_eff(ka_o, hidden, n_actions, std)

    def chw_to_hwc(w):  # torch flatten order (c,h,w) -> our NHWC order (h,w,c)
        return (w.reshape(-1, conv_c, conv_h, conv_w)
                 .transpose(0, 2, 3, 1).reshape(-1, in_f))

    # Fused first layer: columns [:hidden] = value stream, [hidden:] = advantage.
    w1 = jnp.concatenate([chw_to_hwc(whv), chw_to_hwc(wha)], axis=0).T  # (in_f, 2H)
    w1 = jnp.pad(w1, ((0, k_pad - in_f), (0, 0))).astype(jnp.bfloat16)  # zero K-pad
    b1 = jnp.concatenate([bhv, bha]).reshape(1, 2 * hidden)

    return dict(w1=w1, b1=b1,
                wov=wov.T, bov=bov.reshape(1, 1),
                woa=woa.T, boa=boa.reshape(1, n_actions))


# ---------------------------------------------------------------------------
# Main
# ---------------------------------------------------------------------------

if __name__ == "__main__":
    key = jax.random.PRNGKey(0)
    keys = jax.random.split(key, 8)

    # Module implies a 4x84x84 observation (conv_output_size == 3136); batch=2.
    B, C, H, W = 2, 4, 84, 84
    n_actions = 6
    hidden = 512
    noisy_std = 0.1

    x = jax.random.normal(keys[0], (B, C, H, W), dtype=jnp.float32)

    # Conv stack parameters, pre-reshaped once to matmul layout (outside jit).
    cw1, cb1 = conv_params(keys[1], 32, C, 8)
    cw2, cb2 = conv_params(keys[2], 64, 32, 4)
    cw3, cb3 = conv_params(keys[3], 64, 64, 3)
    wm1, wm2, wm3 = (conv_weight_matrix(w) for w in (cw1, cw2, cw3))

    # Noisy dueling head: effective training-mode weights, re-ordered to the
    # NHWC feature order, value|advantage concatenated, K zero-padded to a
    # multiple of HEAD_TK, hidden weight stored in bf16.
    conv_out_size = 64 * 7 * 7  # 3136
    k_pad = ((conv_out_size + HEAD_TK - 1) // HEAD_TK) * HEAD_TK  # 3200
    head = build_head_params(keys[4], keys[5], keys[6], keys[7],
                             conv_c=64, conv_h=7, conv_w=7, hidden=hidden,
                             n_actions=n_actions, std=noisy_std, k_pad=k_pad)

    def forward(x):
        xh = jnp.transpose(x, (0, 2, 3, 1))          # single NCHW -> NHWC transpose
        h = conv2d_relu_nhwc(xh, wm1, cb1, 8, 8, 4)  # (B, 20, 20, 32)
        h = conv2d_relu_nhwc(h, wm2, cb2, 4, 4, 2)   # (B, 9, 9, 64)
        h = conv2d_relu_nhwc(h, wm3, cb3, 3, 3, 1)   # (B, 7, 7, 64)
        conv_out = h.reshape(h.shape[0], -1)         # (B, 3136), (h, w, c) order
        conv_out = jnp.pad(conv_out, ((0, 0), (0, k_pad - conv_out.shape[1])))
        return dueling_head(conv_out, head, hidden, n_actions)

    q = jax.jit(forward)(x)
    jax.block_until_ready(q)
    assert q.shape == (B, n_actions) and q.dtype == jnp.float32
    print("KERNEL_OK")
</pallas_src>

<mosaic_0001>
module attributes {stable_mosaic.version = 11 : i64} {
  func.func @_matmul_bias_relu_kernel(%arg0: i32, %arg1: memref<200x256xf32, #tpu.memory_space<vmem>>, %arg2: memref<256x32xf32, #tpu.memory_space<vmem>>, %arg3: memref<1x32xf32, #tpu.memory_space<vmem>>, %arg4: memref<200x32xf32, #tpu.memory_space<vmem>>) attributes {dimension_semantics = [#tpu.dimension_semantics<parallel>], iteration_bounds = array<i64: 4>, scalar_prefetch = 0 : i64, scratch_operands = 0 : i64, tpu.core_type = #tpu.core_type<tc>, window_params = [{transform_indices = @transform_0, window_bounds = array<i64: 200, 256>}, {pipeline_mode = #tpu.pipeline_mode<synchronous>, transform_indices = @transform_1, window_bounds = array<i64: 256, 32>}, {pipeline_mode = #tpu.pipeline_mode<synchronous>, transform_indices = @transform_2, window_bounds = array<i64: 1, 32>}, {transform_indices = @transform_3, window_bounds = array<i64: 200, 32>}]} {
    %c0 = arith.constant 0 : index
    %c0_0 = arith.constant 0 : index
    %0 = vector.load %arg1[%c0, %c0_0] : memref<200x256xf32, #tpu.memory_space<vmem>>, vector<200x256xf32>
    %c0_1 = arith.constant 0 : index
    %c0_2 = arith.constant 0 : index
    %1 = vector.load %arg2[%c0_1, %c0_2] : memref<256x32xf32, #tpu.memory_space<vmem>>, vector<256x32xf32>
    %cst = arith.constant dense<0.000000e+00> : vector<200x32xf32>
    %2 = tpu.matmul %0, %1, %cst {dimension_numbers = #tpu.dot_dimension_numbers<[1], [0], [0], [1], [0, 0, 1, 1], [], []>} : vector<200x256xf32>, vector<256x32xf32>, vector<200x32xf32> -> vector<200x32xf32>
    %c0_3 = arith.constant 0 : index
    %c0_4 = arith.constant 0 : index
    %3 = vector.load %arg3[%c0_3, %c0_4] : memref<1x32xf32, #tpu.memory_space<vmem>>, vector<1x32xf32>
    %4 = vector.broadcast %3 : vector<1x32xf32> to vector<200x32xf32>
    %5 = arith.addf %2, %4 : vector<200x32xf32>
    %cst_5 = arith.constant 0.000000e+00 : f32
    %6 = vector.broadcast %cst_5 : f32 to vector<200x32xf32>
    %7 = arith.maximumf %5, %6 : vector<200x32xf32>
    %c0_6 = arith.constant 0 : index
    %c0_7 = arith.constant 0 : index
    %8 = vector.load %arg4[%c0_6, %c0_7] : memref<200x32xf32, #tpu.memory_space<vmem>>, vector<200x32xf32>
    tpu.vector_store %arg4[%c0_6, %c0_7], %7 {strides = array<i32>} : memref<200x32xf32, #tpu.memory_space<vmem>>, vector<200x32xf32>,
    return
  }
  func.func @transform_0(%arg0: i32) -> (i32, i32) {
    %c0_i32 = arith.constant 0 : i32
    %c0_i32_0 = arith.constant 0 : i32
    return %arg0, %c0_i32 : i32, i32
  }
  func.func @transform_1(%arg0: i32) -> (i32, i32) {
    %c0_i32 = arith.constant 0 : i32
    %c0_i32_0 = arith.constant 0 : i32
    %c0_i32_1 = arith.constant 0 : i32
    return %c0_i32, %c0_i32_0 : i32, i32
  }
  func.func @transform_2(%arg0: i32) -> (i32, i32) {
    %c0_i32 = arith.constant 0 : i32
    %c0_i32_0 = arith.constant 0 : i32
    %c0_i32_1 = arith.constant 0 : i32
    return %c0_i32, %c0_i32_0 : i32, i32
  }
  func.func @transform_3(%arg0: i32) -> (i32, i32) {
    %c0_i32 = arith.constant 0 : i32
    %c0_i32_0 = arith.constant 0 : i32
    return %arg0, %c0_i32 : i32, i32
  }
}

module attributes {stable_mosaic.version = 11 : i64} {
  func.func @_matmul_bias_relu_kernel(%arg0: i32, %arg1: memref<162x512xf32, #tpu.memory_space<vmem>>, %arg2: memref<512x64xf32, #tpu.memory_space<vmem>>, %arg3: memref<1x64xf32, #tpu.memory_space<vmem>>, %arg4: memref<162x64xf32, #tpu.memory_space<vmem>>) attributes {dimension_semantics = [#tpu.dimension_semantics<parallel>], iteration_bounds = array<i64: 1>, scalar_prefetch = 0 : i64, scratch_operands = 0 : i64, tpu.core_type = #tpu.core_type<tc>, window_params = [{transform_indices = @transform_0, window_bounds = array<i64: 162, 512>}, {pipeline_mode = #tpu.pipeline_mode<synchronous>, transform_indices = @transform_1, window_bounds = array<i64: 512, 64>}, {pipeline_mode = #tpu.pipeline_mode<synchronous>, transform_indices = @transform_2, window_bounds = array<i64: 1, 64>}, {transform_indices = @transform_3, window_bounds = array<i64: 162, 64>}]} {
    %c0 = arith.constant 0 : index
    %c0_0 = arith.constant 0 : index
    %0 = vector.load %arg1[%c0, %c0_0] : memref<162x512xf32, #tpu.memory_space<vmem>>, vector<162x512xf32>
    %c0_1 = arith.constant 0 : index
    %c0_2 = arith.constant 0 : index
    %1 = vector.load %arg2[%c0_1, %c0_2] : memref<512x64xf32, #tpu.memory_space<vmem>>, vector<512x64xf32>
    %cst = arith.constant dense<0.000000e+00> : vector<162x64xf32>
    %2 = tpu.matmul %0, %1, %cst {dimension_numbers = #tpu.dot_dimension_numbers<[1], [0], [0], [1], [0, 0, 1, 1], [], []>} : vector<162x512xf32>, vector<512x64xf32>, vector<162x64xf32> -> vector<162x64xf32>
    %c0_3 = arith.constant 0 : index
    %c0_4 = arith.constant 0 : index
    %3 = vector.load %arg3[%c0_3, %c0_4] : memref<1x64xf32, #tpu.memory_space<vmem>>, vector<1x64xf32>
    %4 = vector.broadcast %3 : vector<1x64xf32> to vector<162x64xf32>
    %5 = arith.addf %2, %4 : vector<162x64xf32>
    %cst_5 = arith.constant 0.000000e+00 : f32
    %6 = vector.broadcast %cst_5 : f32 to vector<162x64xf32>
    %7 = arith.maximumf %5, %6 : vector<162x64xf32>
    %c0_6 = arith.constant 0 : index
    %c0_7 = arith.constant 0 : index
    %8 = vector.load %arg4[%c0_6, %c0_7] : memref<162x64xf32, #tpu.memory_space<vmem>>, vector<162x64xf32>
    tpu.vector_store %arg4[%c0_6, %c0_7], %7 {strides = array<i32>} : memref<162x64xf32, #tpu.memory_space<vmem>>, vector<162x64xf32>,
    return
  }
  func.func @transform_0(%arg0: i32) -> (i32, i32) {
    %c0_i32 = arith.constant 0 : i32
    %c0_i32_0 = arith.constant 0 : i32
    return %arg0, %c0_i32 : i32, i32
  }
  func.func @transform_1(%arg0: i32) -> (i32, i32) {
    %c0_i32 = arith.constant 0 : i32
    %c0_i32_0 = arith.constant 0 : i32
    %c0_i32_1 = arith.constant 0 : i32
    return %c0_i32, %c0_i32_0 : i32, i32
  }
  func.func @transform_2(%arg0: i32) -> (i32, i32) {
    %c0_i32 = arith.constant 0 : i32
    %c0_i32_0 = arith.constant 0 : i32
    %c0_i32_1 = arith.constant 0 : i32
    return %c0_i32, %c0_i32_0 : i32, i32
  }
  func.func @transform_3(%arg0: i32) -> (i32, i32) {
    %c0_i32 = arith.constant 0 : i32
    %c0_i32_0 = arith.constant 0 : i32
    return %arg0, %c0_i32 : i32, i32
  }
}

module attributes {stable_mosaic.version = 11 : i64} {
  func.func @_matmul_bias_relu_kernel(%arg0: i32, %arg1: memref<98x576xf32, #tpu.memory_space<vmem>>, %arg2: memref<576x64xf32, #tpu.memory_space<vmem>>, %arg3: memref<1x64xf32, #tpu.memory_space<vmem>>, %arg4: memref<98x64xf32, #tpu.memory_space<vmem>>) attributes {dimension_semantics = [#tpu.dimension_semantics<parallel>], iteration_bounds = array<i64: 1>, scalar_prefetch = 0 : i64, scratch_operands = 0 : i64, tpu.core_type = #tpu.core_type<tc>, window_params = [{transform_indices = @transform_0, window_bounds = array<i64: 98, 576>}, {pipeline_mode = #tpu.pipeline_mode<synchronous>, transform_indices = @transform_1, window_bounds = array<i64: 576, 64>}, {pipeline_mode = #tpu.pipeline_mode<synchronous>, transform_indices = @transform_2, window_bounds = array<i64: 1, 64>}, {transform_indices = @transform_3, window_bounds = array<i64: 98, 64>}]} {
    %c0 = arith.constant 0 : index
    %c0_0 = arith.constant 0 : index
    %0 = vector.load %arg1[%c0, %c0_0] : memref<98x576xf32, #tpu.memory_space<vmem>>, vector<98x576xf32>
    %c0_1 = arith.constant 0 : index
    %c0_2 = arith.constant 0 : index
    %1 = vector.load %arg2[%c0_1, %c0_2] : memref<576x64xf32, #tpu.memory_space<vmem>>, vector<576x64xf32>
    %cst = arith.constant dense<0.000000e+00> : vector<98x64xf32>
    %2 = tpu.matmul %0, %1, %cst {dimension_numbers = #tpu.dot_dimension_numbers<[1], [0], [0], [1], [0, 0, 1, 1], [], []>} : vector<98x576xf32>, vector<576x64xf32>, vector<98x64xf32> -> vector<98x64xf32>
    %c0_3 = arith.constant 0 : index
    %c0_4 = arith.constant 0 : index
    %3 = vector.load %arg3[%c0_3, %c0_4] : memref<1x64xf32, #tpu.memory_space<vmem>>, vector<1x64xf32>
    %4 = vector.broadcast %3 : vector<1x64xf32> to vector<98x64xf32>
    %5 = arith.addf %2, %4 : vector<98x64xf32>
    %cst_5 = arith.constant 0.000000e+00 : f32
    %6 = vector.broadcast %cst_5 : f32 to vector<98x64xf32>
    %7 = arith.maximumf %5, %6 : vector<98x64xf32>
    %c0_6 = arith.constant 0 : index
    %c0_7 = arith.constant 0 : index
    %8 = vector.load %arg4[%c0_6, %c0_7] : memref<98x64xf32, #tpu.memory_space<vmem>>, vector<98x64xf32>
    tpu.vector_store %arg4[%c0_6, %c0_7], %7 {strides = array<i32>} : memref<98x64xf32, #tpu.memory_space<vmem>>, vector<98x64xf32>,
    return
  }
  func.func @transform_0(%arg0: i32) -> (i32, i32) {
    %c0_i32 = arith.constant 0 : i32
    %c0_i32_0 = arith.constant 0 : i32
    return %arg0, %c0_i32 : i32, i32
  }
  func.func @transform_1(%arg0: i32) -> (i32, i32) {
    %c0_i32 = arith.constant 0 : i32
    %c0_i32_0 = arith.constant 0 : i32
    %c0_i32_1 = arith.constant 0 : i32
    return %c0_i32, %c0_i32_0 : i32, i32
  }
  func.func @transform_2(%arg0: i32) -> (i32, i32) {
    %c0_i32 = arith.constant 0 : i32
    %c0_i32_0 = arith.constant 0 : i32
    %c0_i32_1 = arith.constant 0 : i32
    return %c0_i32, %c0_i32_0 : i32, i32
  }
  func.func @transform_3(%arg0: i32) -> (i32, i32) {
    %c0_i32 = arith.constant 0 : i32
    %c0_i32_0 = arith.constant 0 : i32
    return %arg0, %c0_i32 : i32, i32
  }
}

module attributes {stable_mosaic.version = 11 : i64} {
  func.func @kernel(%arg0: i32, %arg1: memref<2x640xf32, #tpu.memory_space<vmem>>, %arg2: memref<640x1024xbf16, #tpu.memory_space<vmem>>, %arg3: memref<1x1024xf32, #tpu.memory_space<vmem>>, %arg4: memref<512x1xf32, #tpu.memory_space<vmem>>, %arg5: memref<1x1xf32, #tpu.memory_space<vmem>>, %arg6: memref<512x6xf32, #tpu.memory_space<vmem>>, %arg7: memref<1x6xf32, #tpu.memory_space<vmem>>, %arg8: memref<2x6xf32, #tpu.memory_space<vmem>>, %arg9: memref<2x1024xf32, #tpu.memory_space<vmem>>) attributes {dimension_semantics = [#tpu.dimension_semantics<arbitrary>], iteration_bounds = array<i64: 5>, scalar_prefetch = 0 : i64, scratch_operands = 1 : i64, tpu.core_type = #tpu.core_type<tc>, window_params = [{transform_indices = @transform_0, window_bounds = array<i64: 2, 640>}, {transform_indices = @transform_1, window_bounds = array<i64: 640, 1024>}, {pipeline_mode = #tpu.pipeline_mode<synchronous>, transform_indices = @transform_2, window_bounds = array<i64: 1, 1024>}, {pipeline_mode = #tpu.pipeline_mode<synchronous>, transform_indices = @transform_3, window_bounds = array<i64: 512, 1>}, {pipeline_mode = #tpu.pipeline_mode<synchronous>, transform_indices = @transform_4, window_bounds = array<i64: 1, 1>}, {pipeline_mode = #tpu.pipeline_mode<synchronous>, transform_indices = @transform_5, window_bounds = array<i64: 512, 6>}, {pipeline_mode = #tpu.pipeline_mode<synchronous>, transform_indices = @transform_6, window_bounds = array<i64: 1, 6>}, {pipeline_mode = #tpu.pipeline_mode<synchronous>, transform_indices = @transform_7, window_bounds = array<i64: 2, 6>}]} {
    %c0_i32 = arith.constant 0 : i32
    %0 = arith.cmpi eq, %arg0, %c0_i32 : i32
    %1 = arith.extui %0 : i1 to i32
    %c0_i32_0 = arith.constant 0 : i32
    %2 = arith.cmpi ne, %1, %c0_i32_0 : i32
    scf.if %2 {
      %cst_9 = arith.constant 0.000000e+00 : f32
      %13 = vector.broadcast %cst_9 : f32 to vector<2x1024xf32>
      %c0_10 = arith.constant 0 : index
      %c0_11 = arith.constant 0 : index
      %14 = vector.load %arg9[%c0_10, %c0_11] : memref<2x1024xf32, #tpu.memory_space<vmem>>, vector<2x1024xf32>
      tpu.vector_store %arg9[%c0_10, %c0_11], %13 {strides = array<i32>} : memref<2x1024xf32, #tpu.memory_space<vmem>>, vector<2x1024xf32>,
    } else {
    }
    %c0 = arith.constant 0 : index
    %c0_1 = arith.constant 0 : index
    %3 = vector.load %arg9[%c0, %c0_1] : memref<2x1024xf32, #tpu.memory_space<vmem>>, vector<2x1024xf32>
    %c0_2 = arith.constant 0 : index
    %c0_3 = arith.constant 0 : index
    %4 = vector.load %arg1[%c0_2, %c0_3] : memref<2x640xf32, #tpu.memory_space<vmem>>, vector<2x640xf32>
    %5 = arith.truncf %4 : vector<2x640xf32> to vector<2x640xbf16>
    %c0_4 = arith.constant 0 : index
    %c0_5 = arith.constant 0 : index
    %6 = vector.load %arg2[%c0_4, %c0_5] : memref<640x1024xbf16, #tpu.memory_space<vmem>>, vector<640x1024xbf16>
    %cst = arith.constant dense<0.000000e+00> : vector<2x1024xf32>
    %7 = tpu.matmul %5, %6, %cst {dimension_numbers = #tpu.dot_dimension_numbers<[1], [0], [0], [1], [0, 0, 1, 1], [], []>} : vector<2x640xbf16>, vector<640x1024xbf16>, vector<2x1024xf32> -> vector<2x1024xf32>
    %8 = arith.addf %3, %7 : vector<2x1024xf32>
    %c0_6 = arith.constant 0 : index
    %c0_7 = arith.constant 0 : index
    %9 = vector.load %arg9[%c0_6, %c0_7] : memref<2x1024xf32, #tpu.memory_space<vmem>>, vector<2x1024xf32>
    tpu.vector_store %arg9[%c0_6, %c0_7], %8 {strides = array<i32>} : memref<2x1024xf32, #tpu.memory_space<vmem>>, vector<2x1024xf32>,
    %c4_i32 = arith.constant 4 : i32
    %10 = arith.cmpi eq, %arg0, %c4_i32 : i32
    %11 = arith.extui %10 : i1 to i32
    %c0_i32_8 = arith.constant 0 : i32
    %12 = arith.cmpi ne, %11, %c0_i32_8 : i32
    scf.if %12 {
      %c0_9 = arith.constant 0 : index
      %c0_10 = arith.constant 0 : index
      %13 = vector.load %arg9[%c0_9, %c0_10] : memref<2x1024xf32, #tpu.memory_space<vmem>>, vector<2x1024xf32>
      %c0_11 = arith.constant 0 : index
      %c0_12 = arith.constant 0 : index
      %14 = vector.load %arg3[%c0_11, %c0_12] : memref<1x1024xf32, #tpu.memory_space<vmem>>, vector<1x1024xf32>
      %15 = vector.broadcast %14 : vector<1x1024xf32> to vector<2x1024xf32>
      %16 = arith.addf %13, %15 : vector<2x1024xf32>
      %cst_13 = arith.constant 0.000000e+00 : f32
      %17 = vector.broadcast %cst_13 : f32 to vector<2x1024xf32>
      %18 = arith.maximumf %16, %17 : vector<2x1024xf32>
      %19 = vector.extract_strided_slice %18 {offsets = [0, 0], sizes = [2, 512], strides = [1, 1]} : vector<2x1024xf32> to vector<2x512xf32>
      %20 = vector.extract_strided_slice %18 {offsets = [0, 512], sizes = [2, 512], strides = [1, 1]} : vector<2x1024xf32> to vector<2x512xf32>
      %c0_14 = arith.constant 0 : index
      %c0_15 = arith.constant 0 : index
      %21 = vector.load %arg4[%c0_14, %c0_15] : memref<512x1xf32, #tpu.memory_space<vmem>>, vector<512x1xf32>
      %cst_16 = arith.constant dense<0.000000e+00> : vector<2x1xf32>
      %22 = tpu.matmul %19, %21, %cst_16 {dimension_numbers = #tpu.dot_dimension_numbers<[1], [0], [0], [1], [0, 0, 1, 1], [], []>} : vector<2x512xf32>, vector<512x1xf32>, vector<2x1xf32> -> vector<2x1xf32>
      %c0_17 = arith.constant 0 : index
      %c0_18 = arith.constant 0 : index
      %23 = vector.load %arg5[%c0_17, %c0_18] : memref<1x1xf32, #tpu.memory_space<vmem>>, vector<1x1xf32>
      %24 = vector.broadcast %23 : vector<1x1xf32> to vector<2x1xf32>
      %25 = arith.addf %22, %24 : vector<2x1xf32>
      %c0_19 = arith.constant 0 : index
      %c0_20 = arith.constant 0 : index
      %26 = vector.load %arg6[%c0_19, %c0_20] : memref<512x6xf32, #tpu.memory_space<vmem>>, vector<512x6xf32>
      %cst_21 = arith.constant dense<0.000000e+00> : vector<2x6xf32>
      %27 = tpu.matmul %20, %26, %cst_21 {dimension_numbers = #tpu.dot_dimension_numbers<[1], [0], [0], [1], [0, 0, 1, 1], [], []>} : vector<2x512xf32>, vector<512x6xf32>, vector<2x6xf32> -> vector<2x6xf32>
      %c0_22 = arith.constant 0 : index
      %c0_23 = arith.constant 0 : index
      %28 = vector.load %arg7[%c0_22, %c0_23] : memref<1x6xf32, #tpu.memory_space<vmem>>, vector<1x6xf32>
      %29 = vector.broadcast %28 : vector<1x6xf32> to vector<2x6xf32>
      %30 = arith.addf %27, %29 : vector<2x6xf32>
      %31 = vector.broadcast %25 : vector<2x1xf32> to vector<2x6xf32>
      %32 = arith.addf %31, %30 : vector<2x6xf32>
      %cst_24 = arith.constant dense<0.000000e+00> : vector<2xf32>
      %33 = vector.multi_reduction <add>, %30, %cst_24 [1] : vector<2x6xf32> to vector<2xf32>
      %34 = vector.shape_cast %33 : vector<2xf32> to vector<2x1xf32>
      %cst_25 = arith.constant 6.000000e+00 : f32
      %35 = vector.broadcast %cst_25 : f32 to vector<2x1xf32>
      %36 = arith.divf %34, %35 : vector<2x1xf32>
      %37 = vector.broadcast %36 : vector<2x1xf32> to vector<2x6xf32>
      %38 = arith.subf %32, %37 : vector<2x6xf32>
      %c0_26 = arith.constant 0 : index
      %c0_27 = arith.constant 0 : index
      %39 = vector.load %arg8[%c0_26, %c0_27] : memref<2x6xf32, #tpu.memory_space<vmem>>, vector<2x6xf32>
      tpu.vector_store %arg8[%c0_26, %c0_27], %38 {strides = array<i32>} : memref<2x6xf32, #tpu.memory_space<vmem>>, vector<2x6xf32>,
    } else {
    }
    return
  }
  func.func @transform_0(%arg0: i32) -> (i32, i32) {
    %c0_i32 = arith.constant 0 : i32
    %c0_i32_0 = arith.constant 0 : i32
    return %c0_i32, %arg0 : i32, i32
  }
  func.func @transform_1(%arg0: i32) -> (i32, i32) {
    %c0_i32 = arith.constant 0 : i32
    %c0_i32_0 = arith.constant 0 : i32
    return %arg0, %c0_i32 : i32, i32
  }
  func.func @transform_2(%arg0: i32) -> (i32, i32) {
    %c0_i32 = arith.constant 0 : i32
    %c0_i32_0 = arith.constant 0 : i32
    %c0_i32_1 = arith.constant 0 : i32
    return %c0_i32, %c0_i32_0 : i32, i32
  }
  func.func @transform_3(%arg0: i32) -> (i32, i32) {
    %c0_i32 = arith.constant 0 : i32
    %c0_i32_0 = arith.constant 0 : i32
    %c0_i32_1 = arith.constant 0 : i32
    return %c0_i32, %c0_i32_0 : i32, i32
  }
  func.func @transform_4(%arg0: i32) -> (i32, i32) {
    %c0_i32 = arith.constant 0 : i32
    %c0_i32_0 = arith.constant 0 : i32
    %c0_i32_1 = arith.constant 0 : i32
    return %c0_i32, %c0_i32_0 : i32, i32
  }
  func.func @transform_5(%arg0: i32) -> (i32, i32) {
    %c0_i32 = arith.constant 0 : i32
    %c0_i32_0 = arith.constant 0 : i32
    %c0_i32_1 = arith.constant 0 : i32
    return %c0_i32, %c0_i32_0 : i32, i32
  }
  func.func @transform_6(%arg0: i32) -> (i32, i32) {
    %c0_i32 = arith.constant 0 : i32
    %c0_i32_0 = arith.constant 0 : i32
    %c0_i32_1 = arith.constant 0 : i32
    return %c0_i32, %c0_i32_0 : i32, i32
  }
  func.func @transform_7(%arg0: i32) -> (i32, i32) {
    %c0_i32 = arith.constant 0 : i32
    %c0_i32_0 = arith.constant 0 : i32
    %c0_i32_1 = arith.constant 0 : i32
    return %c0_i32, %c0_i32_0 : i32, i32
  }
}

</mosaic_0001>

<llo_original>
// kernel: forward.4
$region0: #{forward.4}
  #allocation0 [shape = 'u32[]', space=smem, size = 0x4, offset = 0x4, fixed_abs, tag = 'smem constant byte address 0x4 - core index']
  #allocation1 [shape = 'u32[144,128]{1,0:T(1,128)}', space=vmem, size = 0x12000, scoped, tag = 'internal scratch']
  %s0 = inlined_call_operand.vmem [shape: f32[800,256], index: 0, kind: input, shape index: {}]
  %s1 = inlined_call_operand.vmem [shape: f32[256,32], index: 1, kind: input, shape index: {}]
  %s2 = inlined_call_operand.vmem [shape: f32[1,32], index: 2, kind: input, shape index: {}]
  %s3 = inlined_call_operand.vmem [shape: f32[800,32], index: 3, kind: output, shape index: {}]
  %s4 = sld [smem:[#allocation0]]
  $region45: #{forward.4} parent=0
    _
  %s6 = ssub.s32 1, %s4
  %s7 = scalar_select 0, %s6, %s4
  loop: start=0, step=1, limit=6
  $region2: #{forward.4} parent=0 // loop_pre_header
    _
  $region3: #{forward.4} parent=0 // loop_header
    %s9 = sphi 0, %s13
    %p10 = scmp.ge.s32.totalorder %s9, 6
    %s19 = sphi 0, %s21
    %s22 = sphi 0, %s19
    %s23 = sphi 0, %s22
    %s39 = sphi 0, %s23
    %s43 = sphi 0, %s43
    %s45 = sphi 0, %s43
    %s46 = sphi 0, %s45
    %s60 = sphi 0, %s46
    %s64 = sphi 0, %s64
    %s66 = sphi 0, %s64
    %s67 = sphi 0, %s66
    %s81 = sphi 0, %s67
    %s87 = sphi 0, %s89
    %s90 = sphi 0, %s87
    %s91 = sphi 0, %s90
    %s107 = sphi 0, %s91
  $region4: #{forward.4} parent=0 // loop_header_branch
    %12 = sbr.rel (%p10) target = $region8
  $region5: #{forward.4} parent=0 // loop_body
    %s14 = ssub.s32 %s9, 1
    %s15 = ssub.s32 %s9, 2
    %s16 = sadd.s32 %s9, 1
    %s17 = ssub.s32 %s9, %s16
    %p18 = scmp.eq.s32.totalorder %s17, 0
    %s20 = sadd.s32 %s19, 1
    %s21 = scalar_select %p18, %s19, %s20
    %p24 = pneg %p18
    %p25 = scmp.eq.s32.totalorder %s9, 3
    %p26 = por %p24, %p25
    %p27 = scmp.ne.s32.totalorder %s19, %s22
    %p28 = scmp.eq.s32.totalorder %s9, 0
    %p29 = por %p27, %p28
    %p30 = scmp.ne.s32.totalorder %s19, %s22
    %p31 = scmp.eq.s32.totalorder %s14, 3
    %p32 = por %p30, %p31
    %p33 = scmp.ne.s32.totalorder %s22, %s23
    %p34 = scmp.eq.s32.totalorder %s14, 0
    %p35 = por %p33, %p34
    %p36 = scmp.ne.s32.totalorder %s22, %s23
    %p37 = scmp.eq.s32.totalorder %s15, 3
    %p38 = por %p36, %p37
    %p40 = scmp.ne.s32.totalorder %s23, %s39
    %p41 = scmp.eq.s32.totalorder %s15, 0
    %p42 = por %p40, %p41
    %s44 = sadd.s32 %s43, 1
    %p47 = scmp.eq.s32.totalorder %s9, 3
    %p48 = scmp.ne.s32.totalorder %s43, %s45
    %p49 = scmp.eq.s32.totalorder %s9, 0
    %p50 = por %p48, %p49
    %p51 = scmp.ne.s32.totalorder %s43, %s45
    %p52 = scmp.eq.s32.totalorder %s14, 3
    %p53 = por %p51, %p52
    %p54 = scmp.ne.s32.totalorder %s45, %s46
    %p55 = scmp.eq.s32.totalorder %s14, 0
    %p56 = por %p54, %p55
    %p57 = scmp.ne.s32.totalorder %s45, %s46
    %p58 = scmp.eq.s32.totalorder %s15, 3
    %p59 = por %p57, %p58
    %p61 = scmp.ne.s32.totalorder %s46, %s60
    %p62 = scmp.eq.s32.totalorder %s15, 0
    %p63 = por %p61, %p62
    %s65 = sadd.s32 %s64, 1
    %p68 = scmp.eq.s32.totalorder %s9, 3
    %p69 = scmp.ne.s32.totalorder %s64, %s66
    %p70 = scmp.eq.s32.totalorder %s9, 0
    %p71 = por %p69, %p70
    %p72 = scmp.ne.s32.totalorder %s64, %s66
    %p73 = scmp.eq.s32.totalorder %s14, 3
    %p74 = por %p72, %p73
    %p75 = scmp.ne.s32.totalorder %s66, %s67
    %p76 = scmp.eq.s32.totalorder %s14, 0
    %p77 = por %p75, %p76
    %p78 = scmp.ne.s32.totalorder %s66, %s67
    %p79 = scmp.eq.s32.totalorder %s15, 3
    %p80 = por %p78, %p79
    %p82 = scmp.ne.s32.totalorder %s67, %s81
    %p83 = scmp.eq.s32.totalorder %s15, 0
    %p84 = por %p82, %p83
    %s85 = ssub.s32 %s9, %s16
    %p86 = scmp.eq.s32.totalorder %s85, 0
    %s88 = sadd.s32 %s87, 1
    %s89 = scalar_select %p86, %s87, %s88
    %p92 = pneg %p86
    %p93 = scmp.eq.s32.totalorder %s9, 3
    %p94 = por %p92, %p93
    %p95 = scmp.ne.s32.totalorder %s87, %s90
    %p96 = scmp.eq.s32.totalorder %s9, 0
    %p97 = por %p95, %p96
    %p98 = scmp.ne.s32.totalorder %s87, %s90
    %p99 = scmp.eq.s32.totalorder %s14, 3
    %p100 = por %p98, %p99
    %p101 = scmp.ne.s32.totalorder %s90, %s91
    %p102 = scmp.eq.s32.totalorder %s14, 0
    %p103 = por %p101, %p102
    %p104 = scmp.ne.s32.totalorder %s90, %s91
    %p105 = scmp.eq.s32.totalorder %s15, 3
    %p106 = por %p104, %p105
    %p108 = scmp.ne.s32.totalorder %s91, %s107
    %p109 = scmp.eq.s32.totalorder %s15, 0
    %p110 = por %p108, %p109
    %p111 = scmp.le.s32.totalorder 1, %s9
    %p112 = scmp.lt.s32.totalorder %s9, 5
    %p113 = pnand %p111, %p112
    %p114 = pneg %p113
    // Predicated region
    $region9: #{forward.4} parent=5 // pred_check
      _
    $region10: #{forward.4} parent=5 // pred_check_branch
      %116 = sbr.rel (%p113) target = $region12
    $region11: #{forward.4} parent=5 // pred_region
      %s117 = ssub.s32 %s9, 1
      // Predicated region
      $region13: #{forward.4} parent=11 // pred_check
        %p118 = pneg %p56
      $region14: #{forward.4} parent=11 // pred_check_branch
        %120 = sbr.rel (%p118) target = $region16
      $region15: #{forward.4} parent=11 // pred_region
        _
      $region16: #{forward.4} parent=11 // pred_fallthru
        _
      // Predicated region
      $region17: #{forward.4} parent=11 // pred_check
        %p121 = pneg %p77
      $region18: #{forward.4} parent=11 // pred_check_branch
        %123 = sbr.rel (%p121) target = $region20
      $region19: #{forward.4} parent=11 // pred_region
        _
      $region20: #{forward.4} parent=11 // pred_fallthru
        _
    $region12: #{forward.4} parent=5 // pred_fallthru
      _
    %p124 = scmp.lt.s32.totalorder %s9, 4
    // Predicated region
    $region21: #{forward.4} parent=5 // pred_check
      %p125 = pneg %p124
    $region22: #{forward.4} parent=5 // pred_check_branch
      %127 = sbr.rel (%p125) target = $region24
    $region23: #{forward.4} parent=5 // pred_region
      // Predicated region
      $region25: #{forward.4} parent=23 // pred_check
        %p128 = pneg %p29
      $region26: #{forward.4} parent=23 // pred_check_branch
        %130 = sbr.rel (%p128) target = $region28
      $region27: #{forward.4} parent=23 // pred_region
        %s131 = smul.u32 25, %s9
        %p132 = scmp.lt.s32.totalorder %s131, 99
        %s133 = scalar_select %p132, %s131, 99
        %s134 = smul.addr %s133, 2
        %s135 = smul.addr %s134, 8
        %s136 = scalar_lea.vmem %s0, %s135
        %s137 = smul.u32 25, %s9
      $region28: #{forward.4} parent=23 // pred_fallthru
        _
    $region24: #{forward.4} parent=5 // pred_fallthru
      _
    %p138 = scmp.le.s32.totalorder 1, %s9
    %p139 = scmp.lt.s32.totalorder %s9, 5
    %p140 = pnand %p138, %p139
    %p141 = pneg %p140
    // Predicated region
    $region29: #{forward.4} parent=5 // pred_check
      _
    $region30: #{forward.4} parent=5 // pred_check_branch
      %143 = sbr.rel (%p140) target = $region32
    $region31: #{forward.4} parent=5 // pred_region
      %s144 = ssub.s32 %s9, 1
      %s145 = smul.u32 25, %s14
      %p146 = scmp.lt.s32.totalorder %s145, 99
      %s147 = scalar_select %p146, %s145, 99
      %s148 = smul.addr %s147, 2
      %s149 = smul.addr %s148, 8
      %s150 = scalar_lea.vmem %s0, %s149
      %p151 = pneg %p35
      %p152 = pneg %p32
      %p153 = pneg %p56
      %p154 = pneg %p53
      %p155 = pneg %p77
      %p156 = pneg %p74
      %p157 = pneg %p103
      %p158 = pneg %p100
      %s159 = smul.u32 25, %s14
      %p160 = scmp.lt.s32.totalorder %s159, 99
      %s161 = scalar_select %p160, %s159, 99
      %s162 = smul.addr %s161, 8
      %s163 = scalar_lea.vmem %s3, %s162
      %s164 = smul.u32 25, %s14
      %p165 = scmp.lt.s32.totalorder %s164, 99
      %s166 = scalar_select %p165, %s164, 99
      %s167 = smul.addr %s166, 2
      %s168 = smul.addr %s167, 8
      %s169 = scalar_lea.vmem %s0, %s168
      %s170 = smul.u32 25, %s14
      %s171 = smul.u32 25, %s14
      %p172 = scmp.lt.s32.totalorder %s171, 99
      %s173 = scalar_select %p172, %s171, 99
      %s174 = smul.addr %s173, 8
      %s175 = scalar_lea.vmem %s3, %s174
      %s176 = smul.u32 25, %s14
      %v177 = vld [vmem:[%s169] sm:$0xff]
      %v178 = vld [vmem:[%s169 + $0x8] sm:$0xff]
      %v179 = vld [vmem:[%s169 + $0x10] sm:$0xff]
      %v180 = vld [vmem:[%s169 + $0x18] sm:$0xff]
      %v181 = vld [vmem:[%s169 + $0x20] sm:$0xff]
      %v182 = vld [vmem:[%s169 + $0x28] sm:$0xff]
      %v183 = vld [vmem:[%s169 + $0x30] sm:$0xff]
      %v184 = vld [vmem:[%s169 + $0x38] sm:$0xff]
      %v185 = vld [vmem:[%s169 + $0x40] sm:$0xff]
      %v186 = vld [vmem:[%s169 + $0x48] sm:$0xff]
      %v187 = vld [vmem:[%s169 + $0x50] sm:$0xff]
      %v188 = vld [vmem:[%s169 + $0x58] sm:$0xff]
      %v189 = vld [vmem:[%s169 + $0x60] sm:$0xff]
      %v190 = vld [vmem:[%s169 + $0x68] sm:$0xff]
      %v191 = vld [vmem:[%s169 + $0x70] sm:$0xff]
      %v192 = vld [vmem:[%s169 + $0x78] sm:$0xff]
      %v193 = vld [vmem:[%s169 + $0x80] sm:$0xff]
      %v194 = vld [vmem:[%s169 + $0x88] sm:$0xff]
      %v195 = vld [vmem:[%s169 + $0x90] sm:$0xff]
      %v196 = vld [vmem:[%s169 + $0x98] sm:$0xff]
      %v197 = vld [vmem:[%s169 + $0xa0] sm:$0xff]
      %v198 = vld [vmem:[%s169 + $0xa8] sm:$0xff]
      %v199 = vld [vmem:[%s169 + $0xb0] sm:$0xff]
      %v200 = vld [vmem:[%s169 + $0xb8] sm:$0xff]
      %v201 = vld [vmem:[%s169 + $0xc0] sm:$0xff]
      %v202 = vld [vmem:[%s169 + $0xc8] sm:$0xff]
      %v203 = vld [vmem:[%s169 + $0xd0] sm:$0xff]
      %v204 = vld [vmem:[%s169 + $0xd8] sm:$0xff]
      %v205 = vld [vmem:[%s169 + $0xe0] sm:$0xff]
      %v206 = vld [vmem:[%s169 + $0xe8] sm:$0xff]
      %v207 = vld [vmem:[%s169 + $0xf0] sm:$0xff]
      %v208 = vld [vmem:[%s169 + $0xf8] sm:$0xff]
      %v209 = vld [vmem:[%s169 + $0x100] sm:$0xff]
      %v210 = vld [vmem:[%s169 + $0x108] sm:$0xff]
      %v211 = vld [vmem:[%s169 + $0x110] sm:$0xff]
      %v212 = vld [vmem:[%s169 + $0x118] sm:$0xff]
      %v213 = vld [vmem:[%s169 + $0x120] sm:$0xff]
      %v214 = vld [vmem:[%s169 + $0x128] sm:$0xff]
      %v215 = vld [vmem:[%s169 + $0x130] sm:$0xff]
      %v216 = vld [vmem:[%s169 + $0x138] sm:$0xff]
      %v217 = vld [vmem:[%s169 + $0x140] sm:$0xff]
      %v218 = vld [vmem:[%s169 + $0x148] sm:$0xff]
      %v219 = vld [vmem:[%s169 + $0x150] sm:$0xff]
      %v220 = vld [vmem:[%s169 + $0x158] sm:$0xff]
      %v221 = vld [vmem:[%s169 + $0x160] sm:$0xff]
      %v222 = vld [vmem:[%s169 + $0x168] sm:$0xff]
      %v223 = vld [vmem:[%s169 + $0x170] sm:$0xff]
      %v224 = vld [vmem:[%s169 + $0x178] sm:$0xff]
      %v225 = vld [vmem:[%s169 + $0x180] sm:$0xff]
      %v226 = vld [vmem:[%s169 + $0x188] sm:$0xff]
      %v227 = vld [vmem:[%s1] sm:$0xff]
      %v228 = vld [vmem:[%s1 + $0x8] sm:$0xff]
      %v229 = vld [vmem:[%s1 + $0x10] sm:$0xff]
      %v230 = vld [vmem:[%s1 + $0x18] sm:$0xff]
      %v231 = vld [vmem:[%s1 + $0x20] sm:$0xff]
      %v232 = vld [vmem:[%s1 + $0x28] sm:$0xff]
      %v233 = vld [vmem:[%s1 + $0x30] sm:$0xff]
      %v234 = vld [vmem:[%s1 + $0x38] sm:$0xff]
      %v235 = vld [vmem:[%s1 + $0x40] sm:$0xff]
      %v236 = vld [vmem:[%s1 + $0x48] sm:$0xff]
      %v237 = vld [vmem:[%s1 + $0x50] sm:$0xff]
      %v238 = vld [vmem:[%s1 + $0x58] sm:$0xff]
      %v239 = vld [vmem:[%s1 + $0x60] sm:$0xff]
      %v240 = vld [vmem:[%s1 + $0x68] sm:$0xff]
      %v241 = vld [vmem:[%s1 + $0x70] sm:$0xff]
      %v242 = vld [vmem:[%s1 + $0x78] sm:$0xff]
      %v243 = vld [vmem:[%s1 + $0x80] sm:$0xff]
      %v244 = vld [vmem:[%s1 + $0x88] sm:$0xff]
      %v245 = vld [vmem:[%s1 + $0x90] sm:$0xff]
      %v246 = vld [vmem:[%s1 + $0x98] sm:$0xff]
      %v247 = vld [vmem:[%s1 + $0xa0] sm:$0xff]
      %v248 = vld [vmem:[%s1 + $0xa8] sm:$0xff]
      %v249 = vld [vmem:[%s1 + $0xb0] sm:$0xff]
      %v250 = vld [vmem:[%s1 + $0xb8] sm:$0xff]
      %v251 = vld [vmem:[%s1 + $0xc0] sm:$0xff]
      %v252 = vld [vmem:[%s1 + $0xc8] sm:$0xff]
      %v253 = vld [vmem:[%s1 + $0xd0] sm:$0xff]
      %v254 = vld [vmem:[%s1 + $0xd8] sm:$0xff]
      %v255 = vld [vmem:[%s1 + $0xe0] sm:$0xff]
      %v256 = vld [vmem:[%s1 + $0xe8] sm:$0xff]
      %v257 = vld [vmem:[%s1 + $0xf0] sm:$0xff]
      %v258 = vld [vmem:[%s1 + $0xf8] sm:$0xff]
      %v259 = vld [vmem:[%s2] sm:$0x1]
      %v261 = vlaneseq
      %v262 = vshrl.u32 %v261, 7
      %v263 = vsub.s32 0, %v262
      %v264 = vrot.slane %v259, %v263
      %266 = vmatprep.subr.mxu0 0.0
      %267 = vmatpush1.msra.mxu0 %v242
      %268 = vmatprep.subr.mxu0 0.0
      %269 = vmatpush1.msra.mxu0 %v241
      %270 = vmatprep.subr.mxu0 0.0
      %271 = vmatpush1.msra.mxu0 %v240
      %272 = vmatprep.subr.mxu0 0.0
      %273 = vmatpush1.msra.mxu0 %v239
      %274 = vmatprep.subr.mxu0 0.0
      %275 = vmatpush1.msra.mxu0 %v238
      %276 = vmatprep.subr.mxu0 0.0
      %277 = vmatpush1.msra.mxu0 %v237
      %278 = vmatprep.subr.mxu0 0.0
      %279 = vmatpush1.msra.mxu0 %v236
      %280 = vmatprep.subr.mxu0 0.0
      %281 = vmatpush1.msra.mxu0 %v235
      %282 = vmatprep.subr.mxu0 0.0
      %283 = vmatpush1.msra.mxu0 %v234
      %284 = vmatprep.subr.mxu0 0.0
      %285 = vmatpush1.msra.mxu0 %v233
      %286 = vmatprep.subr.mxu0 0.0
      %287 = vmatpush1.msra.mxu0 %v232
      %288 = vmatprep.subr.mxu0 0.0
      %289 = vmatpush1.msra.mxu0 %v231
      %290 = vmatprep.subr.mxu0 0.0
      %291 = vmatpush1.msra.mxu0 %v230
      %292 = vmatprep.subr.mxu0 0.0
      %293 = vmatpush1.msra.mxu0 %v229
      %294 = vmatprep.subr.mxu0 0.0
      %295 = vmatpush1.msra.mxu0 %v228
      %296 = vmatprep.subr.mxu0 0.0
      %297 = vmatpush1.msra.mxu0 %v227
      %298 = vmatprep.subr.mxu0 0.0
      %299 = vmatpush2.msra.mxu0 %v258
      %300 = vmatprep.subr.mxu0 0.0
      %301 = vmatpush2.msra.mxu0 %v257
      %302 = vmatprep.subr.mxu0 0.0
      %303 = vmatpush2.msra.mxu0 %v256
      %304 = vmatprep.subr.mxu0 0.0
      %305 = vmatpush2.msra.mxu0 %v255
      %306 = vmatprep.subr.mxu0 0.0
      %307 = vmatpush2.msra.mxu0 %v254
      %308 = vmatprep.subr.mxu0 0.0
      %309 = vmatpush2.msra.mxu0 %v253
      %310 = vmatprep.subr.mxu0 0.0
      %311 = vmatpush2.msra.mxu0 %v252
      %312 = vmatprep.subr.mxu0 0.0
      %313 = vmatpush2.msra.mxu0 %v251
      %314 = vmatprep.subr.mxu0 0.0
      %315 = vmatpush2.msra.mxu0 %v250
      %316 = vmatprep.subr.mxu0 0.0
      %317 = vmatpush2.msra.mxu0 %v249
      %318 = vmatprep.subr.mxu0 0.0
      %319 = vmatpush2.msra.mxu0 %v248
      %320 = vmatprep.subr.mxu0 0.0
      %321 = vmatpush2.msra.mxu0 %v247
      %322 = vmatprep.subr.mxu0 0.0
      %323 = vmatpush2.msra.mxu0 %v246
      %324 = vmatprep.subr.mxu0 0.0
      %325 = vmatpush2.msra.mxu0 %v245
      %326 = vmatprep.subr.mxu0 0.0
      %327 = vmatpush2.msra.mxu0 %v244
      %328 = vmatprep.subr.mxu0 0.0
      %329 = vmatpush2.msra.mxu0 %v243
      %330 = vmatprep.mubr.f32.mxu0 %v178
      %331 = vmatmul.mubr.f32.gmra.mxu0 %v177
      %v332 = vpop.f32.mrf.mxu0
      %v333 = vadd.f32 %v264, %v332
      %v334 = vpop.f32.mrf.mxu0
      %335 = vmatprep.mubr.f32.mxu0 %v180
      %336 = vmatmul.mubr.f32.gmra.mxu0 %v179
      %v337 = vpop.f32.mrf.mxu0
      %v338 = vadd.f32 %v264, %v337
      %v339 = vpop.f32.mrf.mxu0
      %340 = vmatprep.mubr.f32.mxu0 %v182
      %341 = vmatmul.mubr.f32.gmra.mxu0 %v181
      %v342 = vpop.f32.mrf.mxu0
      %v343 = vadd.f32 %v264, %v342
      %v344 = vpop.f32.mrf.mxu0
      %345 = vmatprep.mubr.f32.mxu0 %v184
      %346 = vmatmul.mubr.f32.gmra.mxu0 %v183
      %v347 = vpop.f32.mrf.mxu0
      %v348 = vadd.f32 %v264, %v347
      %v349 = vpop.f32.mrf.mxu0
      %350 = vmatprep.mubr.f32.mxu0 %v186
      %351 = vmatmul.mubr.f32.gmra.mxu0 %v185
      %v352 = vpop.f32.mrf.mxu0
      %v353 = vadd.f32 %v264, %v352
      %v354 = vpop.f32.mrf.mxu0
      %355 = vmatprep.mubr.f32.mxu0 %v188
      %356 = vmatmul.mubr.f32.gmra.mxu0 %v187
      %v357 = vpop.f32.mrf.mxu0
      %v358 = vadd.f32 %v264, %v357
      %v359 = vpop.f32.mrf.mxu0
      %360 = vmatprep.mubr.f32.mxu0 %v190
      %361 = vmatmul.mubr.f32.gmra.mxu0 %v189
      %v362 = vpop.f32.mrf.mxu0
      %v363 = vadd.f32 %v264, %v362
      %v364 = vpop.f32.mrf.mxu0
      %365 = vmatprep.mubr.f32.mxu0 %v192
      %366 = vmatmul.mubr.f32.gmra.mxu0 %v191
      %v367 = vpop.f32.mrf.mxu0
      %v368 = vadd.f32 %v264, %v367
      %v369 = vpop.f32.mrf.mxu0
      %370 = vmatprep.mubr.f32.mxu0 %v194
      %371 = vmatmul.mubr.f32.gmra.mxu0 %v193
      %v372 = vpop.f32.mrf.mxu0
      %v373 = vadd.f32 %v264, %v372
      %v374 = vpop.f32.mrf.mxu0
      %375 = vmatprep.mubr.f32.mxu0 %v196
      %376 = vmatmul.mubr.f32.gmra.mxu0 %v195
      %v377 = vpop.f32.mrf.mxu0
      %v378 = vadd.f32 %v264, %v377
      %v379 = vpop.f32.mrf.mxu0
      %380 = vmatprep.mubr.f32.mxu0 %v198
      %381 = vmatmul.mubr.f32.gmra.mxu0 %v197
      %v382 = vpop.f32.mrf.mxu0
      %v383 = vadd.f32 %v264, %v382
      %v384 = vpop.f32.mrf.mxu0
      %385 = vmatprep.mubr.f32.mxu0 %v200
      %386 = vmatmul.mubr.f32.gmra.mxu0 %v199
      %v387 = vpop.f32.mrf.mxu0
      %v388 = vadd.f32 %v264, %v387
      %v389 = vpop.f32.mrf.mxu0
      %390 = vmatprep.mubr.f32.mxu0 %v202
      %391 = vmatmul.mubr.f32.gmra.mxu0 %v201
      %v392 = vpop.f32.mrf.mxu0
      %v393 = vadd.f32 %v264, %v392
      %v394 = vpop.f32.mrf.mxu0
      %395 = vmatprep.mubr.f32.mxu0 %v204
      %396 = vmatmul.mubr.f32.gmra.mxu0 %v203
      %v397 = vpop.f32.mrf.mxu0
      %v398 = vadd.f32 %v264, %v397
      %v399 = vpop.f32.mrf.mxu0
      %400 = vmatprep.mubr.f32.mxu0 %v206
      %401 = vmatmul.mubr.f32.gmra.mxu0 %v205
      %v402 = vpop.f32.mrf.mxu0
      %v403 = vadd.f32 %v264, %v402
      %v404 = vpop.f32.mrf.mxu0
      %405 = vmatprep.mubr.f32.mxu0 %v208
      %406 = vmatmul.mubr.f32.gmra.mxu0 %v207
      %v407 = vpop.f32.mrf.mxu0
      %v408 = vadd.f32 %v264, %v407
      %v409 = vpop.f32.mrf.mxu0
      %410 = vmatprep.mubr.f32.mxu0 %v210
      %411 = vmatmul.mubr.f32.gmra.mxu0 %v209
      %v412 = vpop.f32.mrf.mxu0
      %v413 = vadd.f32 %v264, %v412
      %v414 = vpop.f32.mrf.mxu0
      %415 = vmatprep.mubr.f32.mxu0 %v212
      %416 = vmatmul.mubr.f32.gmra.mxu0 %v211
      %v417 = vpop.f32.mrf.mxu0
      %v418 = vadd.f32 %v264, %v417
      %v419 = vpop.f32.mrf.mxu0
      %420 = vmatprep.mubr.f32.mxu0 %v214
      %421 = vmatmul.mubr.f32.gmra.mxu0 %v213
      %v422 = vpop.f32.mrf.mxu0
      %v423 = vadd.f32 %v264, %v422
      %v424 = vpop.f32.mrf.mxu0
      %425 = vmatprep.mubr.f32.mxu0 %v216
      %426 = vmatmul.mubr.f32.gmra.mxu0 %v215
      %v427 = vpop.f32.mrf.mxu0
      %v428 = vadd.f32 %v264, %v427
      %v429 = vpop.f32.mrf.mxu0
      %430 = vmatprep.mubr.f32.mxu0 %v218
      %431 = vmatmul.mubr.f32.gmra.mxu0 %v217
      %v432 = vpop.f32.mrf.mxu0
      %v433 = vadd.f32 %v264, %v432
      %v434 = vpop.f32.mrf.mxu0
      %435 = vmatprep.mubr.f32.mxu0 %v220
      %436 = vmatmul.mubr.f32.gmra.mxu0 %v219
      %v437 = vpop.f32.mrf.mxu0
      %v438 = vadd.f32 %v264, %v437
      %v439 = vpop.f32.mrf.mxu0
      %440 = vmatprep.mubr.f32.mxu0 %v222
      %441 = vmatmul.mubr.f32.gmra.mxu0 %v221
      %v442 = vpop.f32.mrf.mxu0
      %v443 = vadd.f32 %v264, %v442
      %v444 = vpop.f32.mrf.mxu0
      %445 = vmatprep.mubr.f32.mxu0 %v224
      %446 = vmatmul.mubr.f32.gmra.mxu0 %v223
      %v447 = vpop.f32.mrf.mxu0
      %v448 = vadd.f32 %v264, %v447
      %v449 = vpop.f32.mrf.mxu0
      %450 = vmatprep.mubr.f32.mxu0 %v226
      %451 = vmatmul.mubr.f32.gmra.mxu0 %v225
      %v452 = vpop.f32.mrf.mxu0
      %v453 = vadd.f32 %v264, %v452
      %v454 = vpop.f32.mrf.mxu0
      %455 = vdwg.mxu0
      %v456 = vmax.f32 %v333, 0.0
      %v457 = vmax.f32 %v338, 0.0
      %v458 = vmax.f32 %v343, 0.0
      %v459 = vmax.f32 %v348, 0.0
      %v460 = vmax.f32 %v353, 0.0
      %v461 = vmax.f32 %v358, 0.0
      %v462 = vmax.f32 %v363, 0.0
      %v463 = vmax.f32 %v368, 0.0
      %v464 = vmax.f32 %v373, 0.0
      %v465 = vmax.f32 %v378, 0.0
      %v466 = vmax.f32 %v383, 0.0
      %v467 = vmax.f32 %v388, 0.0
      %v468 = vmax.f32 %v393, 0.0
      %v469 = vmax.f32 %v398, 0.0
      %v470 = vmax.f32 %v403, 0.0
      %v471 = vmax.f32 %v408, 0.0
      %v472 = vmax.f32 %v413, 0.0
      %v473 = vmax.f32 %v418, 0.0
      %v474 = vmax.f32 %v423, 0.0
      %v475 = vmax.f32 %v428, 0.0
      %v476 = vmax.f32 %v433, 0.0
      %v477 = vmax.f32 %v438, 0.0
      %v478 = vmax.f32 %v443, 0.0
      %v479 = vmax.f32 %v448, 0.0
      %v480 = vmax.f32 %v453, 0.0
      %vm481 = vcmask 261120
      %482 = vst.msk [vmem:[%s175] sm:$0xff] %vm481, %v456
      %483 = vst.msk [vmem:[%s175 + $0x8] sm:$0xff] %vm481, %v457
      %484 = vst.msk [vmem:[%s175 + $0x10] sm:$0xff] %vm481, %v458
      %485 = vst.msk [vmem:[%s175 + $0x18] sm:$0xff] %vm481, %v459
      %486 = vst.msk [vmem:[%s175 + $0x20] sm:$0xff] %vm481, %v460
      %487 = vst.msk [vmem:[%s175 + $0x28] sm:$0xff] %vm481, %v461
      %488 = vst.msk [vmem:[%s175 + $0x30] sm:$0xff] %vm481, %v462
      %489 = vst.msk [vmem:[%s175 + $0x38] sm:$0xff] %vm481, %v463
      %490 = vst.msk [vmem:[%s175 + $0x40] sm:$0xff] %vm481, %v464
      %491 = vst.msk [vmem:[%s175 + $0x48] sm:$0xff] %vm481, %v465
      %492 = vst.msk [vmem:[%s175 + $0x50] sm:$0xff] %vm481, %v466
      %493 = vst.msk [vmem:[%s175 + $0x58] sm:$0xff] %vm481, %v467
      %494 = vst.msk [vmem:[%s175 + $0x60] sm:$0xff] %vm481, %v468
      %495 = vst.msk [vmem:[%s175 + $0x68] sm:$0xff] %vm481, %v469
      %496 = vst.msk [vmem:[%s175 + $0x70] sm:$0xff] %vm481, %v470
      %497 = vst.msk [vmem:[%s175 + $0x78] sm:$0xff] %vm481, %v471
      %498 = vst.msk [vmem:[%s175 + $0x80] sm:$0xff] %vm481, %v472
      %499 = vst.msk [vmem:[%s175 + $0x88] sm:$0xff] %vm481, %v473
      %500 = vst.msk [vmem:[%s175 + $0x90] sm:$0xff] %vm481, %v474
      %501 = vst.msk [vmem:[%s175 + $0x98] sm:$0xff] %vm481, %v475
      %502 = vst.msk [vmem:[%s175 + $0xa0] sm:$0xff] %vm481, %v476
      %503 = vst.msk [vmem:[%s175 + $0xa8] sm:$0xff] %vm481, %v477
      %504 = vst.msk [vmem:[%s175 + $0xb0] sm:$0xff] %vm481, %v478
      %505 = vst.msk [vmem:[%s175 + $0xb8] sm:$0xff] %vm481, %v479
      %506 = vst.msk [vmem:[%s175 + $0xc0] sm:$0xff] %vm481, %v480
      %s507 = smul.u32 25, %s14
      %p508 = scmp.lt.s32.totalorder %s507, 99
      %s509 = scalar_select %p508, %s507, 99
      %s510 = smul.addr %s509, 8
      %s511 = scalar_lea.vmem %s3, %s510
      // Predicated region
      $region33: #{forward.4} parent=31 // pred_check
        %p512 = pneg %p100
      $region34: #{forward.4} parent=31 // pred_check_branch
        %514 = sbr.rel (%p512) target = $region36
      $region35: #{forward.4} parent=31 // pred_region
        %s515 = smul.u32 25, %s14
      $region36: #{forward.4} parent=31 // pred_fallthru
        _
    $region32: #{forward.4} parent=5 // pred_fallthru
      _
    %p516 = scmp.le.s32.totalorder 2, %s9
    // Predicated region
    $region37: #{forward.4} parent=5 // pred_check
      %p517 = pneg %p516
    $region38: #{forward.4} parent=5 // pred_check_branch
      %519 = sbr.rel (%p517) target = $region40
    $region39: #{forward.4} parent=5 // pred_region
      %s520 = ssub.s32 %s9, 2
      // Predicated region
      $region41: #{forward.4} parent=39 // pred_check
        %p521 = pneg %p106
      $region42: #{forward.4} parent=39 // pred_check_branch
        %523 = sbr.rel (%p521) target = $region44
      $region43: #{forward.4} parent=39 // pred_region
        %s524 = smul.u32 25, %s15
        %p525 = scmp.lt.s32.totalorder %s524, 99
        %s526 = scalar_select %p525, %s524, 99
        %s527 = smul.addr %s526, 8
        %s528 = scalar_lea.vmem %s3, %s527
      $region44: #{forward.4} parent=39 // pred_fallthru
        _
    $region40: #{forward.4} parent=5 // pred_fallthru
      _
  $region6: #{forward.4} parent=0 // loop_footer
    %s13 = sadd.s32 1, %s9
  $region7: #{forward.4} parent=0 // loop_footer_branch
    %8 = sbr.rel target = $region3
  $region8: #{forward.4} parent=0 // loop_exit
    _

// kernel: forward.5
$region0: #{forward.5}
  #allocation0 [shape = 'u32[]', space=smem, size = 0x4, offset = 0x4, fixed_abs, tag = 'smem constant byte address 0x4 - core index']
  #allocation1 [shape = 'u32[144,128]{1,0:T(1,128)}', space=vmem, size = 0x12000, scoped, tag = 'internal scratch']
  %s0 = inlined_call_operand.vmem [shape: f32[162,512], index: 0, kind: input, shape index: {}]
  %s1 = inlined_call_operand.vmem [shape: f32[512,64], index: 1, kind: input, shape index: {}]
  %s2 = inlined_call_operand.vmem [shape: f32[1,64], index: 2, kind: input, shape index: {}]
  %s3 = inlined_call_operand.vmem [shape: f32[162,64], index: 3, kind: output, shape index: {}]
  %s4 = sld [smem:[#allocation0]]
  $region22: #{forward.5} parent=0
    _
  %s6 = ssub.s32 1, %s4
  %s7 = scalar_select 0, %s6, %s4
  // Predicated region
  $region2: #{forward.5} parent=0 // pred_check
    _
  $region3: #{forward.5} parent=0 // pred_check_branch
    %9 = sbr.rel (0) target = $region5
  $region4: #{forward.5} parent=0 // pred_region
    _
  $region5: #{forward.5} parent=0 // pred_fallthru
    _
  // Predicated region
  $region6: #{forward.5} parent=0 // pred_check
    _
  $region7: #{forward.5} parent=0 // pred_check_branch
    %11 = sbr.rel (0) target = $region9
  $region8: #{forward.5} parent=0 // pred_region
    _
  $region9: #{forward.5} parent=0 // pred_fallthru
    _
  // Predicated region
  $region10: #{forward.5} parent=0 // pred_check
    _
  $region11: #{forward.5} parent=0 // pred_check_branch
    %13 = sbr.rel (0) target = $region13
  $region12: #{forward.5} parent=0 // pred_region
    _
  $region13: #{forward.5} parent=0 // pred_fallthru
    _
  %v14 = vld [vmem:[%s0] sm:$0xff]
  %v15 = vld [vmem:[%s0 + $0x8] sm:$0xff]
  %v16 = vld [vmem:[%s0 + $0x10] sm:$0xff]
  %v17 = vld [vmem:[%s0 + $0x18] sm:$0xff]
  %v18 = vld [vmem:[%s0 + $0x20] sm:$0xff]
  %v19 = vld [vmem:[%s0 + $0x28] sm:$0xff]
  %v20 = vld [vmem:[%s0 + $0x30] sm:$0xff]
  %v21 = vld [vmem:[%s0 + $0x38] sm:$0xff]
  %v22 = vld [vmem:[%s0 + $0x40] sm:$0xff]
  %v23 = vld [vmem:[%s0 + $0x48] sm:$0xff]
  %v24 = vld [vmem:[%s0 + $0x50] sm:$0xff]
  %v25 = vld [vmem:[%s0 + $0x58] sm:$0xff]
  %v26 = vld [vmem:[%s0 + $0x60] sm:$0xff]
  %v27 = vld [vmem:[%s0 + $0x68] sm:$0xff]
  %v28 = vld [vmem:[%s0 + $0x70] sm:$0xff]
  %v29 = vld [vmem:[%s0 + $0x78] sm:$0xff]
  %v30 = vld [vmem:[%s0 + $0x80] sm:$0xff]
  %v31 = vld [vmem:[%s0 + $0x88] sm:$0xff]
  %v32 = vld [vmem:[%s0 + $0x90] sm:$0xff]
  %v33 = vld [vmem:[%s0 + $0x98] sm:$0xff]
  %v34 = vld [vmem:[%s0 + $0xa0] sm:$0xff]
  %v35 = vld [vmem:[%s0 + $0xa8] sm:$0xff]
  %v36 = vld [vmem:[%s0 + $0xb0] sm:$0xff]
  %v37 = vld [vmem:[%s0 + $0xb8] sm:$0xff]
  %v38 = vld [vmem:[%s0 + $0xc0] sm:$0xff]
  %v39 = vld [vmem:[%s0 + $0xc8] sm:$0xff]
  %v40 = vld [vmem:[%s0 + $0xd0] sm:$0xff]
  %v41 = vld [vmem:[%s0 + $0xd8] sm:$0xff]
  %v42 = vld [vmem:[%s0 + $0xe0] sm:$0xff]
  %v43 = vld [vmem:[%s0 + $0xe8] sm:$0xff]
  %v44 = vld [vmem:[%s0 + $0xf0] sm:$0xff]
  %v45 = vld [vmem:[%s0 + $0xf8] sm:$0xff]
  %v46 = vld [vmem:[%s0 + $0x100] sm:$0xff]
  %v47 = vld [vmem:[%s0 + $0x108] sm:$0xff]
  %v48 = vld [vmem:[%s0 + $0x110] sm:$0xff]
  %v49 = vld [vmem:[%s0 + $0x118] sm:$0xff]
  %v50 = vld [vmem:[%s0 + $0x120] sm:$0xff]
  %v51 = vld [vmem:[%s0 + $0x128] sm:$0xff]
  %v52 = vld [vmem:[%s0 + $0x130] sm:$0xff]
  %v53 = vld [vmem:[%s0 + $0x138] sm:$0xff]
  %v54 = vld [vmem:[%s0 + $0x140] sm:$0xff]
  %v55 = vld [vmem:[%s0 + $0x148] sm:$0xff]
  %v56 = vld [vmem:[%s0 + $0x150] sm:$0xff]
  %v57 = vld [vmem:[%s0 + $0x158] sm:$0xff]
  %v58 = vld [vmem:[%s0 + $0x160] sm:$0xff]
  %v59 = vld [vmem:[%s0 + $0x168] sm:$0xff]
  %v60 = vld [vmem:[%s0 + $0x170] sm:$0xff]
  %v61 = vld [vmem:[%s0 + $0x178] sm:$0xff]
  %v62 = vld [vmem:[%s0 + $0x180] sm:$0xff]
  %v63 = vld [vmem:[%s0 + $0x188] sm:$0xff]
  %v64 = vld [vmem:[%s0 + $0x190] sm:$0xff]
  %v65 = vld [vmem:[%s0 + $0x198] sm:$0xff]
  %v66 = vld [vmem:[%s0 + $0x1a0] sm:$0xff]
  %v67 = vld [vmem:[%s0 + $0x1a8] sm:$0xff]
  %v68 = vld [vmem:[%s0 + $0x1b0] sm:$0xff]
  %v69 = vld [vmem:[%s0 + $0x1b8] sm:$0xff]
  %v70 = vld [vmem:[%s0 + $0x1c0] sm:$0xff]
  %v71 = vld [vmem:[%s0 + $0x1c8] sm:$0xff]
  %v72 = vld [vmem:[%s0 + $0x1d0] sm:$0xff]
  %v73 = vld [vmem:[%s0 + $0x1d8] sm:$0xff]
  %v74 = vld [vmem:[%s0 + $0x1e0] sm:$0xff]
  %v75 = vld [vmem:[%s0 + $0x1e8] sm:$0xff]
  %v76 = vld [vmem:[%s0 + $0x1f0] sm:$0xff]
  %v77 = vld [vmem:[%s0 + $0x1f8] sm:$0xff]
  %v78 = vld [vmem:[%s0 + $0x200] sm:$0xff]
  %v79 = vld [vmem:[%s0 + $0x208] sm:$0xff]
  %v80 = vld [vmem:[%s0 + $0x210] sm:$0xff]
  %v81 = vld [vmem:[%s0 + $0x218] sm:$0xff]
  %v82 = vld [vmem:[%s0 + $0x220] sm:$0xff]
  %v83 = vld [vmem:[%s0 + $0x228] sm:$0xff]
  %v84 = vld [vmem:[%s0 + $0x230] sm:$0xff]
  %v85 = vld [vmem:[%s0 + $0x238] sm:$0xff]
  %v86 = vld [vmem:[%s0 + $0x240] sm:$0xff]
  %v87 = vld [vmem:[%s0 + $0x248] sm:$0xff]
  %v88 = vld [vmem:[%s0 + $0x250] sm:$0xff]
  %v89 = vld [vmem:[%s0 + $0x258] sm:$0xff]
  %v90 = vld [vmem:[%s0 + $0x260] sm:$0xff]
  %v91 = vld [vmem:[%s0 + $0x268] sm:$0xff]
  %v92 = vld [vmem:[%s0 + $0x270] sm:$0xff]
  %v93 = vld [vmem:[%s0 + $0x278] sm:$0xff]
  %v94 = vld [vmem:[%s0 + $0x280] sm:$0x3]
  %v95 = vld [vmem:[%s0 + $0x288] sm:$0x3]
  %v96 = vld [vmem:[%s0 + $0x290] sm:$0x3]
  %v97 = vld [vmem:[%s0 + $0x298] sm:$0x3]
  %v98 = vld [vmem:[%s1] sm:$0xff]
  %v99 = vld [vmem:[%s1 + $0x8] sm:$0xff]
  %v100 = vld [vmem:[%s1 + $0x10] sm:$0xff]
  %v101 = vld [vmem:[%s1 + $0x18] sm:$0xff]
  %v102 = vld [vmem:[%s1 + $0x20] sm:$0xff]
  %v103 = vld [vmem:[%s1 + $0x28] sm:$0xff]
  %v104 = vld [vmem:[%s1 + $0x30] sm:$0xff]
  %v105 = vld [vmem:[%s1 + $0x38] sm:$0xff]
  %v106 = vld [vmem:[%s1 + $0x40] sm:$0xff]
  %v107 = vld [vmem:[%s1 + $0x48] sm:$0xff]
  %v108 = vld [vmem:[%s1 + $0x50] sm:$0xff]
  %v109 = vld [vmem:[%s1 + $0x58] sm:$0xff]
  %v110 = vld [vmem:[%s1 + $0x60] sm:$0xff]
  %v111 = vld [vmem:[%s1 + $0x68] sm:$0xff]
  %v112 = vld [vmem:[%s1 + $0x70] sm:$0xff]
  %v113 = vld [vmem:[%s1 + $0x78] sm:$0xff]
  %v114 = vld [vmem:[%s1 + $0x80] sm:$0xff]
  %v115 = vld [vmem:[%s1 + $0x88] sm:$0xff]
  %v116 = vld [vmem:[%s1 + $0x90] sm:$0xff]
  %v117 = vld [vmem:[%s1 + $0x98] sm:$0xff]
  %v118 = vld [vmem:[%s1 + $0xa0] sm:$0xff]
  %v119 = vld [vmem:[%s1 + $0xa8] sm:$0xff]
  %v120 = vld [vmem:[%s1 + $0xb0] sm:$0xff]
  %v121 = vld [vmem:[%s1 + $0xb8] sm:$0xff]
  %v122 = vld [vmem:[%s1 + $0xc0] sm:$0xff]
  %v123 = vld [vmem:[%s1 + $0xc8] sm:$0xff]
  %v124 = vld [vmem:[%s1 + $0xd0] sm:$0xff]
  %v125 = vld [vmem:[%s1 + $0xd8] sm:$0xff]
  %v126 = vld [vmem:[%s1 + $0xe0] sm:$0xff]
  %v127 = vld [vmem:[%s1 + $0xe8] sm:$0xff]
  %v128 = vld [vmem:[%s1 + $0xf0] sm:$0xff]
  %v129 = vld [vmem:[%s1 + $0xf8] sm:$0xff]
  %v130 = vld [vmem:[%s1 + $0x100] sm:$0xff]
  %v131 = vld [vmem:[%s1 + $0x108] sm:$0xff]
  %v132 = vld [vmem:[%s1 + $0x110] sm:$0xff]
  %v133 = vld [vmem:[%s1 + $0x118] sm:$0xff]
  %v134 = vld [vmem:[%s1 + $0x120] sm:$0xff]
  %v135 = vld [vmem:[%s1 + $0x128] sm:$0xff]
  %v136 = vld [vmem:[%s1 + $0x130] sm:$0xff]
  %v137 = vld [vmem:[%s1 + $0x138] sm:$0xff]
  %v138 = vld [vmem:[%s1 + $0x140] sm:$0xff]
  %v139 = vld [vmem:[%s1 + $0x148] sm:$0xff]
  %v140 = vld [vmem:[%s1 + $0x150] sm:$0xff]
  %v141 = vld [vmem:[%s1 + $0x158] sm:$0xff]
  %v142 = vld [vmem:[%s1 + $0x160] sm:$0xff]
  %v143 = vld [vmem:[%s1 + $0x168] sm:$0xff]
  %v144 = vld [vmem:[%s1 + $0x170] sm:$0xff]
  %v145 = vld [vmem:[%s1 + $0x178] sm:$0xff]
  %v146 = vld [vmem:[%s1 + $0x180] sm:$0xff]
  %v147 = vld [vmem:[%s1 + $0x188] sm:$0xff]
  %v148 = vld [vmem:[%s1 + $0x190] sm:$0xff]
  %v149 = vld [vmem:[%s1 + $0x198] sm:$0xff]
  %v150 = vld [vmem:[%s1 + $0x1a0] sm:$0xff]
  %v151 = vld [vmem:[%s1 + $0x1a8] sm:$0xff]
  %v152 = vld [vmem:[%s1 + $0x1b0] sm:$0xff]
  %v153 = vld [vmem:[%s1 + $0x1b8] sm:$0xff]
  %v154 = vld [vmem:[%s1 + $0x1c0] sm:$0xff]
  %v155 = vld [vmem:[%s1 + $0x1c8] sm:$0xff]
  %v156 = vld [vmem:[%s1 + $0x1d0] sm:$0xff]
  %v157 = vld [vmem:[%s1 + $0x1d8] sm:$0xff]
  %v158 = vld [vmem:[%s1 + $0x1e0] sm:$0xff]
  %v159 = vld [vmem:[%s1 + $0x1e8] sm:$0xff]
  %v160 = vld [vmem:[%s1 + $0x1f0] sm:$0xff]
  %v161 = vld [vmem:[%s1 + $0x1f8] sm:$0xff]
  %v162 = vld [vmem:[%s2] sm:$0x1]
  %v164 = vlaneseq
  %v165 = vshrl.u32 %v164, 7
  %v166 = vsub.s32 0, %v165
  %v167 = vrot.slane %v162, %v166
  %169 = vmatprep.subr.mxu0 0.0
  %170 = vmatpush1.msra.mxu0 %v113
  %171 = vmatprep.subr.mxu0 0.0
  %172 = vmatpush1.msra.mxu0 %v112
  %173 = vmatprep.subr.mxu0 0.0
  %174 = vmatpush1.msra.mxu0 %v111
  %175 = vmatprep.subr.mxu0 0.0
  %176 = vmatpush1.msra.mxu0 %v110
  %177 = vmatprep.subr.mxu0 0.0
  %178 = vmatpush1.msra.mxu0 %v109
  %179 = vmatprep.subr.mxu0 0.0
  %180 = vmatpush1.msra.mxu0 %v108
  %181 = vmatprep.subr.mxu0 0.0
  %182 = vmatpush1.msra.mxu0 %v107
  %183 = vmatprep.subr.mxu0 0.0
  %184 = vmatpush1.msra.mxu0 %v106
  %185 = vmatprep.subr.mxu0 0.0
  %186 = vmatpush1.msra.mxu0 %v105
  %187 = vmatprep.subr.mxu0 0.0
  %188 = vmatpush1.msra.mxu0 %v104
  %189 = vmatprep.subr.mxu0 0.0
  %190 = vmatpush1.msra.mxu0 %v103
  %191 = vmatprep.subr.mxu0 0.0
  %192 = vmatpush1.msra.mxu0 %v102
  %193 = vmatprep.subr.mxu0 0.0
  %194 = vmatpush1.msra.mxu0 %v101
  %195 = vmatprep.subr.mxu0 0.0
  %196 = vmatpush1.msra.mxu0 %v100
  %197 = vmatprep.subr.mxu0 0.0
  %198 = vmatpush1.msra.mxu0 %v99
  %199 = vmatprep.subr.mxu0 0.0
  %200 = vmatpush1.msra.mxu0 %v98
  %201 = vmatprep.subr.mxu0 0.0
  %202 = vmatpush2.msra.mxu0 %v129
  %203 = vmatprep.subr.mxu0 0.0
  %204 = vmatpush2.msra.mxu0 %v128
  %205 = vmatprep.subr.mxu0 0.0
  %206 = vmatpush2.msra.mxu0 %v127
  %207 = vmatprep.subr.mxu0 0.0
  %208 = vmatpush2.msra.mxu0 %v126
  %209 = vmatprep.subr.mxu0 0.0
  %210 = vmatpush2.msra.mxu0 %v125
  %211 = vmatprep.subr.mxu0 0.0
  %212 = vmatpush2.msra.mxu0 %v124
  %213 = vmatprep.subr.mxu0 0.0
  %214 = vmatpush2.msra.mxu0 %v123
  %215 = vmatprep.subr.mxu0 0.0
  %216 = vmatpush2.msra.mxu0 %v122
  %217 = vmatprep.subr.mxu0 0.0
  %218 = vmatpush2.msra.mxu0 %v121
  %219 = vmatprep.subr.mxu0 0.0
  %220 = vmatpush2.msra.mxu0 %v120
  %221 = vmatprep.subr.mxu0 0.0
  %222 = vmatpush2.msra.mxu0 %v119
  %223 = vmatprep.subr.mxu0 0.0
  %224 = vmatpush2.msra.mxu0 %v118
  %225 = vmatprep.subr.mxu0 0.0
  %226 = vmatpush2.msra.mxu0 %v117
  %227 = vmatprep.subr.mxu0 0.0
  %228 = vmatpush2.msra.mxu0 %v116
  %229 = vmatprep.subr.mxu0 0.0
  %230 = vmatpush2.msra.mxu0 %v115
  %231 = vmatprep.subr.mxu0 0.0
  %232 = vmatpush2.msra.mxu0 %v114
  %233 = vmatprep.mubr.f32.mxu0 %v15
  %234 = vmatmul.mubr.f32.gmra.mxu0 %v14
  %v235 = vpop.f32.mrf.mxu0
  %v236 = vadd.f32 %v167, %v235
  %v237 = vpop.f32.mrf.mxu0
  %238 = vmatprep.mubr.f32.mxu0 %v19
  %239 = vmatmul.mubr.f32.gmra.mxu0 %v18
  %v240 = vpop.f32.mrf.mxu0
  %v241 = vadd.f32 %v167, %v240
  %v242 = vpop.f32.mrf.mxu0
  %243 = vmatprep.mubr.f32.mxu0 %v23
  %244 = vmatmul.mubr.f32.gmra.mxu0 %v22
  %v245 = vpop.f32.mrf.mxu0
  %v246 = vadd.f32 %v167, %v245
  %v247 = vpop.f32.mrf.mxu0
  %248 = vmatprep.mubr.f32.mxu0 %v27
  %249 = vmatmul.mubr.f32.gmra.mxu0 %v26
  %v250 = vpop.f32.mrf.mxu0
  %v251 = vadd.f32 %v167, %v250
  %v252 = vpop.f32.mrf.mxu0
  %253 = vmatprep.mubr.f32.mxu0 %v31
  %254 = vmatmul.mubr.f32.gmra.mxu0 %v30
  %v255 = vpop.f32.mrf.mxu0
  %v256 = vadd.f32 %v167, %v255
  %v257 = vpop.f32.mrf.mxu0
  %258 = vmatprep.mubr.f32.mxu0 %v35
  %259 = vmatmul.mubr.f32.gmra.mxu0 %v34
  %v260 = vpop.f32.mrf.mxu0
  %v261 = vadd.f32 %v167, %v260
  %v262 = vpop.f32.mrf.mxu0
  %263 = vmatprep.mubr.f32.mxu0 %v39
  %264 = vmatmul.mubr.f32.gmra.mxu0 %v38
  %v265 = vpop.f32.mrf.mxu0
  %v266 = vadd.f32 %v167, %v265
  %v267 = vpop.f32.mrf.mxu0
  %268 = vmatprep.mubr.f32.mxu0 %v43
  %269 = vmatmul.mubr.f32.gmra.mxu0 %v42
  %v270 = vpop.f32.mrf.mxu0
  %v271 = vadd.f32 %v167, %v270
  %v272 = vpop.f32.mrf.mxu0
  %273 = vmatprep.mubr.f32.mxu0 %v47
  %274 = vmatmul.mubr.f32.gmra.mxu0 %v46
  %v275 = vpop.f32.mrf.mxu0
  %v276 = vadd.f32 %v167, %v275
  %v277 = vpop.f32.mrf.mxu0
  %278 = vmatprep.mubr.f32.mxu0 %v51
  %279 = vmatmul.mubr.f32.gmra.mxu0 %v50
  %v280 = vpop.f32.mrf.mxu0
  %v281 = vadd.f32 %v167, %v280
  %v282 = vpop.f32.mrf.mxu0
  %283 = vmatprep.mubr.f32.mxu0 %v55
  %284 = vmatmul.mubr.f32.gmra.mxu0 %v54
  %v285 = vpop.f32.mrf.mxu0
  %v286 = vadd.f32 %v167, %v285
  %v287 = vpop.f32.mrf.mxu0
  %288 = vmatprep.mubr.f32.mxu0 %v59
  %289 = vmatmul.mubr.f32.gmra.mxu0 %v58
  %v290 = vpop.f32.mrf.mxu0
  %v291 = vadd.f32 %v167, %v290
  %v292 = vpop.f32.mrf.mxu0
  %293 = vmatprep.mubr.f32.mxu0 %v63
  %294 = vmatmul.mubr.f32.gmra.mxu0 %v62
  %v295 = vpop.f32.mrf.mxu0
  %v296 = vadd.f32 %v167, %v295
  %v297 = vpop.f32.mrf.mxu0
  %298 = vmatprep.mubr.f32.mxu0 %v67
  %299 = vmatmul.mubr.f32.gmra.mxu0 %v66
  %v300 = vpop.f32.mrf.mxu0
  %v301 = vadd.f32 %v167, %v300
  %v302 = vpop.f32.mrf.mxu0
  %303 = vmatprep.mubr.f32.mxu0 %v71
  %304 = vmatmul.mubr.f32.gmra.mxu0 %v70
  %v305 = vpop.f32.mrf.mxu0
  %v306 = vadd.f32 %v167, %v305
  %v307 = vpop.f32.mrf.mxu0
  %308 = vmatprep.mubr.f32.mxu0 %v75
  %309 = vmatmul.mubr.f32.gmra.mxu0 %v74
  %v310 = vpop.f32.mrf.mxu0
  %v311 = vadd.f32 %v167, %v310
  %v312 = vpop.f32.mrf.mxu0
  %313 = vmatprep.mubr.f32.mxu0 %v79
  %314 = vmatmul.mubr.f32.gmra.mxu0 %v78
  %v315 = vpop.f32.mrf.mxu0
  %v316 = vadd.f32 %v167, %v315
  %v317 = vpop.f32.mrf.mxu0
  %318 = vmatprep.mubr.f32.mxu0 %v83
  %319 = vmatmul.mubr.f32.gmra.mxu0 %v82
  %v320 = vpop.f32.mrf.mxu0
  %v321 = vadd.f32 %v167, %v320
  %v322 = vpop.f32.mrf.mxu0
  %323 = vmatprep.mubr.f32.mxu0 %v87
  %324 = vmatmul.mubr.f32.gmra.mxu0 %v86
  %v325 = vpop.f32.mrf.mxu0
  %v326 = vadd.f32 %v167, %v325
  %v327 = vpop.f32.mrf.mxu0
  %328 = vmatprep.mubr.f32.mxu0 %v91
  %329 = vmatmul.mubr.f32.gmra.mxu0 %v90
  %v330 = vpop.f32.mrf.mxu0
  %v331 = vadd.f32 %v167, %v330
  %v332 = vpop.f32.mrf.mxu0
  %333 = vmatprep.mubr.f32.mxu0 %v95
  %334 = vmatmul.mubr.f32.gmra.mxu0 %v94
  %v335 = vpop.f32.mrf.mxu0
  %v336 = vadd.f32 %v167, %v335
  %v337 = vpop.f32.mrf.mxu0
  %338 = vdwg.mxu0
  %339 = vmatprep.subr.mxu0 0.0
  %340 = vmatpush1.msra.mxu0 %v145
  %341 = vmatprep.subr.mxu0 0.0
  %342 = vmatpush1.msra.mxu0 %v144
  %343 = vmatprep.subr.mxu0 0.0
  %344 = vmatpush1.msra.mxu0 %v143
  %345 = vmatprep.subr.mxu0 0.0
  %346 = vmatpush1.msra.mxu0 %v142
  %347 = vmatprep.subr.mxu0 0.0
  %348 = vmatpush1.msra.mxu0 %v141
  %349 = vmatprep.subr.mxu0 0.0
  %350 = vmatpush1.msra.mxu0 %v140
  %351 = vmatprep.subr.mxu0 0.0
  %352 = vmatpush1.msra.mxu0 %v139
  %353 = vmatprep.subr.mxu0 0.0
  %354 = vmatpush1.msra.mxu0 %v138
  %355 = vmatprep.subr.mxu0 0.0
  %356 = vmatpush1.msra.mxu0 %v137
  %357 = vmatprep.subr.mxu0 0.0
  %358 = vmatpush1.msra.mxu0 %v136
  %359 = vmatprep.subr.mxu0 0.0
  %360 = vmatpush1.msra.mxu0 %v135
  %361 = vmatprep.subr.mxu0 0.0
  %362 = vmatpush1.msra.mxu0 %v134
  %363 = vmatprep.subr.mxu0 0.0
  %364 = vmatpush1.msra.mxu0 %v133
  %365 = vmatprep.subr.mxu0 0.0
  %366 = vmatpush1.msra.mxu0 %v132
  %367 = vmatprep.subr.mxu0 0.0
  %368 = vmatpush1.msra.mxu0 %v131
  %369 = vmatprep.subr.mxu0 0.0
  %370 = vmatpush1.msra.mxu0 %v130
  %371 = vmatprep.subr.mxu0 0.0
  %372 = vmatpush2.msra.mxu0 %v161
  %373 = vmatprep.subr.mxu0 0.0
  %374 = vmatpush2.msra.mxu0 %v160
  %375 = vmatprep.subr.mxu0 0.0
  %376 = vmatpush2.msra.mxu0 %v159
  %377 = vmatprep.subr.mxu0 0.0
  %378 = vmatpush2.msra.mxu0 %v158
  %379 = vmatprep.subr.mxu0 0.0
  %380 = vmatpush2.msra.mxu0 %v157
  %381 = vmatprep.subr.mxu0 0.0
  %382 = vmatpush2.msra.mxu0 %v156
  %383 = vmatprep.subr.mxu0 0.0
  %384 = vmatpush2.msra.mxu0 %v155
  %385 = vmatprep.subr.mxu0 0.0
  %386 = vmatpush2.msra.mxu0 %v154
  %387 = vmatprep.subr.mxu0 0.0
  %388 = vmatpush2.msra.mxu0 %v153
  %389 = vmatprep.subr.mxu0 0.0
  %390 = vmatpush2.msra.mxu0 %v152
  %391 = vmatprep.subr.mxu0 0.0
  %392 = vmatpush2.msra.mxu0 %v151
  %393 = vmatprep.subr.mxu0 0.0
  %394 = vmatpush2.msra.mxu0 %v150
  %395 = vmatprep.subr.mxu0 0.0
  %396 = vmatpush2.msra.mxu0 %v149
  %397 = vmatprep.subr.mxu0 0.0
  %398 = vmatpush2.msra.mxu0 %v148
  %399 = vmatprep.subr.mxu0 0.0
  %400 = vmatpush2.msra.mxu0 %v147
  %401 = vmatprep.subr.mxu0 0.0
  %402 = vmatpush2.msra.mxu0 %v146
  %403 = vmatprep.mubr.f32.mxu0 %v17
  %404 = vmatmul.mubr.f32.gmra.mxu0 %v16
  %v405 = vpop.f32.mrf.mxu0
  %v406 = vadd.f32 %v236, %v405
  %v407 = vpop.f32.mrf.mxu0
  %408 = vmatprep.mubr.f32.mxu0 %v21
  %409 = vmatmul.mubr.f32.gmra.mxu0 %v20
  %v410 = vpop.f32.mrf.mxu0
  %v411 = vadd.f32 %v241, %v410
  %v412 = vpop.f32.mrf.mxu0
  %413 = vmatprep.mubr.f32.mxu0 %v25
  %414 = vmatmul.mubr.f32.gmra.mxu0 %v24
  %v415 = vpop.f32.mrf.mxu0
  %v416 = vadd.f32 %v246, %v415
  %v417 = vpop.f32.mrf.mxu0
  %418 = vmatprep.mubr.f32.mxu0 %v29
  %419 = vmatmul.mubr.f32.gmra.mxu0 %v28
  %v420 = vpop.f32.mrf.mxu0
  %v421 = vadd.f32 %v251, %v420
  %v422 = vpop.f32.mrf.mxu0
  %423 = vmatprep.mubr.f32.mxu0 %v33
  %424 = vmatmul.mubr.f32.gmra.mxu0 %v32
  %v425 = vpop.f32.mrf.mxu0
  %v426 = vadd.f32 %v256, %v425
  %v427 = vpop.f32.mrf.mxu0
  %428 = vmatprep.mubr.f32.mxu0 %v37
  %429 = vmatmul.mubr.f32.gmra.mxu0 %v36
  %v430 = vpop.f32.mrf.mxu0
  %v431 = vadd.f32 %v261, %v430
  %v432 = vpop.f32.mrf.mxu0
  %433 = vmatprep.mubr.f32.mxu0 %v41
  %434 = vmatmul.mubr.f32.gmra.mxu0 %v40
  %v435 = vpop.f32.mrf.mxu0
  %v436 = vadd.f32 %v266, %v435
  %v437 = vpop.f32.mrf.mxu0
  %438 = vmatprep.mubr.f32.mxu0 %v45
  %439 = vmatmul.mubr.f32.gmra.mxu0 %v44
  %v440 = vpop.f32.mrf.mxu0
  %v441 = vadd.f32 %v271, %v440
  %v442 = vpop.f32.mrf.mxu0
  %443 = vmatprep.mubr.f32.mxu0 %v49
  %444 = vmatmul.mubr.f32.gmra.mxu0 %v48
  %v445 = vpop.f32.mrf.mxu0
  %v446 = vadd.f32 %v276, %v445
  %v447 = vpop.f32.mrf.mxu0
  %448 = vmatprep.mubr.f32.mxu0 %v53
  %449 = vmatmul.mubr.f32.gmra.mxu0 %v52
  %v450 = vpop.f32.mrf.mxu0
  %v451 = vadd.f32 %v281, %v450
  %v452 = vpop.f32.mrf.mxu0
  %453 = vmatprep.mubr.f32.mxu0 %v57
  %454 = vmatmul.mubr.f32.gmra.mxu0 %v56
  %v455 = vpop.f32.mrf.mxu0
  %v456 = vadd.f32 %v286, %v455
  %v457 = vpop.f32.mrf.mxu0
  %458 = vmatprep.mubr.f32.mxu0 %v61
  %459 = vmatmul.mubr.f32.gmra.mxu0 %v60
  %v460 = vpop.f32.mrf.mxu0
  %v461 = vadd.f32 %v291, %v460
  %v462 = vpop.f32.mrf.mxu0
  %463 = vmatprep.mubr.f32.mxu0 %v65
  %464 = vmatmul.mubr.f32.gmra.mxu0 %v64
  %v465 = vpop.f32.mrf.mxu0
  %v466 = vadd.f32 %v296, %v465
  %v467 = vpop.f32.mrf.mxu0
  %468 = vmatprep.mubr.f32.mxu0 %v69
  %469 = vmatmul.mubr.f32.gmra.mxu0 %v68
  %v470 = vpop.f32.mrf.mxu0
  %v471 = vadd.f32 %v301, %v470
  %v472 = vpop.f32.mrf.mxu0
  %473 = vmatprep.mubr.f32.mxu0 %v73
  %474 = vmatmul.mubr.f32.gmra.mxu0 %v72
  %v475 = vpop.f32.mrf.mxu0
  %v476 = vadd.f32 %v306, %v475
  %v477 = vpop.f32.mrf.mxu0
  %478 = vmatprep.mubr.f32.mxu0 %v77
  %479 = vmatmul.mubr.f32.gmra.mxu0 %v76
  %v480 = vpop.f32.mrf.mxu0
  %v481 = vadd.f32 %v311, %v480
  %v482 = vpop.f32.mrf.mxu0
  %483 = vmatprep.mubr.f32.mxu0 %v81
  %484 = vmatmul.mubr.f32.gmra.mxu0 %v80
  %v485 = vpop.f32.mrf.mxu0
  %v486 = vadd.f32 %v316, %v485
  %v487 = vpop.f32.mrf.mxu0
  %488 = vmatprep.mubr.f32.mxu0 %v85
  %489 = vmatmul.mubr.f32.gmra.mxu0 %v84
  %v490 = vpop.f32.mrf.mxu0
  %v491 = vadd.f32 %v321, %v490
  %v492 = vpop.f32.mrf.mxu0
  %493 = vmatprep.mubr.f32.mxu0 %v89
  %494 = vmatmul.mubr.f32.gmra.mxu0 %v88
  %v495 = vpop.f32.mrf.mxu0
  %v496 = vadd.f32 %v326, %v495
  %v497 = vpop.f32.mrf.mxu0
  %498 = vmatprep.mubr.f32.mxu0 %v93
  %499 = vmatmul.mubr.f32.gmra.mxu0 %v92
  %v500 = vpop.f32.mrf.mxu0
  %v501 = vadd.f32 %v331, %v500
  %v502 = vpop.f32.mrf.mxu0
  %503 = vmatprep.mubr.f32.mxu0 %v97
  %504 = vmatmul.mubr.f32.gmra.mxu0 %v96
  %v505 = vpop.f32.mrf.mxu0
  %v506 = vadd.f32 %v336, %v505
  %v507 = vpop.f32.mrf.mxu0
  %508 = vdwg.mxu0
  %v509 = vmax.f32 %v406, 0.0
  %v510 = vmax.f32 %v411, 0.0
  %v511 = vmax.f32 %v416, 0.0
  %v512 = vmax.f32 %v421, 0.0
  %v513 = vmax.f32 %v426, 0.0
  %v514 = vmax.f32 %v431, 0.0
  %v515 = vmax.f32 %v436, 0.0
  %v516 = vmax.f32 %v441, 0.0
  %v517 = vmax.f32 %v446, 0.0
  %v518 = vmax.f32 %v451, 0.0
  %v519 = vmax.f32 %v456, 0.0
  %v520 = vmax.f32 %v461, 0.0
  %v521 = vmax.f32 %v466, 0.0
  %v522 = vmax.f32 %v471, 0.0
  %v523 = vmax.f32 %v476, 0.0
  %v524 = vmax.f32 %v481, 0.0
  %v525 = vmax.f32 %v486, 0.0
  %v526 = vmax.f32 %v491, 0.0
  %v527 = vmax.f32 %v496, 0.0
  %v528 = vmax.f32 %v501, 0.0
  %v529 = vmax.f32 %v506, 0.0
  %vm530 = vcmask 523264
  %531 = vst.msk [vmem:[%s3] sm:$0xff] %vm530, %v509
  %532 = vst.msk [vmem:[%s3 + $0x8] sm:$0xff] %vm530, %v510
  %533 = vst.msk [vmem:[%s3 + $0x10] sm:$0xff] %vm530, %v511
  %534 = vst.msk [vmem:[%s3 + $0x18] sm:$0xff] %vm530, %v512
  %535 = vst.msk [vmem:[%s3 + $0x20] sm:$0xff] %vm530, %v513
  %536 = vst.msk [vmem:[%s3 + $0x28] sm:$0xff] %vm530, %v514
  %537 = vst.msk [vmem:[%s3 + $0x30] sm:$0xff] %vm530, %v515
  %538 = vst.msk [vmem:[%s3 + $0x38] sm:$0xff] %vm530, %v516
  %539 = vst.msk [vmem:[%s3 + $0x40] sm:$0xff] %vm530, %v517
  %540 = vst.msk [vmem:[%s3 + $0x48] sm:$0xff] %vm530, %v518
  %541 = vst.msk [vmem:[%s3 + $0x50] sm:$0xff] %vm530, %v519
  %542 = vst.msk [vmem:[%s3 + $0x58] sm:$0xff] %vm530, %v520
  %543 = vst.msk [vmem:[%s3 + $0x60] sm:$0xff] %vm530, %v521
  %544 = vst.msk [vmem:[%s3 + $0x68] sm:$0xff] %vm530, %v522
  %545 = vst.msk [vmem:[%s3 + $0x70] sm:$0xff] %vm530, %v523
  %546 = vst.msk [vmem:[%s3 + $0x78] sm:$0xff] %vm530, %v524
  %547 = vst.msk [vmem:[%s3 + $0x80] sm:$0xff] %vm530, %v525
  %548 = vst.msk [vmem:[%s3 + $0x88] sm:$0xff] %vm530, %v526
  %549 = vst.msk [vmem:[%s3 + $0x90] sm:$0xff] %vm530, %v527
  %550 = vst.msk [vmem:[%s3 + $0x98] sm:$0xff] %vm530, %v528
  %vm551 = vcmask 517120
  %552 = vst.msk [vmem:[%s3 + $0xa0] sm:$0x3] %vm551, %v529
  // Predicated region
  $region14: #{forward.5} parent=0 // pred_check
    _
  $region15: #{forward.5} parent=0 // pred_check_branch
    %554 = sbr.rel (0) target = $region17
  $region16: #{forward.5} parent=0 // pred_region
    _
  $region17: #{forward.5} parent=0 // pred_fallthru
    _
  // Predicated region
  $region18: #{forward.5} parent=0 // pred_check
    _
  $region19: #{forward.5} parent=0 // pred_check_branch
    %556 = sbr.rel (0) target = $region21
  $region20: #{forward.5} parent=0 // pred_region
    _
  $region21: #{forward.5} parent=0 // pred_fallthru
    _

// kernel: forward.6
$region0: #{forward.6}
  #allocation0 [shape = 'u32[]', space=smem, size = 0x4, offset = 0x4, fixed_abs, tag = 'smem constant byte address 0x4 - core index']
  #allocation1 [shape = 'u32[144,128]{1,0:T(1,128)}', space=vmem, size = 0x12000, scoped, tag = 'internal scratch']
  %s0 = inlined_call_operand.vmem [shape: f32[98,576], index: 0, kind: input, shape index: {}]
  %s1 = inlined_call_operand.vmem [shape: f32[576,64], index: 1, kind: input, shape index: {}]
  %s2 = inlined_call_operand.vmem [shape: f32[1,64], index: 2, kind: input, shape index: {}]
  %s3 = inlined_call_operand.vmem [shape: f32[98,64], index: 3, kind: output, shape index: {}]
  %s4 = sld [smem:[#allocation0]]
  $region22: #{forward.6} parent=0
    _
  %s6 = ssub.s32 1, %s4
  %s7 = scalar_select 0, %s6, %s4
  // Predicated region
  $region2: #{forward.6} parent=0 // pred_check
    _
  $region3: #{forward.6} parent=0 // pred_check_branch
    %9 = sbr.rel (0) target = $region5
  $region4: #{forward.6} parent=0 // pred_region
    _
  $region5: #{forward.6} parent=0 // pred_fallthru
    _
  // Predicated region
  $region6: #{forward.6} parent=0 // pred_check
    _
  $region7: #{forward.6} parent=0 // pred_check_branch
    %11 = sbr.rel (0) target = $region9
  $region8: #{forward.6} parent=0 // pred_region
    _
  $region9: #{forward.6} parent=0 // pred_fallthru
    _
  // Predicated region
  $region10: #{forward.6} parent=0 // pred_check
    _
  $region11: #{forward.6} parent=0 // pred_check_branch
    %13 = sbr.rel (0) target = $region13
  $region12: #{forward.6} parent=0 // pred_region
    _
  $region13: #{forward.6} parent=0 // pred_fallthru
    _
  %v14 = vld [vmem:[%s0] sm:$0xff]
  %v15 = vld [vmem:[%s0 + $0x8] sm:$0xff]
  %v16 = vld [vmem:[%s0 + $0x10] sm:$0xff]
  %v17 = vld [vmem:[%s0 + $0x18] sm:$0xff]
  %v18 = vld [vmem:[%s0 + $0x20] sm:$0xff]
  %v19 = vld [vmem:[%s0 + $0x28] sm:$0xff]
  %v20 = vld [vmem:[%s0 + $0x30] sm:$0xff]
  %v21 = vld [vmem:[%s0 + $0x38] sm:$0xff]
  %v22 = vld [vmem:[%s0 + $0x40] sm:$0xff]
  %v23 = vld [vmem:[%s0 + $0x48] sm:$0xff]
  %v24 = vld [vmem:[%s0 + $0x50] sm:$0xff]
  %v25 = vld [vmem:[%s0 + $0x58] sm:$0xff]
  %v26 = vld [vmem:[%s0 + $0x60] sm:$0xff]
  %v27 = vld [vmem:[%s0 + $0x68] sm:$0xff]
  %v28 = vld [vmem:[%s0 + $0x70] sm:$0xff]
  %v29 = vld [vmem:[%s0 + $0x78] sm:$0xff]
  %v30 = vld [vmem:[%s0 + $0x80] sm:$0xff]
  %v31 = vld [vmem:[%s0 + $0x88] sm:$0xff]
  %v32 = vld [vmem:[%s0 + $0x90] sm:$0xff]
  %v33 = vld [vmem:[%s0 + $0x98] sm:$0xff]
  %v34 = vld [vmem:[%s0 + $0xa0] sm:$0xff]
  %v35 = vld [vmem:[%s0 + $0xa8] sm:$0xff]
  %v36 = vld [vmem:[%s0 + $0xb0] sm:$0xff]
  %v37 = vld [vmem:[%s0 + $0xb8] sm:$0xff]
  %v38 = vld [vmem:[%s0 + $0xc0] sm:$0xff]
  %v39 = vld [vmem:[%s0 + $0xc8] sm:$0xff]
  %v40 = vld [vmem:[%s0 + $0xd0] sm:$0xff]
  %v41 = vld [vmem:[%s0 + $0xd8] sm:$0xff]
  %v42 = vld [vmem:[%s0 + $0xe0] sm:$0xff]
  %v43 = vld [vmem:[%s0 + $0xe8] sm:$0xff]
  %v44 = vld [vmem:[%s0 + $0xf0] sm:$0xff]
  %v45 = vld [vmem:[%s0 + $0xf8] sm:$0xff]
  %v46 = vld [vmem:[%s0 + $0x100] sm:$0xff]
  %v47 = vld [vmem:[%s0 + $0x108] sm:$0xff]
  %v48 = vld [vmem:[%s0 + $0x110] sm:$0xff]
  %v49 = vld [vmem:[%s0 + $0x118] sm:$0xff]
  %v50 = vld [vmem:[%s0 + $0x120] sm:$0xff]
  %v51 = vld [vmem:[%s0 + $0x128] sm:$0xff]
  %v52 = vld [vmem:[%s0 + $0x130] sm:$0xff]
  %v53 = vld [vmem:[%s0 + $0x138] sm:$0xff]
  %v54 = vld [vmem:[%s0 + $0x140] sm:$0xff]
  %v55 = vld [vmem:[%s0 + $0x148] sm:$0xff]
  %v56 = vld [vmem:[%s0 + $0x150] sm:$0xff]
  %v57 = vld [vmem:[%s0 + $0x158] sm:$0xff]
  %v58 = vld [vmem:[%s0 + $0x160] sm:$0xff]
  %v59 = vld [vmem:[%s0 + $0x168] sm:$0xff]
  %v60 = vld [vmem:[%s0 + $0x170] sm:$0xff]
  %v61 = vld [vmem:[%s0 + $0x178] sm:$0xff]
  %v62 = vld [vmem:[%s0 + $0x180] sm:$0xff]
  %v63 = vld [vmem:[%s0 + $0x188] sm:$0xff]
  %v64 = vld [vmem:[%s0 + $0x190] sm:$0xff]
  %v65 = vld [vmem:[%s0 + $0x198] sm:$0xff]
  %v66 = vld [vmem:[%s0 + $0x1a0] sm:$0xff]
  %v67 = vld [vmem:[%s0 + $0x1a8] sm:$0xff]
  %v68 = vld [vmem:[%s0 + $0x1b0] sm:$0xff]
  %v69 = vld [vmem:[%s0 + $0x1b8] sm:$0xff]
  %v70 = vld [vmem:[%s0 + $0x1c0] sm:$0xff]
  %v71 = vld [vmem:[%s0 + $0x1c8] sm:$0xff]
  %v72 = vld [vmem:[%s0 + $0x1d0] sm:$0xff]
  %v73 = vld [vmem:[%s0 + $0x1d8] sm:$0xff]
  %v74 = vld [vmem:[%s0 + $0x1e0] sm:$0x3]
  %v75 = vld [vmem:[%s0 + $0x1e8] sm:$0x3]
  %v76 = vld [vmem:[%s0 + $0x1f0] sm:$0x3]
  %v77 = vld [vmem:[%s0 + $0x1f8] sm:$0x3]
  %v78 = vld [vmem:[%s0 + $0x200] sm:$0x3]
  %v79 = vld [vmem:[%s1] sm:$0xff]
  %v80 = vld [vmem:[%s1 + $0x8] sm:$0xff]
  %v81 = vld [vmem:[%s1 + $0x10] sm:$0xff]
  %v82 = vld [vmem:[%s1 + $0x18] sm:$0xff]
  %v83 = vld [vmem:[%s1 + $0x20] sm:$0xff]
  %v84 = vld [vmem:[%s1 + $0x28] sm:$0xff]
  %v85 = vld [vmem:[%s1 + $0x30] sm:$0xff]
  %v86 = vld [vmem:[%s1 + $0x38] sm:$0xff]
  %v87 = vld [vmem:[%s1 + $0x40] sm:$0xff]
  %v88 = vld [vmem:[%s1 + $0x48] sm:$0xff]
  %v89 = vld [vmem:[%s1 + $0x50] sm:$0xff]
  %v90 = vld [vmem:[%s1 + $0x58] sm:$0xff]
  %v91 = vld [vmem:[%s1 + $0x60] sm:$0xff]
  %v92 = vld [vmem:[%s1 + $0x68] sm:$0xff]
  %v93 = vld [vmem:[%s1 + $0x70] sm:$0xff]
  %v94 = vld [vmem:[%s1 + $0x78] sm:$0xff]
  %v95 = vld [vmem:[%s1 + $0x80] sm:$0xff]
  %v96 = vld [vmem:[%s1 + $0x88] sm:$0xff]
  %v97 = vld [vmem:[%s1 + $0x90] sm:$0xff]
  %v98 = vld [vmem:[%s1 + $0x98] sm:$0xff]
  %v99 = vld [vmem:[%s1 + $0xa0] sm:$0xff]
  %v100 = vld [vmem:[%s1 + $0xa8] sm:$0xff]
  %v101 = vld [vmem:[%s1 + $0xb0] sm:$0xff]
  %v102 = vld [vmem:[%s1 + $0xb8] sm:$0xff]
  %v103 = vld [vmem:[%s1 + $0xc0] sm:$0xff]
  %v104 = vld [vmem:[%s1 + $0xc8] sm:$0xff]
  %v105 = vld [vmem:[%s1 + $0xd0] sm:$0xff]
  %v106 = vld [vmem:[%s1 + $0xd8] sm:$0xff]
  %v107 = vld [vmem:[%s1 + $0xe0] sm:$0xff]
  %v108 = vld [vmem:[%s1 + $0xe8] sm:$0xff]
  %v109 = vld [vmem:[%s1 + $0xf0] sm:$0xff]
  %v110 = vld [vmem:[%s1 + $0xf8] sm:$0xff]
  %v111 = vld [vmem:[%s1 + $0x100] sm:$0xff]
  %v112 = vld [vmem:[%s1 + $0x108] sm:$0xff]
  %v113 = vld [vmem:[%s1 + $0x110] sm:$0xff]
  %v114 = vld [vmem:[%s1 + $0x118] sm:$0xff]
  %v115 = vld [vmem:[%s1 + $0x120] sm:$0xff]
  %v116 = vld [vmem:[%s1 + $0x128] sm:$0xff]
  %v117 = vld [vmem:[%s1 + $0x130] sm:$0xff]
  %v118 = vld [vmem:[%s1 + $0x138] sm:$0xff]
  %v119 = vld [vmem:[%s1 + $0x140] sm:$0xff]
  %v120 = vld [vmem:[%s1 + $0x148] sm:$0xff]
  %v121 = vld [vmem:[%s1 + $0x150] sm:$0xff]
  %v122 = vld [vmem:[%s1 + $0x158] sm:$0xff]
  %v123 = vld [vmem:[%s1 + $0x160] sm:$0xff]
  %v124 = vld [vmem:[%s1 + $0x168] sm:$0xff]
  %v125 = vld [vmem:[%s1 + $0x170] sm:$0xff]
  %v126 = vld [vmem:[%s1 + $0x178] sm:$0xff]
  %v127 = vld [vmem:[%s1 + $0x180] sm:$0xff]
  %v128 = vld [vmem:[%s1 + $0x188] sm:$0xff]
  %v129 = vld [vmem:[%s1 + $0x190] sm:$0xff]
  %v130 = vld [vmem:[%s1 + $0x198] sm:$0xff]
  %v131 = vld [vmem:[%s1 + $0x1a0] sm:$0xff]
  %v132 = vld [vmem:[%s1 + $0x1a8] sm:$0xff]
  %v133 = vld [vmem:[%s1 + $0x1b0] sm:$0xff]
  %v134 = vld [vmem:[%s1 + $0x1b8] sm:$0xff]
  %v135 = vld [vmem:[%s1 + $0x1c0] sm:$0xff]
  %v136 = vld [vmem:[%s1 + $0x1c8] sm:$0xff]
  %v137 = vld [vmem:[%s1 + $0x1d0] sm:$0xff]
  %v138 = vld [vmem:[%s1 + $0x1d8] sm:$0xff]
  %v139 = vld [vmem:[%s1 + $0x1e0] sm:$0xff]
  %v140 = vld [vmem:[%s1 + $0x1e8] sm:$0xff]
  %v141 = vld [vmem:[%s1 + $0x1f0] sm:$0xff]
  %v142 = vld [vmem:[%s1 + $0x1f8] sm:$0xff]
  %v143 = vld [vmem:[%s1 + $0x200] sm:$0xff]
  %v144 = vld [vmem:[%s1 + $0x208] sm:$0xff]
  %v145 = vld [vmem:[%s1 + $0x210] sm:$0xff]
  %v146 = vld [vmem:[%s1 + $0x218] sm:$0xff]
  %v147 = vld [vmem:[%s1 + $0x220] sm:$0xff]
  %v148 = vld [vmem:[%s1 + $0x228] sm:$0xff]
  %v149 = vld [vmem:[%s1 + $0x230] sm:$0xff]
  %v150 = vld [vmem:[%s1 + $0x238] sm:$0xff]
  %v151 = vld [vmem:[%s2] sm:$0x1]
  %v153 = vlaneseq
  %v154 = vshrl.u32 %v153, 7
  %v155 = vsub.s32 0, %v154
  %v156 = vrot.slane %v151, %v155
  %vm158 = vcmask 523264
  %v160 = vsel %vm158, %v18, 0
  %v163 = vsel %vm158, %v23, 0
  %v166 = vsel %vm158, %v28, 0
  %v169 = vsel %vm158, %v33, 0
  %v172 = vsel %vm158, %v38, 0
  %v175 = vsel %vm158, %v43, 0
  %v178 = vsel %vm158, %v48, 0
  %v181 = vsel %vm158, %v53, 0
  %v184 = vsel %vm158, %v58, 0
  %v187 = vsel %vm158, %v63, 0
  %v190 = vsel %vm158, %v68, 0
  %v193 = vsel %vm158, %v73, 0
  %v196 = vsel %vm158, %v78, 0
  %198 = vmatprep.subr.mxu0 0.0
  %199 = vmatpush1.msra.mxu0 %v94
  %200 = vmatprep.subr.mxu0 0.0
  %201 = vmatpush1.msra.mxu0 %v93
  %202 = vmatprep.subr.mxu0 0.0
  %203 = vmatpush1.msra.mxu0 %v92
  %204 = vmatprep.subr.mxu0 0.0
  %205 = vmatpush1.msra.mxu0 %v91
  %206 = vmatprep.subr.mxu0 0.0
  %207 = vmatpush1.msra.mxu0 %v90
  %208 = vmatprep.subr.mxu0 0.0
  %209 = vmatpush1.msra.mxu0 %v89
  %210 = vmatprep.subr.mxu0 0.0
  %211 = vmatpush1.msra.mxu0 %v88
  %212 = vmatprep.subr.mxu0 0.0
  %213 = vmatpush1.msra.mxu0 %v87
  %214 = vmatprep.subr.mxu0 0.0
  %215 = vmatpush1.msra.mxu0 %v86
  %216 = vmatprep.subr.mxu0 0.0
  %217 = vmatpush1.msra.mxu0 %v85
  %218 = vmatprep.subr.mxu0 0.0
  %219 = vmatpush1.msra.mxu0 %v84
  %220 = vmatprep.subr.mxu0 0.0
  %221 = vmatpush1.msra.mxu0 %v83
  %222 = vmatprep.subr.mxu0 0.0
  %223 = vmatpush1.msra.mxu0 %v82
  %224 = vmatprep.subr.mxu0 0.0
  %225 = vmatpush1.msra.mxu0 %v81
  %226 = vmatprep.subr.mxu0 0.0
  %227 = vmatpush1.msra.mxu0 %v80
  %228 = vmatprep.subr.mxu0 0.0
  %229 = vmatpush1.msra.mxu0 %v79
  %230 = vmatprep.subr.mxu0 0.0
  %231 = vmatpush2.msra.mxu0 %v110
  %232 = vmatprep.subr.mxu0 0.0
  %233 = vmatpush2.msra.mxu0 %v109
  %234 = vmatprep.subr.mxu0 0.0
  %235 = vmatpush2.msra.mxu0 %v108
  %236 = vmatprep.subr.mxu0 0.0
  %237 = vmatpush2.msra.mxu0 %v107
  %238 = vmatprep.subr.mxu0 0.0
  %239 = vmatpush2.msra.mxu0 %v106
  %240 = vmatprep.subr.mxu0 0.0
  %241 = vmatpush2.msra.mxu0 %v105
  %242 = vmatprep.subr.mxu0 0.0
  %243 = vmatpush2.msra.mxu0 %v104
  %244 = vmatprep.subr.mxu0 0.0
  %245 = vmatpush2.msra.mxu0 %v103
  %246 = vmatprep.subr.mxu0 0.0
  %247 = vmatpush2.msra.mxu0 %v102
  %248 = vmatprep.subr.mxu0 0.0
  %249 = vmatpush2.msra.mxu0 %v101
  %250 = vmatprep.subr.mxu0 0.0
  %251 = vmatpush2.msra.mxu0 %v100
  %252 = vmatprep.subr.mxu0 0.0
  %253 = vmatpush2.msra.mxu0 %v99
  %254 = vmatprep.subr.mxu0 0.0
  %255 = vmatpush2.msra.mxu0 %v98
  %256 = vmatprep.subr.mxu0 0.0
  %257 = vmatpush2.msra.mxu0 %v97
  %258 = vmatprep.subr.mxu0 0.0
  %259 = vmatpush2.msra.mxu0 %v96
  %260 = vmatprep.subr.mxu0 0.0
  %261 = vmatpush2.msra.mxu0 %v95
  %262 = vmatprep.mubr.f32.mxu0 %v15
  %263 = vmatmul.mubr.f32.gmra.mxu0 %v14
  %v264 = vpop.f32.mrf.mxu0
  %v265 = vadd.f32 %v156, %v264
  %v266 = vpop.f32.mrf.mxu0
  %267 = vmatprep.mubr.f32.mxu0 %v20
  %268 = vmatmul.mubr.f32.gmra.mxu0 %v19
  %v269 = vpop.f32.mrf.mxu0
  %v270 = vadd.f32 %v156, %v269
  %v271 = vpop.f32.mrf.mxu0
  %272 = vmatprep.mubr.f32.mxu0 %v25
  %273 = vmatmul.mubr.f32.gmra.mxu0 %v24
  %v274 = vpop.f32.mrf.mxu0
  %v275 = vadd.f32 %v156, %v274
  %v276 = vpop.f32.mrf.mxu0
  %277 = vmatprep.mubr.f32.mxu0 %v30
  %278 = vmatmul.mubr.f32.gmra.mxu0 %v29
  %v279 = vpop.f32.mrf.mxu0
  %v280 = vadd.f32 %v156, %v279
  %v281 = vpop.f32.mrf.mxu0
  %282 = vmatprep.mubr.f32.mxu0 %v35
  %283 = vmatmul.mubr.f32.gmra.mxu0 %v34
  %v284 = vpop.f32.mrf.mxu0
  %v285 = vadd.f32 %v156, %v284
  %v286 = vpop.f32.mrf.mxu0
  %287 = vmatprep.mubr.f32.mxu0 %v40
  %288 = vmatmul.mubr.f32.gmra.mxu0 %v39
  %v289 = vpop.f32.mrf.mxu0
  %v290 = vadd.f32 %v156, %v289
  %v291 = vpop.f32.mrf.mxu0
  %292 = vmatprep.mubr.f32.mxu0 %v45
  %293 = vmatmul.mubr.f32.gmra.mxu0 %v44
  %v294 = vpop.f32.mrf.mxu0
  %v295 = vadd.f32 %v156, %v294
  %v296 = vpop.f32.mrf.mxu0
  %297 = vmatprep.mubr.f32.mxu0 %v50
  %298 = vmatmul.mubr.f32.gmra.mxu0 %v49
  %v299 = vpop.f32.mrf.mxu0
  %v300 = vadd.f32 %v156, %v299
  %v301 = vpop.f32.mrf.mxu0
  %302 = vmatprep.mubr.f32.mxu0 %v55
  %303 = vmatmul.mubr.f32.gmra.mxu0 %v54
  %v304 = vpop.f32.mrf.mxu0
  %v305 = vadd.f32 %v156, %v304
  %v306 = vpop.f32.mrf.mxu0
  %307 = vmatprep.mubr.f32.mxu0 %v60
  %308 = vmatmul.mubr.f32.gmra.mxu0 %v59
  %v309 = vpop.f32.mrf.mxu0
  %v310 = vadd.f32 %v156, %v309
  %v311 = vpop.f32.mrf.mxu0
  %312 = vmatprep.mubr.f32.mxu0 %v65
  %313 = vmatmul.mubr.f32.gmra.mxu0 %v64
  %v314 = vpop.f32.mrf.mxu0
  %v315 = vadd.f32 %v156, %v314
  %v316 = vpop.f32.mrf.mxu0
  %317 = vmatprep.mubr.f32.mxu0 %v70
  %318 = vmatmul.mubr.f32.gmra.mxu0 %v69
  %v319 = vpop.f32.mrf.mxu0
  %v320 = vadd.f32 %v156, %v319
  %v321 = vpop.f32.mrf.mxu0
  %322 = vmatprep.mubr.f32.mxu0 %v75
  %323 = vmatmul.mubr.f32.gmra.mxu0 %v74
  %v324 = vpop.f32.mrf.mxu0
  %v325 = vadd.f32 %v156, %v324
  %v326 = vpop.f32.mrf.mxu0
  %327 = vdwg.mxu0
  %328 = vmatprep.subr.mxu0 0.0
  %329 = vmatpush1.msra.mxu0 %v126
  %330 = vmatprep.subr.mxu0 0.0
  %331 = vmatpush1.msra.mxu0 %v125
  %332 = vmatprep.subr.mxu0 0.0
  %333 = vmatpush1.msra.mxu0 %v124
  %334 = vmatprep.subr.mxu0 0.0
  %335 = vmatpush1.msra.mxu0 %v123
  %336 = vmatprep.subr.mxu0 0.0
  %337 = vmatpush1.msra.mxu0 %v122
  %338 = vmatprep.subr.mxu0 0.0
  %339 = vmatpush1.msra.mxu0 %v121
  %340 = vmatprep.subr.mxu0 0.0
  %341 = vmatpush1.msra.mxu0 %v120
  %342 = vmatprep.subr.mxu0 0.0
  %343 = vmatpush1.msra.mxu0 %v119
  %344 = vmatprep.subr.mxu0 0.0
  %345 = vmatpush1.msra.mxu0 %v118
  %346 = vmatprep.subr.mxu0 0.0
  %347 = vmatpush1.msra.mxu0 %v117
  %348 = vmatprep.subr.mxu0 0.0
  %349 = vmatpush1.msra.mxu0 %v116
  %350 = vmatprep.subr.mxu0 0.0
  %351 = vmatpush1.msra.mxu0 %v115
  %352 = vmatprep.subr.mxu0 0.0
  %353 = vmatpush1.msra.mxu0 %v114
  %354 = vmatprep.subr.mxu0 0.0
  %355 = vmatpush1.msra.mxu0 %v113
  %356 = vmatprep.subr.mxu0 0.0
  %357 = vmatpush1.msra.mxu0 %v112
  %358 = vmatprep.subr.mxu0 0.0
  %359 = vmatpush1.msra.mxu0 %v111
  %360 = vmatprep.subr.mxu0 0.0
  %361 = vmatpush2.msra.mxu0 %v142
  %362 = vmatprep.subr.mxu0 0.0
  %363 = vmatpush2.msra.mxu0 %v141
  %364 = vmatprep.subr.mxu0 0.0
  %365 = vmatpush2.msra.mxu0 %v140
  %366 = vmatprep.subr.mxu0 0.0
  %367 = vmatpush2.msra.mxu0 %v139
  %368 = vmatprep.subr.mxu0 0.0
  %369 = vmatpush2.msra.mxu0 %v138
  %370 = vmatprep.subr.mxu0 0.0
  %371 = vmatpush2.msra.mxu0 %v137
  %372 = vmatprep.subr.mxu0 0.0
  %373 = vmatpush2.msra.mxu0 %v136
  %374 = vmatprep.subr.mxu0 0.0
  %375 = vmatpush2.msra.mxu0 %v135
  %376 = vmatprep.subr.mxu0 0.0
  %377 = vmatpush2.msra.mxu0 %v134
  %378 = vmatprep.subr.mxu0 0.0
  %379 = vmatpush2.msra.mxu0 %v133
  %380 = vmatprep.subr.mxu0 0.0
  %381 = vmatpush2.msra.mxu0 %v132
  %382 = vmatprep.subr.mxu0 0.0
  %383 = vmatpush2.msra.mxu0 %v131
  %384 = vmatprep.subr.mxu0 0.0
  %385 = vmatpush2.msra.mxu0 %v130
  %386 = vmatprep.subr.mxu0 0.0
  %387 = vmatpush2.msra.mxu0 %v129
  %388 = vmatprep.subr.mxu0 0.0
  %389 = vmatpush2.msra.mxu0 %v128
  %390 = vmatprep.subr.mxu0 0.0
  %391 = vmatpush2.msra.mxu0 %v127
  %392 = vmatprep.mubr.f32.mxu0 %v17
  %393 = vmatmul.mubr.f32.gmra.mxu0 %v16
  %v394 = vpop.f32.mrf.mxu0
  %v395 = vadd.f32 %v265, %v394
  %v396 = vpop.f32.mrf.mxu0
  %397 = vmatprep.mubr.f32.mxu0 %v22
  %398 = vmatmul.mubr.f32.gmra.mxu0 %v21
  %v399 = vpop.f32.mrf.mxu0
  %v400 = vadd.f32 %v270, %v399
  %v401 = vpop.f32.mrf.mxu0
  %402 = vmatprep.mubr.f32.mxu0 %v27
  %403 = vmatmul.mubr.f32.gmra.mxu0 %v26
  %v404 = vpop.f32.mrf.mxu0
  %v405 = vadd.f32 %v275, %v404
  %v406 = vpop.f32.mrf.mxu0
  %407 = vmatprep.mubr.f32.mxu0 %v32
  %408 = vmatmul.mubr.f32.gmra.mxu0 %v31
  %v409 = vpop.f32.mrf.mxu0
  %v410 = vadd.f32 %v280, %v409
  %v411 = vpop.f32.mrf.mxu0
  %412 = vmatprep.mubr.f32.mxu0 %v37
  %413 = vmatmul.mubr.f32.gmra.mxu0 %v36
  %v414 = vpop.f32.mrf.mxu0
  %v415 = vadd.f32 %v285, %v414
  %v416 = vpop.f32.mrf.mxu0
  %417 = vmatprep.mubr.f32.mxu0 %v42
  %418 = vmatmul.mubr.f32.gmra.mxu0 %v41
  %v419 = vpop.f32.mrf.mxu0
  %v420 = vadd.f32 %v290, %v419
  %v421 = vpop.f32.mrf.mxu0
  %422 = vmatprep.mubr.f32.mxu0 %v47
  %423 = vmatmul.mubr.f32.gmra.mxu0 %v46
  %v424 = vpop.f32.mrf.mxu0
  %v425 = vadd.f32 %v295, %v424
  %v426 = vpop.f32.mrf.mxu0
  %427 = vmatprep.mubr.f32.mxu0 %v52
  %428 = vmatmul.mubr.f32.gmra.mxu0 %v51
  %v429 = vpop.f32.mrf.mxu0
  %v430 = vadd.f32 %v300, %v429
  %v431 = vpop.f32.mrf.mxu0
  %432 = vmatprep.mubr.f32.mxu0 %v57
  %433 = vmatmul.mubr.f32.gmra.mxu0 %v56
  %v434 = vpop.f32.mrf.mxu0
  %v435 = vadd.f32 %v305, %v434
  %v436 = vpop.f32.mrf.mxu0
  %437 = vmatprep.mubr.f32.mxu0 %v62
  %438 = vmatmul.mubr.f32.gmra.mxu0 %v61
  %v439 = vpop.f32.mrf.mxu0
  %v440 = vadd.f32 %v310, %v439
  %v441 = vpop.f32.mrf.mxu0
  %442 = vmatprep.mubr.f32.mxu0 %v67
  %443 = vmatmul.mubr.f32.gmra.mxu0 %v66
  %v444 = vpop.f32.mrf.mxu0
  %v445 = vadd.f32 %v315, %v444
  %v446 = vpop.f32.mrf.mxu0
  %447 = vmatprep.mubr.f32.mxu0 %v72
  %448 = vmatmul.mubr.f32.gmra.mxu0 %v71
  %v449 = vpop.f32.mrf.mxu0
  %v450 = vadd.f32 %v320, %v449
  %v451 = vpop.f32.mrf.mxu0
  %452 = vmatprep.mubr.f32.mxu0 %v77
  %453 = vmatmul.mubr.f32.gmra.mxu0 %v76
  %v454 = vpop.f32.mrf.mxu0
  %v455 = vadd.f32 %v325, %v454
  %v456 = vpop.f32.mrf.mxu0
  %457 = vdwg.mxu0
  %458 = vmatprep.subr.mxu0 0.0
  %459 = vmatpush1.msra.mxu0 0.0
  %460 = vmatprep.subr.mxu0 0.0
  %461 = vmatpush1.msra.mxu0 0.0
  %462 = vmatprep.subr.mxu0 0.0
  %463 = vmatpush1.msra.mxu0 0.0
  %464 = vmatprep.subr.mxu0 0.0
  %465 = vmatpush1.msra.mxu0 0.0
  %466 = vmatprep.subr.mxu0 0.0
  %467 = vmatpush1.msra.mxu0 0.0
  %468 = vmatprep.subr.mxu0 0.0
  %469 = vmatpush1.msra.mxu0 0.0
  %470 = vmatprep.subr.mxu0 0.0
  %471 = vmatpush1.msra.mxu0 0.0
  %472 = vmatprep.subr.mxu0 0.0
  %473 = vmatpush1.msra.mxu0 0.0
  %474 = vmatprep.subr.mxu0 0.0
  %475 = vmatpush1.msra.mxu0 %v150
  %476 = vmatprep.subr.mxu0 0.0
  %477 = vmatpush1.msra.mxu0 %v149
  %478 = vmatprep.subr.mxu0 0.0
  %479 = vmatpush1.msra.mxu0 %v148
  %480 = vmatprep.subr.mxu0 0.0
  %481 = vmatpush1.msra.mxu0 %v147
  %482 = vmatprep.subr.mxu0 0.0
  %483 = vmatpush1.msra.mxu0 %v146
  %484 = vmatprep.subr.mxu0 0.0
  %485 = vmatpush1.msra.mxu0 %v145
  %486 = vmatprep.subr.mxu0 0.0
  %487 = vmatpush1.msra.mxu0 %v144
  %488 = vmatprep.subr.mxu0 0.0
  %489 = vmatpush1.msra.mxu0 %v143
  %490 = vmatprep.subr.mxu0 0.0
  %491 = vmatpush2.msra.mxu0 0.0
  %492 = vmatprep.subr.mxu0 0.0
  %493 = vmatpush2.msra.mxu0 0.0
  %494 = vmatprep.subr.mxu0 0.0
  %495 = vmatpush2.msra.mxu0 0.0
  %496 = vmatprep.subr.mxu0 0.0
  %497 = vmatpush2.msra.mxu0 0.0
  %498 = vmatprep.subr.mxu0 0.0
  %499 = vmatpush2.msra.mxu0 0.0
  %500 = vmatprep.subr.mxu0 0.0
  %501 = vmatpush2.msra.mxu0 0.0
  %502 = vmatprep.subr.mxu0 0.0
  %503 = vmatpush2.msra.mxu0 0.0
  %504 = vmatprep.subr.mxu0 0.0
  %505 = vmatpush2.msra.mxu0 0.0
  %506 = vmatprep.subr.mxu0 0.0
  %507 = vmatpush2.msra.mxu0 0.0
  %508 = vmatprep.subr.mxu0 0.0
  %509 = vmatpush2.msra.mxu0 0.0
  %510 = vmatprep.subr.mxu0 0.0
  %511 = vmatpush2.msra.mxu0 0.0
  %512 = vmatprep.subr.mxu0 0.0
  %513 = vmatpush2.msra.mxu0 0.0
  %514 = vmatprep.subr.mxu0 0.0
  %515 = vmatpush2.msra.mxu0 0.0
  %516 = vmatprep.subr.mxu0 0.0
  %517 = vmatpush2.msra.mxu0 0.0
  %518 = vmatprep.subr.mxu0 0.0
  %519 = vmatpush2.msra.mxu0 0.0
  %520 = vmatprep.subr.mxu0 0.0
  %521 = vmatpush2.msra.mxu0 0.0
  %522 = vmatprep.mubr.f32.mxu0 0.0
  %523 = vmatmul.mubr.f32.gmra.mxu0 %v160
  %v524 = vpop.f32.mrf.mxu0
  %v525 = vadd.f32 %v395, %v524
  %v526 = vpop.f32.mrf.mxu0
  %527 = vmatprep.mubr.f32.mxu0 0.0
  %528 = vmatmul.mubr.f32.gmra.mxu0 %v163
  %v529 = vpop.f32.mrf.mxu0
  %v530 = vadd.f32 %v400, %v529
  %v531 = vpop.f32.mrf.mxu0
  %532 = vmatprep.mubr.f32.mxu0 0.0
  %533 = vmatmul.mubr.f32.gmra.mxu0 %v166
  %v534 = vpop.f32.mrf.mxu0
  %v535 = vadd.f32 %v405, %v534
  %v536 = vpop.f32.mrf.mxu0
  %537 = vmatprep.mubr.f32.mxu0 0.0
  %538 = vmatmul.mubr.f32.gmra.mxu0 %v169
  %v539 = vpop.f32.mrf.mxu0
  %v540 = vadd.f32 %v410, %v539
  %v541 = vpop.f32.mrf.mxu0
  %542 = vmatprep.mubr.f32.mxu0 0.0
  %543 = vmatmul.mubr.f32.gmra.mxu0 %v172
  %v544 = vpop.f32.mrf.mxu0
  %v545 = vadd.f32 %v415, %v544
  %v546 = vpop.f32.mrf.mxu0
  %547 = vmatprep.mubr.f32.mxu0 0.0
  %548 = vmatmul.mubr.f32.gmra.mxu0 %v175
  %v549 = vpop.f32.mrf.mxu0
  %v550 = vadd.f32 %v420, %v549
  %v551 = vpop.f32.mrf.mxu0
  %552 = vmatprep.mubr.f32.mxu0 0.0
  %553 = vmatmul.mubr.f32.gmra.mxu0 %v178
  %v554 = vpop.f32.mrf.mxu0
  %v555 = vadd.f32 %v425, %v554
  %v556 = vpop.f32.mrf.mxu0
  %557 = vmatprep.mubr.f32.mxu0 0.0
  %558 = vmatmul.mubr.f32.gmra.mxu0 %v181
  %v559 = vpop.f32.mrf.mxu0
  %v560 = vadd.f32 %v430, %v559
  %v561 = vpop.f32.mrf.mxu0
  %562 = vmatprep.mubr.f32.mxu0 0.0
  %563 = vmatmul.mubr.f32.gmra.mxu0 %v184
  %v564 = vpop.f32.mrf.mxu0
  %v565 = vadd.f32 %v435, %v564
  %v566 = vpop.f32.mrf.mxu0
  %567 = vmatprep.mubr.f32.mxu0 0.0
  %568 = vmatmul.mubr.f32.gmra.mxu0 %v187
  %v569 = vpop.f32.mrf.mxu0
  %v570 = vadd.f32 %v440, %v569
  %v571 = vpop.f32.mrf.mxu0
  %572 = vmatprep.mubr.f32.mxu0 0.0
  %573 = vmatmul.mubr.f32.gmra.mxu0 %v190
  %v574 = vpop.f32.mrf.mxu0
  %v575 = vadd.f32 %v445, %v574
  %v576 = vpop.f32.mrf.mxu0
  %577 = vmatprep.mubr.f32.mxu0 0.0
  %578 = vmatmul.mubr.f32.gmra.mxu0 %v193
  %v579 = vpop.f32.mrf.mxu0
  %v580 = vadd.f32 %v450, %v579
  %v581 = vpop.f32.mrf.mxu0
  %582 = vmatprep.mubr.f32.mxu0 0.0
  %583 = vmatmul.mubr.f32.gmra.mxu0 %v196
  %v584 = vpop.f32.mrf.mxu0
  %v585 = vadd.f32 %v455, %v584
  %v586 = vpop.f32.mrf.mxu0
  %587 = vdwg.mxu0
  %v588 = vmax.f32 %v525, 0.0
  %v589 = vmax.f32 %v530, 0.0
  %v590 = vmax.f32 %v535, 0.0
  %v591 = vmax.f32 %v540, 0.0
  %v592 = vmax.f32 %v545, 0.0
  %v593 = vmax.f32 %v550, 0.0
  %v594 = vmax.f32 %v555, 0.0
  %v595 = vmax.f32 %v560, 0.0
  %v596 = vmax.f32 %v565, 0.0
  %v597 = vmax.f32 %v570, 0.0
  %v598 = vmax.f32 %v575, 0.0
  %v599 = vmax.f32 %v580, 0.0
  %v600 = vmax.f32 %v585, 0.0
  %601 = vst.msk [vmem:[%s3] sm:$0xff] %vm158, %v588
  %602 = vst.msk [vmem:[%s3 + $0x8] sm:$0xff] %vm158, %v589
  %603 = vst.msk [vmem:[%s3 + $0x10] sm:$0xff] %vm158, %v590
  %604 = vst.msk [vmem:[%s3 + $0x18] sm:$0xff] %vm158, %v591
  %605 = vst.msk [vmem:[%s3 + $0x20] sm:$0xff] %vm158, %v592
  %606 = vst.msk [vmem:[%s3 + $0x28] sm:$0xff] %vm158, %v593
  %607 = vst.msk [vmem:[%s3 + $0x30] sm:$0xff] %vm158, %v594
  %608 = vst.msk [vmem:[%s3 + $0x38] sm:$0xff] %vm158, %v595
  %609 = vst.msk [vmem:[%s3 + $0x40] sm:$0xff] %vm158, %v596
  %610 = vst.msk [vmem:[%s3 + $0x48] sm:$0xff] %vm158, %v597
  %611 = vst.msk [vmem:[%s3 + $0x50] sm:$0xff] %vm158, %v598
  %612 = vst.msk [vmem:[%s3 + $0x58] sm:$0xff] %vm158, %v599
  %vm613 = vcmask 517120
  %614 = vst.msk [vmem:[%s3 + $0x60] sm:$0x3] %vm613, %v600
  // Predicated region
  $region14: #{forward.6} parent=0 // pred_check
    _
  $region15: #{forward.6} parent=0 // pred_check_branch
    %616 = sbr.rel (0) target = $region17
  $region16: #{forward.6} parent=0 // pred_region
    _
  $region17: #{forward.6} parent=0 // pred_fallthru
    _
  // Predicated region
  $region18: #{forward.6} parent=0 // pred_check
    _
  $region19: #{forward.6} parent=0 // pred_check_branch
    %618 = sbr.rel (0) target = $region21
  $region20: #{forward.6} parent=0 // pred_region
    _
  $region21: #{forward.6} parent=0 // pred_fallthru
    _

// kernel: forward.7
$region0: #{forward.7}
  #allocation0 [shape = 'u32[]', space=smem, size = 0x4, offset = 0x4, fixed_abs, tag = 'smem constant byte address 0x4 - core index']
  #allocation1 [shape = 'u32[144,128]{1,0:T(1,128)}', space=vmem, size = 0x12000, scoped, tag = 'internal scratch']
  #allocation2 [shape = 'f32[2,1024]{1,0:T(2,128)}', space=vmem, size = 0x2000, scoped, tag = 'scratch operand']
  #allocation3 [shape = 'f32[1,1]{1,0:T(1,128)S(1)}', space=vmem, size = 0x200, scoped, tag = 'scoped memory for forward.7']
  %s0 = inlined_call_operand.vmem [shape: f32[2,3200], index: 0, kind: input, shape index: {}]
  %s1 = inlined_call_operand.vmem [shape: bf16[3200,1024], index: 1, kind: input, shape index: {}]
  %s2 = inlined_call_operand.vmem [shape: f32[1,1024], index: 2, kind: input, shape index: {}]
  %s3 = inlined_call_operand.vmem [shape: f32[512,1], index: 3, kind: input, shape index: {}]
  %s4 = inlined_call_operand.<no memory space> [shape: f32[1,1], index: 4, kind: input, shape index: {}]
  %s5 = inlined_call_operand.vmem [shape: f32[512,6], index: 5, kind: input, shape index: {}]
  %s6 = inlined_call_operand.vmem [shape: f32[1,6], index: 6, kind: input, shape index: {}]
  %s7 = inlined_call_operand.hbm [shape: f32[2,6], index: 7, kind: output, shape index: {}]
  %s8 = sld [smem:[#allocation0]]
  $region69: #{forward.7} parent=0
    _
  %s10 = ssub.s32 1, %s8
  %s11 = scalar_select 0, %s10, %s8
  %v12 = vstv %s4
  %13 = vst [vmem:[#allocation3] sm:$0x1] %v12
  $region1: #{forward.7} parent=0
    #allocation4 [shape = 'u8[1024]{0}', space=vmem, size = 0x400, scoped, tag = 'output window, operand 0, single buffered']
    #allocation5 [shape = 's32[2]{0}', space=sflag, size = 0x8, scoped, tag = 'scoped memory for forward.7']
    %14 = vsyncpa [#allocation5], 0
    loop: start=0, step=1, limit=7
    $region2: #{forward.7} parent=1 // loop_pre_header
      _
    $region3: #{forward.7} parent=1 // loop_header
      %s16 = sphi 0, %s20
      %p17 = scmp.ge.s32.totalorder %s16, 7
      %s26 = sphi 0, %s28
      %s29 = sphi 0, %s26
      %s30 = sphi 0, %s29
      %s46 = sphi 0, %s30
      %s52 = sphi 0, %s54
      %s55 = sphi 0, %s52
      %s56 = sphi 0, %s55
      %s72 = sphi 0, %s56
      %s76 = sphi 0, %s76
      %s78 = sphi 0, %s76
      %s79 = sphi 0, %s78
      %s93 = sphi 0, %s79
      %s97 = sphi 0, %s97
      %s99 = sphi 0, %s97
      %s100 = sphi 0, %s99
      %s114 = sphi 0, %s100
      %s118 = sphi 0, %s118
      %s120 = sphi 0, %s118
      %s121 = sphi 0, %s120
      %s135 = sphi 0, %s121
      %s139 = sphi 0, %s139
      %s141 = sphi 0, %s139
      %s142 = sphi 0, %s141
      %s156 = sphi 0, %s142
      %s160 = sphi 0, %s160
      %s162 = sphi 0, %s160
      %s163 = sphi 0, %s162
      %s177 = sphi 0, %s163
      %s181 = sphi 0, %s181
      %s183 = sphi 0, %s181
      %s184 = sphi 0, %s183
      %s198 = sphi 0, %s184
    $region4: #{forward.7} parent=1 // loop_header_branch
      %19 = sbr.rel (%p17) target = $region8
    $region5: #{forward.7} parent=1 // loop_body
      %s21 = ssub.s32 %s16, 1
      %s22 = ssub.s32 %s16, 2
      %s23 = sadd.s32 %s16, 1
      %s24 = ssub.s32 %s16, %s23
      %p25 = scmp.eq.s32.totalorder %s24, 0
      %s27 = sadd.s32 %s26, 1
      %s28 = scalar_select %p25, %s26, %s27
      %p31 = pneg %p25
      %p32 = scmp.eq.s32.totalorder %s16, 4
      %p33 = por %p31, %p32
      %p34 = scmp.ne.s32.totalorder %s26, %s29
      %p35 = scmp.eq.s32.totalorder %s16, 0
      %p36 = por %p34, %p35
      %p37 = scmp.ne.s32.totalorder %s26, %s29
      %p38 = scmp.eq.s32.totalorder %s21, 4
      %p39 = por %p37, %p38
      %p40 = scmp.ne.s32.totalorder %s29, %s30
      %p41 = scmp.eq.s32.totalorder %s21, 0
      %p42 = por %p40, %p41
      %p43 = scmp.ne.s32.totalorder %s29, %s30
      %p44 = scmp.eq.s32.totalorder %s22, 4
      %p45 = por %p43, %p44
      %p47 = scmp.ne.s32.totalorder %s30, %s46
      %p48 = scmp.eq.s32.totalorder %s22, 0
      %p49 = por %p47, %p48
      %s50 = ssub.s32 %s16, %s23
      %p51 = scmp.eq.s32.totalorder %s50, 0
      %s53 = sadd.s32 %s52, 1
      %s54 = scalar_select %p51, %s52, %s53
      %p57 = pneg %p51
      %p58 = scmp.eq.s32.totalorder %s16, 4
      %p59 = por %p57, %p58
      %p60 = scmp.ne.s32.totalorder %s52, %s55
      %p61 = scmp.eq.s32.totalorder %s16, 0
      %p62 = por %p60, %p61
      %p63 = scmp.ne.s32.totalorder %s52, %s55
      %p64 = scmp.eq.s32.totalorder %s21, 4
      %p65 = por %p63, %p64
      %p66 = scmp.ne.s32.totalorder %s55, %s56
      %p67 = scmp.eq.s32.totalorder %s21, 0
      %p68 = por %p66, %p67
      %p69 = scmp.ne.s32.totalorder %s55, %s56
      %p70 = scmp.eq.s32.totalorder %s22, 4
      %p71 = por %p69, %p70
      %p73 = scmp.ne.s32.totalorder %s56, %s72
      %p74 = scmp.eq.s32.totalorder %s22, 0
      %p75 = por %p73, %p74
      %s77 = sadd.s32 %s76, 1
      %p80 = scmp.eq.s32.totalorder %s16, 4
      %p81 = scmp.ne.s32.totalorder %s76, %s78
      %p82 = scmp.eq.s32.totalorder %s16, 0
      %p83 = por %p81, %p82
      %p84 = scmp.ne.s32.totalorder %s76, %s78
      %p85 = scmp.eq.s32.totalorder %s21, 4
      %p86 = por %p84, %p85
      %p87 = scmp.ne.s32.totalorder %s78, %s79
      %p88 = scmp.eq.s32.totalorder %s21, 0
      %p89 = por %p87, %p88
      %p90 = scmp.ne.s32.totalorder %s78, %s79
      %p91 = scmp.eq.s32.totalorder %s22, 4
      %p92 = por %p90, %p91
      %p94 = scmp.ne.s32.totalorder %s79, %s93
      %p95 = scmp.eq.s32.totalorder %s22, 0
      %p96 = por %p94, %p95
      %s98 = sadd.s32 %s97, 1
      %p101 = scmp.eq.s32.totalorder %s16, 4
      %p102 = scmp.ne.s32.totalorder %s97, %s99
      %p103 = scmp.eq.s32.totalorder %s16, 0
      %p104 = por %p102, %p103
      %p105 = scmp.ne.s32.totalorder %s97, %s99
      %p106 = scmp.eq.s32.totalorder %s21, 4
      %p107 = por %p105, %p106
      %p108 = scmp.ne.s32.totalorder %s99, %s100
      %p109 = scmp.eq.s32.totalorder %s21, 0
      %p110 = por %p108, %p109
      %p111 = scmp.ne.s32.totalorder %s99, %s100
      %p112 = scmp.eq.s32.totalorder %s22, 4
      %p113 = por %p111, %p112
      %p115 = scmp.ne.s32.totalorder %s100, %s114
      %p116 = scmp.eq.s32.totalorder %s22, 0
      %p117 = por %p115, %p116
      %s119 = sadd.s32 %s118, 1
      %p122 = scmp.eq.s32.totalorder %s16, 4
      %p123 = scmp.ne.s32.totalorder %s118, %s120
      %p124 = scmp.eq.s32.totalorder %s16, 0
      %p125 = por %p123, %p124
      %p126 = scmp.ne.s32.totalorder %s118, %s120
      %p127 = scmp.eq.s32.totalorder %s21, 4
      %p128 = por %p126, %p127
      %p129 = scmp.ne.s32.totalorder %s120, %s121
      %p130 = scmp.eq.s32.totalorder %s21, 0
      %p131 = por %p129, %p130
      %p132 = scmp.ne.s32.totalorder %s120, %s121
      %p133 = scmp.eq.s32.totalorder %s22, 4
      %p134 = por %p132, %p133
      %p136 = scmp.ne.s32.totalorder %s121, %s135
      %p137 = scmp.eq.s32.totalorder %s22, 0
      %p138 = por %p136, %p137
      %s140 = sadd.s32 %s139, 1
      %p143 = scmp.eq.s32.totalorder %s16, 4
      %p144 = scmp.ne.s32.totalorder %s139, %s141
      %p145 = scmp.eq.s32.totalorder %s16, 0
      %p146 = por %p144, %p145
      %p147 = scmp.ne.s32.totalorder %s139, %s141
      %p148 = scmp.eq.s32.totalorder %s21, 4
      %p149 = por %p147, %p148
      %p150 = scmp.ne.s32.totalorder %s141, %s142
      %p151 = scmp.eq.s32.totalorder %s21, 0
      %p152 = por %p150, %p151
      %p153 = scmp.ne.s32.totalorder %s141, %s142
      %p154 = scmp.eq.s32.totalorder %s22, 4
      %p155 = por %p153, %p154
      %p157 = scmp.ne.s32.totalorder %s142, %s156
      %p158 = scmp.eq.s32.totalorder %s22, 0
      %p159 = por %p157, %p158
      %s161 = sadd.s32 %s160, 1
      %p164 = scmp.eq.s32.totalorder %s16, 4
      %p165 = scmp.ne.s32.totalorder %s160, %s162
      %p166 = scmp.eq.s32.totalorder %s16, 0
      %p167 = por %p165, %p166
      %p168 = scmp.ne.s32.totalorder %s160, %s162
      %p169 = scmp.eq.s32.totalorder %s21, 4
      %p170 = por %p168, %p169
      %p171 = scmp.ne.s32.totalorder %s162, %s163
      %p172 = scmp.eq.s32.totalorder %s21, 0
      %p173 = por %p171, %p172
      %p174 = scmp.ne.s32.totalorder %s162, %s163
      %p175 = scmp.eq.s32.totalorder %s22, 4
      %p176 = por %p174, %p175
      %p178 = scmp.ne.s32.totalorder %s163, %s177
      %p179 = scmp.eq.s32.totalorder %s22, 0
      %p180 = por %p178, %p179
      %s182 = sadd.s32 %s181, 1
      %p185 = scmp.eq.s32.totalorder %s16, 4
      %p186 = scmp.ne.s32.totalorder %s181, %s183
      %p187 = scmp.eq.s32.totalorder %s16, 0
      %p188 = por %p186, %p187
      %p189 = scmp.ne.s32.totalorder %s181, %s183
      %p190 = scmp.eq.s32.totalorder %s21, 4
      %p191 = por %p189, %p190
      %p192 = scmp.ne.s32.totalorder %s183, %s184
      %p193 = scmp.eq.s32.totalorder %s21, 0
      %p194 = por %p192, %p193
      %p195 = scmp.ne.s32.totalorder %s183, %s184
      %p196 = scmp.eq.s32.totalorder %s22, 4
      %p197 = por %p195, %p196
      %p199 = scmp.ne.s32.totalorder %s184, %s198
      %p200 = scmp.eq.s32.totalorder %s22, 0
      %p201 = por %p199, %p200
      %p202 = scmp.le.s32.totalorder 1, %s16
      %p203 = scmp.lt.s32.totalorder %s16, 6
      %p204 = pnand %p202, %p203
      %p205 = pneg %p204
      // Predicated region
      $region9: #{forward.7} parent=5 // pred_check
        _
      $region10: #{forward.7} parent=5 // pred_check_branch
        %207 = sbr.rel (%p204) target = $region12
      $region11: #{forward.7} parent=5 // pred_region
        %s208 = ssub.s32 %s16, 1
        // Predicated region
        $region13: #{forward.7} parent=11 // pred_check
          %p209 = pneg %p89
        $region14: #{forward.7} parent=11 // pred_check_branch
          %211 = sbr.rel (%p209) target = $region16
        $region15: #{forward.7} parent=11 // pred_region
          _
        $region16: #{forward.7} parent=11 // pred_fallthru
          _
        // Predicated region
        $region17: #{forward.7} parent=11 // pred_check
          %p212 = pneg %p110
        $region18: #{forward.7} parent=11 // pred_check_branch
          %214 = sbr.rel (%p212) target = $region20
        $region19: #{forward.7} parent=11 // pred_region
          _
        $region20: #{forward.7} parent=11 // pred_fallthru
          _
        // Predicated region
        $region21: #{forward.7} parent=11 // pred_check
          %p215 = pneg %p131
        $region22: #{forward.7} parent=11 // pred_check_branch
          %217 = sbr.rel (%p215) target = $region24
        $region23: #{forward.7} parent=11 // pred_region
          _
        $region24: #{forward.7} parent=11 // pred_fallthru
          _
        // Predicated region
        $region25: #{forward.7} parent=11 // pred_check
          %p218 = pneg %p152
        $region26: #{forward.7} parent=11 // pred_check_branch
          %220 = sbr.rel (%p218) target = $region28
        $region27: #{forward.7} parent=11 // pred_region
          _
        $region28: #{forward.7} parent=11 // pred_fallthru
          _
        // Predicated region
        $region29: #{forward.7} parent=11 // pred_check
          %p221 = pneg %p173
        $region30: #{forward.7} parent=11 // pred_check_branch
          %223 = sbr.rel (%p221) target = $region32
        $region31: #{forward.7} parent=11 // pred_region
          _
        $region32: #{forward.7} parent=11 // pred_fallthru
          _
      $region12: #{forward.7} parent=5 // pred_fallthru
        _
      %p224 = scmp.lt.s32.totalorder %s16, 5
      // Predicated region
      $region33: #{forward.7} parent=5 // pred_check
        %p225 = pneg %p224
      $region34: #{forward.7} parent=5 // pred_check_branch
        %227 = sbr.rel (%p225) target = $region36
      $region35: #{forward.7} parent=5 // pred_region
        // Predicated region
        $region37: #{forward.7} parent=35 // pred_check
          %p228 = pneg %p36
        $region38: #{forward.7} parent=35 // pred_check_branch
          %230 = sbr.rel (%p228) target = $region40
        $region39: #{forward.7} parent=35 // pred_region
          %s231 = smul.u32 5, %s16
          %p232 = scmp.lt.s32.totalorder %s231, 24
          %s233 = scalar_select %p232, %s231, 24
          %s234 = smul.addr %s233, 2
          %s235 = scalar_lea.vmem %s0, %s234
          %s236 = smul.u32 5, %s16
        $region40: #{forward.7} parent=35 // pred_fallthru
          _
        // Predicated region
        $region41: #{forward.7} parent=35 // pred_check
          %p237 = pneg %p62
        $region42: #{forward.7} parent=35 // pred_check_branch
          %239 = sbr.rel (%p237) target = $region44
        $region43: #{forward.7} parent=35 // pred_region
          %s240 = smul.u32 80, %s16
          %p241 = scmp.lt.s32.totalorder %s240, 399
          %s242 = scalar_select %p241, %s240, 399
          %s243 = smul.addr %s242, 8
          %s244 = smul.addr %s243, 4
          %s245 = scalar_lea.vmem %s1, %s244
          %s246 = smul.u32 80, %s16
        $region44: #{forward.7} parent=35 // pred_fallthru
          _
      $region36: #{forward.7} parent=5 // pred_fallthru
        _
      %p247 = scmp.le.s32.totalorder 1, %s16
      %p248 = scmp.lt.s32.totalorder %s16, 6
      %p249 = pnand %p247, %p248
      %p250 = pneg %p249
      // Predicated region
      $region45: #{forward.7} parent=5 // pred_check
        _
      $region46: #{forward.7} parent=5 // pred_check_branch
        %252 = sbr.rel (%p249) target = $region48
      $region47: #{forward.7} parent=5 // pred_region
        %s253 = ssub.s32 %s16, 1
        %s254 = smul.u32 5, %s21
        %p255 = scmp.lt.s32.totalorder %s254, 24
        %s256 = scalar_select %p255, %s254, 24
        %s257 = smul.addr %s256, 2
        %s258 = scalar_lea.vmem %s0, %s257
        %p259 = pneg %p42
        %p260 = pneg %p39
        %s261 = smul.u32 80, %s21
        %p262 = scmp.lt.s32.totalorder %s261, 399
        %s263 = scalar_select %p262, %s261, 399
        %s264 = smul.addr %s263, 8
        %s265 = smul.addr %s264, 4
        %s266 = scalar_lea.vmem %s1, %s265
        %p267 = pneg %p68
        %p268 = pneg %p65
        %p269 = pneg %p89
        %p270 = pneg %p86
        %p271 = pneg %p110
        %p272 = pneg %p107
        %p273 = pneg %p131
        %p274 = pneg %p128
        %p275 = pneg %p152
        %p276 = pneg %p149
        %p277 = pneg %p173
        %p278 = pneg %p170
        %p279 = pneg %p194
        %p280 = pneg %p191
        %s281 = smul.u32 5, %s21
        %p282 = scmp.lt.s32.totalorder %s281, 24
        %s283 = scalar_select %p282, %s281, 24
        %s284 = smul.addr %s283, 2
        %s285 = scalar_lea.vmem %s0, %s284
        %s286 = smul.u32 5, %s21
        %s287 = smul.u32 80, %s21
        %p288 = scmp.lt.s32.totalorder %s287, 399
        %s289 = scalar_select %p288, %s287, 399
        %s290 = smul.addr %s289, 8
        %s291 = smul.addr %s290, 4
        %s292 = scalar_lea.vmem %s1, %s291
        %s293 = smul.u32 80, %s21
        %p295 = scmp.eq.s32.totalorder %s21, 0
        // Predicated region
        $region49: #{forward.7} parent=47 // pred_check
          %p296 = pneg %p295
        $region50: #{forward.7} parent=47 // pred_check_branch
          %298 = sbr.rel (%p296) target = $region52
        $region51: #{forward.7} parent=47 // pred_region
          %299 = vst [vmem:[#allocation2] sm:$0xff] 0.0
          %300 = vst [vmem:[#allocation2 + $0x8] sm:$0xff] 0.0
        $region52: #{forward.7} parent=47 // pred_fallthru
          _
        %v301 = vld [vmem:[#allocation2] sm:$0xff]
        %v302 = vld [vmem:[#allocation2 + $0x8] sm:$0xff]
        %v303 = vld [vmem:[%s285] sm:$0xff]
        %v304 = vld [vmem:[%s285 + $0x8] sm:$0x3]
        %v307 = vcombine.high %v303, %v303
        %v309 = vunpack.c.l.s4 1983009808
        %v310 = vunpack.c.0.s8 %v309
        %v311 = vlaneseq
        %v312 = vshrl.u32 %v311, 7
        %v313 = vsub.s32 %v310, %v312
        %v314 = vrot.slane %v303, %v313
        %v316 = vunpack.c.l.s4 1983009808
        %v317 = vunpack.c.0.s8 %v316
        %v318 = vlaneseq
        %v319 = vshrl.u32 %v318, 7
        %v320 = vsub.s32 %v317, %v319
        %v321 = vrot.slane %v307, %v320
        %v322 = vcombine.high %v314, %v314
        %v323 = vcombine.high %v321, %v321
        %v325 = vunpack.c.l.s4 1983009808
        %v326 = vunpack.c.0.s8 %v325
        %v327 = vlaneseq
        %v328 = vshrl.u32 %v327, 7
        %v329 = vsub.s32 %v326, %v328
        %v330 = vrot.slane %v304, %v329
        %v336 = vpack.c.bf16 %v314, %v314
        %v337 = vpack.c.bf16 %v322, %v322
        %v338 = vpack.c.bf16 %v321, %v321
        %v339 = vpack.c.bf16 %v323, %v323
        %v340 = vpack.c.bf16 %v330, %v330
        %v341 = vld [vmem:[%s292] sm:$0xff]
        %v342 = vld [vmem:[%s292 + $0x8] sm:$0xff]
        %v343 = vld [vmem:[%s292 + $0x10] sm:$0xff]
        %v344 = vld [vmem:[%s292 + $0x18] sm:$0xff]
        %v345 = vld [vmem:[%s292 + $0x20] sm:$0xff]
        %v346 = vld [vmem:[%s292 + $0x28] sm:$0xff]
        %v347 = vld [vmem:[%s292 + $0x30] sm:$0xff]
        %v348 = vld [vmem:[%s292 + $0x38] sm:$0xff]
        %v349 = vld [vmem:[%s292 + $0x40] sm:$0xff]
        %v350 = vld [vmem:[%s292 + $0x48] sm:$0xff]
        %v351 = vld [vmem:[%s292 + $0x50] sm:$0xff]
        %v352 = vld [vmem:[%s292 + $0x58] sm:$0xff]
        %v353 = vld [vmem:[%s292 + $0x60] sm:$0xff]
        %v354 = vld [vmem:[%s292 + $0x68] sm:$0xff]
        %v355 = vld [vmem:[%s292 + $0x70] sm:$0xff]
        %v356 = vld [vmem:[%s292 + $0x78] sm:$0xff]
        %v357 = vld [vmem:[%s292 + $0x80] sm:$0xff]
        %v358 = vld [vmem:[%s292 + $0x88] sm:$0xff]
        %v359 = vld [vmem:[%s292 + $0x90] sm:$0xff]
        %v360 = vld [vmem:[%s292 + $0x98] sm:$0xff]
        %v361 = vld [vmem:[%s292 + $0xa0] sm:$0xff]
        %v362 = vld [vmem:[%s292 + $0xa8] sm:$0xff]
        %v363 = vld [vmem:[%s292 + $0xb0] sm:$0xff]
        %v364 = vld [vmem:[%s292 + $0xb8] sm:$0xff]
        %v365 = vld [vmem:[%s292 + $0xc0] sm:$0xff]
        %v366 = vld [vmem:[%s292 + $0xc8] sm:$0xff]
        %v367 = vld [vmem:[%s292 + $0xd0] sm:$0xff]
        %v368 = vld [vmem:[%s292 + $0xd8] sm:$0xff]
        %v369 = vld [vmem:[%s292 + $0xe0] sm:$0xff]
        %v370 = vld [vmem:[%s292 + $0xe8] sm:$0xff]
        %v371 = vld [vmem:[%s292 + $0xf0] sm:$0xff]
        %v372 = vld [vmem:[%s292 + $0xf8] sm:$0xff]
        %v373 = vld [vmem:[%s292 + $0x100] sm:$0xff]
        %v374 = vld [vmem:[%s292 + $0x108] sm:$0xff]
        %v375 = vld [vmem:[%s292 + $0x110] sm:$0xff]
        %v376 = vld [vmem:[%s292 + $0x118] sm:$0xff]
        %v377 = vld [vmem:[%s292 + $0x120] sm:$0xff]
        %v378 = vld [vmem:[%s292 + $0x128] sm:$0xff]
        %v379 = vld [vmem:[%s292 + $0x130] sm:$0xff]
        %v380 = vld [vmem:[%s292 + $0x138] sm:$0xff]
        %v381 = vld [vmem:[%s292 + $0x140] sm:$0xff]
        %v382 = vld [vmem:[%s292 + $0x148] sm:$0xff]
        %v383 = vld [vmem:[%s292 + $0x150] sm:$0xff]
        %v384 = vld [vmem:[%s292 + $0x158] sm:$0xff]
        %v385 = vld [vmem:[%s292 + $0x160] sm:$0xff]
        %v386 = vld [vmem:[%s292 + $0x168] sm:$0xff]
        %v387 = vld [vmem:[%s292 + $0x170] sm:$0xff]
        %v388 = vld [vmem:[%s292 + $0x178] sm:$0xff]
        %v389 = vld [vmem:[%s292 + $0x180] sm:$0xff]
        %v390 = vld [vmem:[%s292 + $0x188] sm:$0xff]
        %v391 = vld [vmem:[%s292 + $0x190] sm:$0xff]
        %v392 = vld [vmem:[%s292 + $0x198] sm:$0xff]
        %v393 = vld [vmem:[%s292 + $0x1a0] sm:$0xff]
        %v394 = vld [vmem:[%s292 + $0x1a8] sm:$0xff]
        %v395 = vld [vmem:[%s292 + $0x1b0] sm:$0xff]
        %v396 = vld [vmem:[%s292 + $0x1b8] sm:$0xff]
        %v397 = vld [vmem:[%s292 + $0x1c0] sm:$0xff]
        %v398 = vld [vmem:[%s292 + $0x1c8] sm:$0xff]
        %v399 = vld [vmem:[%s292 + $0x1d0] sm:$0xff]
        %v400 = vld [vmem:[%s292 + $0x1d8] sm:$0xff]
        %v401 = vld [vmem:[%s292 + $0x1e0] sm:$0xff]
        %v402 = vld [vmem:[%s292 + $0x1e8] sm:$0xff]
        %v403 = vld [vmem:[%s292 + $0x1f0] sm:$0xff]
        %v404 = vld [vmem:[%s292 + $0x1f8] sm:$0xff]
        %v405 = vld [vmem:[%s292 + $0x200] sm:$0xff]
        %v406 = vld [vmem:[%s292 + $0x208] sm:$0xff]
        %v407 = vld [vmem:[%s292 + $0x210] sm:$0xff]
        %v408 = vld [vmem:[%s292 + $0x218] sm:$0xff]
        %v409 = vld [vmem:[%s292 + $0x220] sm:$0xff]
        %v410 = vld [vmem:[%s292 + $0x228] sm:$0xff]
        %v411 = vld [vmem:[%s292 + $0x230] sm:$0xff]
        %v412 = vld [vmem:[%s292 + $0x238] sm:$0xff]
        %v413 = vld [vmem:[%s292 + $0x240] sm:$0xff]
        %v414 = vld [vmem:[%s292 + $0x248] sm:$0xff]
        %v415 = vld [vmem:[%s292 + $0x250] sm:$0xff]
        %v416 = vld [vmem:[%s292 + $0x258] sm:$0xff]
        %v417 = vld [vmem:[%s292 + $0x260] sm:$0xff]
        %v418 = vld [vmem:[%s292 + $0x268] sm:$0xff]
        %v419 = vld [vmem:[%s292 + $0x270] sm:$0xff]
        %v420 = vld [vmem:[%s292 + $0x278] sm:$0xff]
        %v421 = vld [vmem:[%s292 + $0x280] sm:$0xff]
        %v422 = vld [vmem:[%s292 + $0x288] sm:$0xff]
        %v423 = vld [vmem:[%s292 + $0x290] sm:$0xff]
        %v424 = vld [vmem:[%s292 + $0x298] sm:$0xff]
        %v425 = vld [vmem:[%s292 + $0x2a0] sm:$0xff]
        %v426 = vld [vmem:[%s292 + $0x2a8] sm:$0xff]
        %v427 = vld [vmem:[%s292 + $0x2b0] sm:$0xff]
        %v428 = vld [vmem:[%s292 + $0x2b8] sm:$0xff]
        %v429 = vld [vmem:[%s292 + $0x2c0] sm:$0xff]
        %v430 = vld [vmem:[%s292 + $0x2c8] sm:$0xff]
        %v431 = vld [vmem:[%s292 + $0x2d0] sm:$0xff]
        %v432 = vld [vmem:[%s292 + $0x2d8] sm:$0xff]
        %v433 = vld [vmem:[%s292 + $0x2e0] sm:$0xff]
        %v434 = vld [vmem:[%s292 + $0x2e8] sm:$0xff]
        %v435 = vld [vmem:[%s292 + $0x2f0] sm:$0xff]
        %v436 = vld [vmem:[%s292 + $0x2f8] sm:$0xff]
        %v437 = vld [vmem:[%s292 + $0x300] sm:$0xff]
        %v438 = vld [vmem:[%s292 + $0x308] sm:$0xff]
        %v439 = vld [vmem:[%s292 + $0x310] sm:$0xff]
        %v440 = vld [vmem:[%s292 + $0x318] sm:$0xff]
        %v441 = vld [vmem:[%s292 + $0x320] sm:$0xff]
        %v442 = vld [vmem:[%s292 + $0x328] sm:$0xff]
        %v443 = vld [vmem:[%s292 + $0x330] sm:$0xff]
        %v444 = vld [vmem:[%s292 + $0x338] sm:$0xff]
        %v445 = vld [vmem:[%s292 + $0x340] sm:$0xff]
        %v446 = vld [vmem:[%s292 + $0x348] sm:$0xff]
        %v447 = vld [vmem:[%s292 + $0x350] sm:$0xff]
        %v448 = vld [vmem:[%s292 + $0x358] sm:$0xff]
        %v449 = vld [vmem:[%s292 + $0x360] sm:$0xff]
        %v450 = vld [vmem:[%s292 + $0x368] sm:$0xff]
        %v451 = vld [vmem:[%s292 + $0x370] sm:$0xff]
        %v452 = vld [vmem:[%s292 + $0x378] sm:$0xff]
        %v453 = vld [vmem:[%s292 + $0x380] sm:$0xff]
        %v454 = vld [vmem:[%s292 + $0x388] sm:$0xff]
        %v455 = vld [vmem:[%s292 + $0x390] sm:$0xff]
        %v456 = vld [vmem:[%s292 + $0x398] sm:$0xff]
        %v457 = vld [vmem:[%s292 + $0x3a0] sm:$0xff]
        %v458 = vld [vmem:[%s292 + $0x3a8] sm:$0xff]
        %v459 = vld [vmem:[%s292 + $0x3b0] sm:$0xff]
        %v460 = vld [vmem:[%s292 + $0x3b8] sm:$0xff]
        %v461 = vld [vmem:[%s292 + $0x3c0] sm:$0xff]
        %v462 = vld [vmem:[%s292 + $0x3c8] sm:$0xff]
        %v463 = vld [vmem:[%s292 + $0x3d0] sm:$0xff]
        %v464 = vld [vmem:[%s292 + $0x3d8] sm:$0xff]
        %v465 = vld [vmem:[%s292 + $0x3e0] sm:$0xff]
        %v466 = vld [vmem:[%s292 + $0x3e8] sm:$0xff]
        %v467 = vld [vmem:[%s292 + $0x3f0] sm:$0xff]
        %v468 = vld [vmem:[%s292 + $0x3f8] sm:$0xff]
        %v469 = vld [vmem:[%s292 + $0x400] sm:$0xff]
        %v470 = vld [vmem:[%s292 + $0x408] sm:$0xff]
        %v471 = vld [vmem:[%s292 + $0x410] sm:$0xff]
        %v472 = vld [vmem:[%s292 + $0x418] sm:$0xff]
        %v473 = vld [vmem:[%s292 + $0x420] sm:$0xff]
        %v474 = vld [vmem:[%s292 + $0x428] sm:$0xff]
        %v475 = vld [vmem:[%s292 + $0x430] sm:$0xff]
        %v476 = vld [vmem:[%s292 + $0x438] sm:$0xff]
        %v477 = vld [vmem:[%s292 + $0x440] sm:$0xff]
        %v478 = vld [vmem:[%s292 + $0x448] sm:$0xff]
        %v479 = vld [vmem:[%s292 + $0x450] sm:$0xff]
        %v480 = vld [vmem:[%s292 + $0x458] sm:$0xff]
        %v481 = vld [vmem:[%s292 + $0x460] sm:$0xff]
        %v482 = vld [vmem:[%s292 + $0x468] sm:$0xff]
        %v483 = vld [vmem:[%s292 + $0x470] sm:$0xff]
        %v484 = vld [vmem:[%s292 + $0x478] sm:$0xff]
        %v485 = vld [vmem:[%s292 + $0x480] sm:$0xff]
        %v486 = vld [vmem:[%s292 + $0x488] sm:$0xff]
        %v487 = vld [vmem:[%s292 + $0x490] sm:$0xff]
        %v488 = vld [vmem:[%s292 + $0x498] sm:$0xff]
        %v489 = vld [vmem:[%s292 + $0x4a0] sm:$0xff]
        %v490 = vld [vmem:[%s292 + $0x4a8] sm:$0xff]
        %v491 = vld [vmem:[%s292 + $0x4b0] sm:$0xff]
        %v492 = vld [vmem:[%s292 + $0x4b8] sm:$0xff]
        %v493 = vld [vmem:[%s292 + $0x4c0] sm:$0xff]
        %v494 = vld [vmem:[%s292 + $0x4c8] sm:$0xff]
        %v495 = vld [vmem:[%s292 + $0x4d0] sm:$0xff]
        %v496 = vld [vmem:[%s292 + $0x4d8] sm:$0xff]
        %v497 = vld [vmem:[%s292 + $0x4e0] sm:$0xff]
        %v498 = vld [vmem:[%s292 + $0x4e8] sm:$0xff]
        %v499 = vld [vmem:[%s292 + $0x4f0] sm:$0xff]
        %v500 = vld [vmem:[%s292 + $0x4f8] sm:$0xff]
        %v501 = vld [vmem:[%s292 + $0x500] sm:$0xff]
        %v502 = vld [vmem:[%s292 + $0x508] sm:$0xff]
        %v503 = vld [vmem:[%s292 + $0x510] sm:$0xff]
        %v504 = vld [vmem:[%s292 + $0x518] sm:$0xff]
        %v505 = vld [vmem:[%s292 + $0x520] sm:$0xff]
        %v506 = vld [vmem:[%s292 + $0x528] sm:$0xff]
        %v507 = vld [vmem:[%s292 + $0x530] sm:$0xff]
        %v508 = vld [vmem:[%s292 + $0x538] sm:$0xff]
        %v509 = vld [vmem:[%s292 + $0x540] sm:$0xff]
        %v510 = vld [vmem:[%s292 + $0x548] sm:$0xff]
        %v511 = vld [vmem:[%s292 + $0x550] sm:$0xff]
        %v512 = vld [vmem:[%s292 + $0x558] sm:$0xff]
        %v513 = vld [vmem:[%s292 + $0x560] sm:$0xff]
        %v514 = vld [vmem:[%s292 + $0x568] sm:$0xff]
        %v515 = vld [vmem:[%s292 + $0x570] sm:$0xff]
        %v516 = vld [vmem:[%s292 + $0x578] sm:$0xff]
        %v517 = vld [vmem:[%s292 + $0x580] sm:$0xff]
        %v518 = vld [vmem:[%s292 + $0x588] sm:$0xff]
        %v519 = vld [vmem:[%s292 + $0x590] sm:$0xff]
        %v520 = vld [vmem:[%s292 + $0x598] sm:$0xff]
        %v521 = vld [vmem:[%s292 + $0x5a0] sm:$0xff]
        %v522 = vld [vmem:[%s292 + $0x5a8] sm:$0xff]
        %v523 = vld [vmem:[%s292 + $0x5b0] sm:$0xff]
        %v524 = vld [vmem:[%s292 + $0x5b8] sm:$0xff]
        %v525 = vld [vmem:[%s292 + $0x5c0] sm:$0xff]
        %v526 = vld [vmem:[%s292 + $0x5c8] sm:$0xff]
        %v527 = vld [vmem:[%s292 + $0x5d0] sm:$0xff]
        %v528 = vld [vmem:[%s292 + $0x5d8] sm:$0xff]
        %v529 = vld [vmem:[%s292 + $0x5e0] sm:$0xff]
        %v530 = vld [vmem:[%s292 + $0x5e8] sm:$0xff]
        %v531 = vld [vmem:[%s292 + $0x5f0] sm:$0xff]
        %v532 = vld [vmem:[%s292 + $0x5f8] sm:$0xff]
        %v533 = vld [vmem:[%s292 + $0x600] sm:$0xff]
        %v534 = vld [vmem:[%s292 + $0x608] sm:$0xff]
        %v535 = vld [vmem:[%s292 + $0x610] sm:$0xff]
        %v536 = vld [vmem:[%s292 + $0x618] sm:$0xff]
        %v537 = vld [vmem:[%s292 + $0x620] sm:$0xff]
        %v538 = vld [vmem:[%s292 + $0x628] sm:$0xff]
        %v539 = vld [vmem:[%s292 + $0x630] sm:$0xff]
        %v540 = vld [vmem:[%s292 + $0x638] sm:$0xff]
        %v541 = vld [vmem:[%s292 + $0x640] sm:$0xff]
        %v542 = vld [vmem:[%s292 + $0x648] sm:$0xff]
        %v543 = vld [vmem:[%s292 + $0x650] sm:$0xff]
        %v544 = vld [vmem:[%s292 + $0x658] sm:$0xff]
        %v545 = vld [vmem:[%s292 + $0x660] sm:$0xff]
        %v546 = vld [vmem:[%s292 + $0x668] sm:$0xff]
        %v547 = vld [vmem:[%s292 + $0x670] sm:$0xff]
        %v548 = vld [vmem:[%s292 + $0x678] sm:$0xff]
        %v549 = vld [vmem:[%s292 + $0x680] sm:$0xff]
        %v550 = vld [vmem:[%s292 + $0x688] sm:$0xff]
        %v551 = vld [vmem:[%s292 + $0x690] sm:$0xff]
        %v552 = vld [vmem:[%s292 + $0x698] sm:$0xff]
        %v553 = vld [vmem:[%s292 + $0x6a0] sm:$0xff]
        %v554 = vld [vmem:[%s292 + $0x6a8] sm:$0xff]
        %v555 = vld [vmem:[%s292 + $0x6b0] sm:$0xff]
        %v556 = vld [vmem:[%s292 + $0x6b8] sm:$0xff]
        %v557 = vld [vmem:[%s292 + $0x6c0] sm:$0xff]
        %v558 = vld [vmem:[%s292 + $0x6c8] sm:$0xff]
        %v559 = vld [vmem:[%s292 + $0x6d0] sm:$0xff]
        %v560 = vld [vmem:[%s292 + $0x6d8] sm:$0xff]
        %v561 = vld [vmem:[%s292 + $0x6e0] sm:$0xff]
        %v562 = vld [vmem:[%s292 + $0x6e8] sm:$0xff]
        %v563 = vld [vmem:[%s292 + $0x6f0] sm:$0xff]
        %v564 = vld [vmem:[%s292 + $0x6f8] sm:$0xff]
        %v565 = vld [vmem:[%s292 + $0x700] sm:$0xff]
        %v566 = vld [vmem:[%s292 + $0x708] sm:$0xff]
        %v567 = vld [vmem:[%s292 + $0x710] sm:$0xff]
        %v568 = vld [vmem:[%s292 + $0x718] sm:$0xff]
        %v569 = vld [vmem:[%s292 + $0x720] sm:$0xff]
        %v570 = vld [vmem:[%s292 + $0x728] sm:$0xff]
        %v571 = vld [vmem:[%s292 + $0x730] sm:$0xff]
        %v572 = vld [vmem:[%s292 + $0x738] sm:$0xff]
        %v573 = vld [vmem:[%s292 + $0x740] sm:$0xff]
        %v574 = vld [vmem:[%s292 + $0x748] sm:$0xff]
        %v575 = vld [vmem:[%s292 + $0x750] sm:$0xff]
        %v576 = vld [vmem:[%s292 + $0x758] sm:$0xff]
        %v577 = vld [vmem:[%s292 + $0x760] sm:$0xff]
        %v578 = vld [vmem:[%s292 + $0x768] sm:$0xff]
        %v579 = vld [vmem:[%s292 + $0x770] sm:$0xff]
        %v580 = vld [vmem:[%s292 + $0x778] sm:$0xff]
        %v581 = vld [vmem:[%s292 + $0x780] sm:$0xff]
        %v582 = vld [vmem:[%s292 + $0x788] sm:$0xff]
        %v583 = vld [vmem:[%s292 + $0x790] sm:$0xff]
        %v584 = vld [vmem:[%s292 + $0x798] sm:$0xff]
        %v585 = vld [vmem:[%s292 + $0x7a0] sm:$0xff]
        %v586 = vld [vmem:[%s292 + $0x7a8] sm:$0xff]
        %v587 = vld [vmem:[%s292 + $0x7b0] sm:$0xff]
        %v588 = vld [vmem:[%s292 + $0x7b8] sm:$0xff]
        %v589 = vld [vmem:[%s292 + $0x7c0] sm:$0xff]
        %v590 = vld [vmem:[%s292 + $0x7c8] sm:$0xff]
        %v591 = vld [vmem:[%s292 + $0x7d0] sm:$0xff]
        %v592 = vld [vmem:[%s292 + $0x7d8] sm:$0xff]
        %v593 = vld [vmem:[%s292 + $0x7e0] sm:$0xff]
        %v594 = vld [vmem:[%s292 + $0x7e8] sm:$0xff]
        %v595 = vld [vmem:[%s292 + $0x7f0] sm:$0xff]
        %v596 = vld [vmem:[%s292 + $0x7f8] sm:$0xff]
        %v597 = vld [vmem:[%s292 + $0x800] sm:$0xff]
        %v598 = vld [vmem:[%s292 + $0x808] sm:$0xff]
        %v599 = vld [vmem:[%s292 + $0x810] sm:$0xff]
        %v600 = vld [vmem:[%s292 + $0x818] sm:$0xff]
        %v601 = vld [vmem:[%s292 + $0x820] sm:$0xff]
        %v602 = vld [vmem:[%s292 + $0x828] sm:$0xff]
        %v603 = vld [vmem:[%s292 + $0x830] sm:$0xff]
        %v604 = vld [vmem:[%s292 + $0x838] sm:$0xff]
        %v605 = vld [vmem:[%s292 + $0x840] sm:$0xff]
        %v606 = vld [vmem:[%s292 + $0x848] sm:$0xff]
        %v607 = vld [vmem:[%s292 + $0x850] sm:$0xff]
        %v608 = vld [vmem:[%s292 + $0x858] sm:$0xff]
        %v609 = vld [vmem:[%s292 + $0x860] sm:$0xff]
        %v610 = vld [vmem:[%s292 + $0x868] sm:$0xff]
        %v611 = vld [vmem:[%s292 + $0x870] sm:$0xff]
        %v612 = vld [vmem:[%s292 + $0x878] sm:$0xff]
        %v613 = vld [vmem:[%s292 + $0x880] sm:$0xff]
        %v614 = vld [vmem:[%s292 + $0x888] sm:$0xff]
        %v615 = vld [vmem:[%s292 + $0x890] sm:$0xff]
        %v616 = vld [vmem:[%s292 + $0x898] sm:$0xff]
        %v617 = vld [vmem:[%s292 + $0x8a0] sm:$0xff]
        %v618 = vld [vmem:[%s292 + $0x8a8] sm:$0xff]
        %v619 = vld [vmem:[%s292 + $0x8b0] sm:$0xff]
        %v620 = vld [vmem:[%s292 + $0x8b8] sm:$0xff]
        %v621 = vld [vmem:[%s292 + $0x8c0] sm:$0xff]
        %v622 = vld [vmem:[%s292 + $0x8c8] sm:$0xff]
        %v623 = vld [vmem:[%s292 + $0x8d0] sm:$0xff]
        %v624 = vld [vmem:[%s292 + $0x8d8] sm:$0xff]
        %v625 = vld [vmem:[%s292 + $0x8e0] sm:$0xff]
        %v626 = vld [vmem:[%s292 + $0x8e8] sm:$0xff]
        %v627 = vld [vmem:[%s292 + $0x8f0] sm:$0xff]
        %v628 = vld [vmem:[%s292 + $0x8f8] sm:$0xff]
        %v629 = vld [vmem:[%s292 + $0x900] sm:$0xff]
        %v630 = vld [vmem:[%s292 + $0x908] sm:$0xff]
        %v631 = vld [vmem:[%s292 + $0x910] sm:$0xff]
        %v632 = vld [vmem:[%s292 + $0x918] sm:$0xff]
        %v633 = vld [vmem:[%s292 + $0x920] sm:$0xff]
        %v634 = vld [vmem:[%s292 + $0x928] sm:$0xff]
        %v635 = vld [vmem:[%s292 + $0x930] sm:$0xff]
        %v636 = vld [vmem:[%s292 + $0x938] sm:$0xff]
        %v637 = vld [vmem:[%s292 + $0x940] sm:$0xff]
        %v638 = vld [vmem:[%s292 + $0x948] sm:$0xff]
        %v639 = vld [vmem:[%s292 + $0x950] sm:$0xff]
        %v640 = vld [vmem:[%s292 + $0x958] sm:$0xff]
        %v641 = vld [vmem:[%s292 + $0x960] sm:$0xff]
        %v642 = vld [vmem:[%s292 + $0x968] sm:$0xff]
        %v643 = vld [vmem:[%s292 + $0x970] sm:$0xff]
        %v644 = vld [vmem:[%s292 + $0x978] sm:$0xff]
        %v645 = vld [vmem:[%s292 + $0x980] sm:$0xff]
        %v646 = vld [vmem:[%s292 + $0x988] sm:$0xff]
        %v647 = vld [vmem:[%s292 + $0x990] sm:$0xff]
        %v648 = vld [vmem:[%s292 + $0x998] sm:$0xff]
        %v649 = vld [vmem:[%s292 + $0x9a0] sm:$0xff]
        %v650 = vld [vmem:[%s292 + $0x9a8] sm:$0xff]
        %v651 = vld [vmem:[%s292 + $0x9b0] sm:$0xff]
        %v652 = vld [vmem:[%s292 + $0x9b8] sm:$0xff]
        %v653 = vld [vmem:[%s292 + $0x9c0] sm:$0xff]
        %v654 = vld [vmem:[%s292 + $0x9c8] sm:$0xff]
        %v655 = vld [vmem:[%s292 + $0x9d0] sm:$0xff]
        %v656 = vld [vmem:[%s292 + $0x9d8] sm:$0xff]
        %v657 = vld [vmem:[%s292 + $0x9e0] sm:$0xff]
        %v658 = vld [vmem:[%s292 + $0x9e8] sm:$0xff]
        %v659 = vld [vmem:[%s292 + $0x9f0] sm:$0xff]
        %v660 = vld [vmem:[%s292 + $0x9f8] sm:$0xff]
        %v981 = vunpack.c.l.b16 %v341
        %v982 = vunpack.c.h.b16 %v341
        %v983 = vunpack.c.l.b16 %v342
        %v984 = vunpack.c.h.b16 %v342
        %v985 = vunpack.c.l.b16 %v343
        %v986 = vunpack.c.h.b16 %v343
        %v987 = vunpack.c.l.b16 %v344
        %v988 = vunpack.c.h.b16 %v344
        %v989 = vunpack.c.l.b16 %v345
        %v990 = vunpack.c.h.b16 %v345
        %v991 = vunpack.c.l.b16 %v346
        %v992 = vunpack.c.h.b16 %v346
        %v993 = vunpack.c.l.b16 %v347
        %v994 = vunpack.c.h.b16 %v347
        %v995 = vunpack.c.l.b16 %v348
        %v996 = vunpack.c.h.b16 %v348
        %v997 = vunpack.c.l.b16 %v349
        %v998 = vunpack.c.h.b16 %v349
        %v999 = vunpack.c.l.b16 %v350
        %v1000 = vunpack.c.h.b16 %v350
        %v1001 = vunpack.c.l.b16 %v351
        %v1002 = vunpack.c.h.b16 %v351
        %v1003 = vunpack.c.l.b16 %v352
        %v1004 = vunpack.c.h.b16 %v352
        %v1005 = vunpack.c.l.b16 %v353
        %v1006 = vunpack.c.h.b16 %v353
        %v1007 = vunpack.c.l.b16 %v354
        %v1008 = vunpack.c.h.b16 %v354
        %v1009 = vunpack.c.l.b16 %v355
        %v1010 = vunpack.c.h.b16 %v355
        %v1011 = vunpack.c.l.b16 %v356
        %v1012 = vunpack.c.h.b16 %v356
        %v1013 = vunpack.c.l.b16 %v357
        %v1014 = vunpack.c.h.b16 %v357
        %v1015 = vunpack.c.l.b16 %v358
        %v1016 = vunpack.c.h.b16 %v358
        %v1017 = vunpack.c.l.b16 %v359
        %v1018 = vunpack.c.h.b16 %v359
        %v1019 = vunpack.c.l.b16 %v360
        %v1020 = vunpack.c.h.b16 %v360
        %v1021 = vunpack.c.l.b16 %v361
        %v1022 = vunpack.c.h.b16 %v361
        %v1023 = vunpack.c.l.b16 %v362
        %v1024 = vunpack.c.h.b16 %v362
        %v1025 = vunpack.c.l.b16 %v363
        %v1026 = vunpack.c.h.b16 %v363
        %v1027 = vunpack.c.l.b16 %v364
        %v1028 = vunpack.c.h.b16 %v364
        %v1029 = vunpack.c.l.b16 %v365
        %v1030 = vunpack.c.h.b16 %v365
        %v1031 = vunpack.c.l.b16 %v366
        %v1032 = vunpack.c.h.b16 %v366
        %v1033 = vunpack.c.l.b16 %v367
        %v1034 = vunpack.c.h.b16 %v367
        %v1035 = vunpack.c.l.b16 %v368
        %v1036 = vunpack.c.h.b16 %v368
        %v1037 = vunpack.c.l.b16 %v369
        %v1038 = vunpack.c.h.b16 %v369
        %v1039 = vunpack.c.l.b16 %v370
        %v1040 = vunpack.c.h.b16 %v370
        %v1041 = vunpack.c.l.b16 %v371
        %v1042 = vunpack.c.h.b16 %v371
        %v1043 = vunpack.c.l.b16 %v372
        %v1044 = vunpack.c.h.b16 %v372
        %v1045 = vunpack.c.l.b16 %v373
        %v1046 = vunpack.c.h.b16 %v373
        %v1047 = vunpack.c.l.b16 %v374
        %v1048 = vunpack.c.h.b16 %v374
        %v1049 = vunpack.c.l.b16 %v375
        %v1050 = vunpack.c.h.b16 %v375
        %v1051 = vunpack.c.l.b16 %v376
        %v1052 = vunpack.c.h.b16 %v376
        %v1053 = vunpack.c.l.b16 %v377
        %v1054 = vunpack.c.h.b16 %v377
        %v1055 = vunpack.c.l.b16 %v378
        %v1056 = vunpack.c.h.b16 %v378
        %v1057 = vunpack.c.l.b16 %v379
        %v1058 = vunpack.c.h.b16 %v379
        %v1059 = vunpack.c.l.b16 %v380
        %v1060 = vunpack.c.h.b16 %v380
        %v1061 = vunpack.c.l.b16 %v381
        %v1062 = vunpack.c.h.b16 %v381
        %v1063 = vunpack.c.l.b16 %v382
        %v1064 = vunpack.c.h.b16 %v382
        %v1065 = vunpack.c.l.b16 %v383
        %v1066 = vunpack.c.h.b16 %v383
        %v1067 = vunpack.c.l.b16 %v384
        %v1068 = vunpack.c.h.b16 %v384
        %v1069 = vunpack.c.l.b16 %v385
        %v1070 = vunpack.c.h.b16 %v385
        %v1071 = vunpack.c.l.b16 %v386
        %v1072 = vunpack.c.h.b16 %v386
        %v1073 = vunpack.c.l.b16 %v387
        %v1074 = vunpack.c.h.b16 %v387
        %v1075 = vunpack.c.l.b16 %v388
        %v1076 = vunpack.c.h.b16 %v388
        %v1077 = vunpack.c.l.b16 %v389
        %v1078 = vunpack.c.h.b16 %v389
        %v1079 = vunpack.c.l.b16 %v390
        %v1080 = vunpack.c.h.b16 %v390
        %v1081 = vunpack.c.l.b16 %v391
        %v1082 = vunpack.c.h.b16 %v391
        %v1083 = vunpack.c.l.b16 %v392
        %v1084 = vunpack.c.h.b16 %v392
        %v1085 = vunpack.c.l.b16 %v393
        %v1086 = vunpack.c.h.b16 %v393
        %v1087 = vunpack.c.l.b16 %v394
        %v1088 = vunpack.c.h.b16 %v394
        %v1089 = vunpack.c.l.b16 %v395
        %v1090 = vunpack.c.h.b16 %v395
        %v1091 = vunpack.c.l.b16 %v396
        %v1092 = vunpack.c.h.b16 %v396
        %v1093 = vunpack.c.l.b16 %v397
        %v1094 = vunpack.c.h.b16 %v397
        %v1095 = vunpack.c.l.b16 %v398
        %v1096 = vunpack.c.h.b16 %v398
        %v1097 = vunpack.c.l.b16 %v399
        %v1098 = vunpack.c.h.b16 %v399
        %v1099 = vunpack.c.l.b16 %v400
        %v1100 = vunpack.c.h.b16 %v400
        %v1101 = vunpack.c.l.b16 %v401
        %v1102 = vunpack.c.h.b16 %v401
        %v1103 = vunpack.c.l.b16 %v402
        %v1104 = vunpack.c.h.b16 %v402
        %v1105 = vunpack.c.l.b16 %v403
        %v1106 = vunpack.c.h.b16 %v403
        %v1107 = vunpack.c.l.b16 %v404
        %v1108 = vunpack.c.h.b16 %v404
        %v1109 = vunpack.c.l.b16 %v405
        %v1110 = vunpack.c.h.b16 %v405
        %v1111 = vunpack.c.l.b16 %v406
        %v1112 = vunpack.c.h.b16 %v406
        %v1113 = vunpack.c.l.b16 %v407
        %v1114 = vunpack.c.h.b16 %v407
        %v1115 = vunpack.c.l.b16 %v408
        %v1116 = vunpack.c.h.b16 %v408
        %v1117 = vunpack.c.l.b16 %v409
        %v1118 = vunpack.c.h.b16 %v409
        %v1119 = vunpack.c.l.b16 %v410
        %v1120 = vunpack.c.h.b16 %v410
        %v1121 = vunpack.c.l.b16 %v411
        %v1122 = vunpack.c.h.b16 %v411
        %v1123 = vunpack.c.l.b16 %v412
        %v1124 = vunpack.c.h.b16 %v412
        %v1125 = vunpack.c.l.b16 %v413
        %v1126 = vunpack.c.h.b16 %v413
        %v1127 = vunpack.c.l.b16 %v414
        %v1128 = vunpack.c.h.b16 %v414
        %v1129 = vunpack.c.l.b16 %v415
        %v1130 = vunpack.c.h.b16 %v415
        %v1131 = vunpack.c.l.b16 %v416
        %v1132 = vunpack.c.h.b16 %v416
        %v1133 = vunpack.c.l.b16 %v417
        %v1134 = vunpack.c.h.b16 %v417
        %v1135 = vunpack.c.l.b16 %v418
        %v1136 = vunpack.c.h.b16 %v418
        %v1137 = vunpack.c.l.b16 %v419
        %v1138 = vunpack.c.h.b16 %v419
        %v1139 = vunpack.c.l.b16 %v420
        %v1140 = vunpack.c.h.b16 %v420
        %v1141 = vunpack.c.l.b16 %v421
        %v1142 = vunpack.c.h.b16 %v421
        %v1143 = vunpack.c.l.b16 %v422
        %v1144 = vunpack.c.h.b16 %v422
        %v1145 = vunpack.c.l.b16 %v423
        %v1146 = vunpack.c.h.b16 %v423
        %v1147 = vunpack.c.l.b16 %v424
        %v1148 = vunpack.c.h.b16 %v424
        %v1149 = vunpack.c.l.b16 %v425
        %v1150 = vunpack.c.h.b16 %v425
        %v1151 = vunpack.c.l.b16 %v426
        %v1152 = vunpack.c.h.b16 %v426
        %v1153 = vunpack.c.l.b16 %v427
        %v1154 = vunpack.c.h.b16 %v427
        %v1155 = vunpack.c.l.b16 %v428
        %v1156 = vunpack.c.h.b16 %v428
        %v1157 = vunpack.c.l.b16 %v429
        %v1158 = vunpack.c.h.b16 %v429
        %v1159 = vunpack.c.l.b16 %v430
        %v1160 = vunpack.c.h.b16 %v430
        %v1161 = vunpack.c.l.b16 %v431
        %v1162 = vunpack.c.h.b16 %v431
        %v1163 = vunpack.c.l.b16 %v432
        %v1164 = vunpack.c.h.b16 %v432
        %v1165 = vunpack.c.l.b16 %v433
        %v1166 = vunpack.c.h.b16 %v433
        %v1167 = vunpack.c.l.b16 %v434
        %v1168 = vunpack.c.h.b16 %v434
        %v1169 = vunpack.c.l.b16 %v435
        %v1170 = vunpack.c.h.b16 %v435
        %v1171 = vunpack.c.l.b16 %v436
        %v1172 = vunpack.c.h.b16 %v436
        %v1173 = vunpack.c.l.b16 %v437
        %v1174 = vunpack.c.h.b16 %v437
        %v1175 = vunpack.c.l.b16 %v438
        %v1176 = vunpack.c.h.b16 %v438
        %v1177 = vunpack.c.l.b16 %v439
        %v1178 = vunpack.c.h.b16 %v439
        %v1179 = vunpack.c.l.b16 %v440
        %v1180 = vunpack.c.h.b16 %v440
        %v1181 = vunpack.c.l.b16 %v441
        %v1182 = vunpack.c.h.b16 %v441
        %v1183 = vunpack.c.l.b16 %v442
        %v1184 = vunpack.c.h.b16 %v442
        %v1185 = vunpack.c.l.b16 %v443
        %v1186 = vunpack.c.h.b16 %v443
        %v1187 = vunpack.c.l.b16 %v444
        %v1188 = vunpack.c.h.b16 %v444
        %v1189 = vunpack.c.l.b16 %v445
        %v1190 = vunpack.c.h.b16 %v445
        %v1191 = vunpack.c.l.b16 %v446
        %v1192 = vunpack.c.h.b16 %v446
        %v1193 = vunpack.c.l.b16 %v447
        %v1194 = vunpack.c.h.b16 %v447
        %v1195 = vunpack.c.l.b16 %v448
        %v1196 = vunpack.c.h.b16 %v448
        %v1197 = vunpack.c.l.b16 %v449
        %v1198 = vunpack.c.h.b16 %v449
        %v1199 = vunpack.c.l.b16 %v450
        %v1200 = vunpack.c.h.b16 %v450
        %v1201 = vunpack.c.l.b16 %v451
        %v1202 = vunpack.c.h.b16 %v451
        %v1203 = vunpack.c.l.b16 %v452
        %v1204 = vunpack.c.h.b16 %v452
        %v1205 = vunpack.c.l.b16 %v453
        %v1206 = vunpack.c.h.b16 %v453
        %v1207 = vunpack.c.l.b16 %v454
        %v1208 = vunpack.c.h.b16 %v454
        %v1209 = vunpack.c.l.b16 %v455
        %v1210 = vunpack.c.h.b16 %v455
        %v1211 = vunpack.c.l.b16 %v456
        %v1212 = vunpack.c.h.b16 %v456
        %v1213 = vunpack.c.l.b16 %v457
        %v1214 = vunpack.c.h.b16 %v457
        %v1215 = vunpack.c.l.b16 %v458
        %v1216 = vunpack.c.h.b16 %v458
        %v1217 = vunpack.c.l.b16 %v459
        %v1218 = vunpack.c.h.b16 %v459
        %v1219 = vunpack.c.l.b16 %v460
        %v1220 = vunpack.c.h.b16 %v460
        %v1221 = vunpack.c.l.b16 %v461
        %v1222 = vunpack.c.h.b16 %v461
        %v1223 = vunpack.c.l.b16 %v462
        %v1224 = vunpack.c.h.b16 %v462
        %v1225 = vunpack.c.l.b16 %v463
        %v1226 = vunpack.c.h.b16 %v463
        %v1227 = vunpack.c.l.b16 %v464
        %v1228 = vunpack.c.h.b16 %v464
        %v1229 = vunpack.c.l.b16 %v465
        %v1230 = vunpack.c.h.b16 %v465
        %v1231 = vunpack.c.l.b16 %v466
        %v1232 = vunpack.c.h.b16 %v466
        %v1233 = vunpack.c.l.b16 %v467
        %v1234 = vunpack.c.h.b16 %v467
        %v1235 = vunpack.c.l.b16 %v468
        %v1236 = vunpack.c.h.b16 %v468
        %v1237 = vunpack.c.l.b16 %v469
        %v1238 = vunpack.c.h.b16 %v469
        %v1239 = vunpack.c.l.b16 %v470
        %v1240 = vunpack.c.h.b16 %v470
        %v1241 = vunpack.c.l.b16 %v471
        %v1242 = vunpack.c.h.b16 %v471
        %v1243 = vunpack.c.l.b16 %v472
        %v1244 = vunpack.c.h.b16 %v472
        %v1245 = vunpack.c.l.b16 %v473
        %v1246 = vunpack.c.h.b16 %v473
        %v1247 = vunpack.c.l.b16 %v474
        %v1248 = vunpack.c.h.b16 %v474
        %v1249 = vunpack.c.l.b16 %v475
        %v1250 = vunpack.c.h.b16 %v475
        %v1251 = vunpack.c.l.b16 %v476
        %v1252 = vunpack.c.h.b16 %v476
        %v1253 = vunpack.c.l.b16 %v477
        %v1254 = vunpack.c.h.b16 %v477
        %v1255 = vunpack.c.l.b16 %v478
        %v1256 = vunpack.c.h.b16 %v478
        %v1257 = vunpack.c.l.b16 %v479
        %v1258 = vunpack.c.h.b16 %v479
        %v1259 = vunpack.c.l.b16 %v480
        %v1260 = vunpack.c.h.b16 %v480
        %v1261 = vunpack.c.l.b16 %v481
        %v1262 = vunpack.c.h.b16 %v481
        %v1263 = vunpack.c.l.b16 %v482
        %v1264 = vunpack.c.h.b16 %v482
        %v1265 = vunpack.c.l.b16 %v483
        %v1266 = vunpack.c.h.b16 %v483
        %v1267 = vunpack.c.l.b16 %v484
        %v1268 = vunpack.c.h.b16 %v484
        %v1269 = vunpack.c.l.b16 %v485
        %v1270 = vunpack.c.h.b16 %v485
        %v1271 = vunpack.c.l.b16 %v486
        %v1272 = vunpack.c.h.b16 %v486
        %v1273 = vunpack.c.l.b16 %v487
        %v1274 = vunpack.c.h.b16 %v487
        %v1275 = vunpack.c.l.b16 %v488
        %v1276 = vunpack.c.h.b16 %v488
        %v1277 = vunpack.c.l.b16 %v489
        %v1278 = vunpack.c.h.b16 %v489
        %v1279 = vunpack.c.l.b16 %v490
        %v1280 = vunpack.c.h.b16 %v490
        %v1281 = vunpack.c.l.b16 %v491
        %v1282 = vunpack.c.h.b16 %v491
        %v1283 = vunpack.c.l.b16 %v492
        %v1284 = vunpack.c.h.b16 %v492
        %v1285 = vunpack.c.l.b16 %v493
        %v1286 = vunpack.c.h.b16 %v493
        %v1287 = vunpack.c.l.b16 %v494
        %v1288 = vunpack.c.h.b16 %v494
        %v1289 = vunpack.c.l.b16 %v495
        %v1290 = vunpack.c.h.b16 %v495
        %v1291 = vunpack.c.l.b16 %v496
        %v1292 = vunpack.c.h.b16 %v496
        %v1293 = vunpack.c.l.b16 %v497
        %v1294 = vunpack.c.h.b16 %v497
        %v1295 = vunpack.c.l.b16 %v498
        %v1296 = vunpack.c.h.b16 %v498
        %v1297 = vunpack.c.l.b16 %v499
        %v1298 = vunpack.c.h.b16 %v499
        %v1299 = vunpack.c.l.b16 %v500
        %v1300 = vunpack.c.h.b16 %v500
        %v1301 = vunpack.c.l.b16 %v501
        %v1302 = vunpack.c.h.b16 %v501
        %v1303 = vunpack.c.l.b16 %v502
        %v1304 = vunpack.c.h.b16 %v502
        %v1305 = vunpack.c.l.b16 %v503
        %v1306 = vunpack.c.h.b16 %v503
        %v1307 = vunpack.c.l.b16 %v504
        %v1308 = vunpack.c.h.b16 %v504
        %v1309 = vunpack.c.l.b16 %v505
        %v1310 = vunpack.c.h.b16 %v505
        %v1311 = vunpack.c.l.b16 %v506
        %v1312 = vunpack.c.h.b16 %v506
        %v1313 = vunpack.c.l.b16 %v507
        %v1314 = vunpack.c.h.b16 %v507
        %v1315 = vunpack.c.l.b16 %v508
        %v1316 = vunpack.c.h.b16 %v508
        %v1317 = vunpack.c.l.b16 %v509
        %v1318 = vunpack.c.h.b16 %v509
        %v1319 = vunpack.c.l.b16 %v510
        %v1320 = vunpack.c.h.b16 %v510
        %v1321 = vunpack.c.l.b16 %v511
        %v1322 = vunpack.c.h.b16 %v511
        %v1323 = vunpack.c.l.b16 %v512
        %v1324 = vunpack.c.h.b16 %v512
        %v1325 = vunpack.c.l.b16 %v513
        %v1326 = vunpack.c.h.b16 %v513
        %v1327 = vunpack.c.l.b16 %v514
        %v1328 = vunpack.c.h.b16 %v514
        %v1329 = vunpack.c.l.b16 %v515
        %v1330 = vunpack.c.h.b16 %v515
        %v1331 = vunpack.c.l.b16 %v516
        %v1332 = vunpack.c.h.b16 %v516
        %v1333 = vunpack.c.l.b16 %v517
        %v1334 = vunpack.c.h.b16 %v517
        %v1335 = vunpack.c.l.b16 %v518
        %v1336 = vunpack.c.h.b16 %v518
        %v1337 = vunpack.c.l.b16 %v519
        %v1338 = vunpack.c.h.b16 %v519
        %v1339 = vunpack.c.l.b16 %v520
        %v1340 = vunpack.c.h.b16 %v520
        %v1341 = vunpack.c.l.b16 %v521
        %v1342 = vunpack.c.h.b16 %v521
        %v1343 = vunpack.c.l.b16 %v522
        %v1344 = vunpack.c.h.b16 %v522
        %v1345 = vunpack.c.l.b16 %v523
        %v1346 = vunpack.c.h.b16 %v523
        %v1347 = vunpack.c.l.b16 %v524
        %v1348 = vunpack.c.h.b16 %v524
        %v1349 = vunpack.c.l.b16 %v525
        %v1350 = vunpack.c.h.b16 %v525
        %v1351 = vunpack.c.l.b16 %v526
        %v1352 = vunpack.c.h.b16 %v526
        %v1353 = vunpack.c.l.b16 %v527
        %v1354 = vunpack.c.h.b16 %v527
        %v1355 = vunpack.c.l.b16 %v528
        %v1356 = vunpack.c.h.b16 %v528
        %v1357 = vunpack.c.l.b16 %v529
        %v1358 = vunpack.c.h.b16 %v529
        %v1359 = vunpack.c.l.b16 %v530
        %v1360 = vunpack.c.h.b16 %v530
        %v1361 = vunpack.c.l.b16 %v531
        %v1362 = vunpack.c.h.b16 %v531
        %v1363 = vunpack.c.l.b16 %v532
        %v1364 = vunpack.c.h.b16 %v532
        %v1365 = vunpack.c.l.b16 %v533
        %v1366 = vunpack.c.h.b16 %v533
        %v1367 = vunpack.c.l.b16 %v534
        %v1368 = vunpack.c.h.b16 %v534
        %v1369 = vunpack.c.l.b16 %v535
        %v1370 = vunpack.c.h.b16 %v535
        %v1371 = vunpack.c.l.b16 %v536
        %v1372 = vunpack.c.h.b16 %v536
        %v1373 = vunpack.c.l.b16 %v537
        %v1374 = vunpack.c.h.b16 %v537
        %v1375 = vunpack.c.l.b16 %v538
        %v1376 = vunpack.c.h.b16 %v538
        %v1377 = vunpack.c.l.b16 %v539
        %v1378 = vunpack.c.h.b16 %v539
        %v1379 = vunpack.c.l.b16 %v540
        %v1380 = vunpack.c.h.b16 %v540
        %v1381 = vunpack.c.l.b16 %v541
        %v1382 = vunpack.c.h.b16 %v541
        %v1383 = vunpack.c.l.b16 %v542
        %v1384 = vunpack.c.h.b16 %v542
        %v1385 = vunpack.c.l.b16 %v543
        %v1386 = vunpack.c.h.b16 %v543
        %v1387 = vunpack.c.l.b16 %v544
        %v1388 = vunpack.c.h.b16 %v544
        %v1389 = vunpack.c.l.b16 %v545
        %v1390 = vunpack.c.h.b16 %v545
        %v1391 = vunpack.c.l.b16 %v546
        %v1392 = vunpack.c.h.b16 %v546
        %v1393 = vunpack.c.l.b16 %v547
        %v1394 = vunpack.c.h.b16 %v547
        %v1395 = vunpack.c.l.b16 %v548
        %v1396 = vunpack.c.h.b16 %v548
        %v1397 = vunpack.c.l.b16 %v549
        %v1398 = vunpack.c.h.b16 %v549
        %v1399 = vunpack.c.l.b16 %v550
        %v1400 = vunpack.c.h.b16 %v550
        %v1401 = vunpack.c.l.b16 %v551
        %v1402 = vunpack.c.h.b16 %v551
        %v1403 = vunpack.c.l.b16 %v552
        %v1404 = vunpack.c.h.b16 %v552
        %v1405 = vunpack.c.l.b16 %v553
        %v1406 = vunpack.c.h.b16 %v553
        %v1407 = vunpack.c.l.b16 %v554
        %v1408 = vunpack.c.h.b16 %v554
        %v1409 = vunpack.c.l.b16 %v555
        %v1410 = vunpack.c.h.b16 %v555
        %v1411 = vunpack.c.l.b16 %v556
        %v1412 = vunpack.c.h.b16 %v556
        %v1413 = vunpack.c.l.b16 %v557
        %v1414 = vunpack.c.h.b16 %v557
        %v1415 = vunpack.c.l.b16 %v558
        %v1416 = vunpack.c.h.b16 %v558
        %v1417 = vunpack.c.l.b16 %v559
        %v1418 = vunpack.c.h.b16 %v559
        %v1419 = vunpack.c.l.b16 %v560
        %v1420 = vunpack.c.h.b16 %v560
        %v1421 = vunpack.c.l.b16 %v561
        %v1422 = vunpack.c.h.b16 %v561
        %v1423 = vunpack.c.l.b16 %v562
        %v1424 = vunpack.c.h.b16 %v562
        %v1425 = vunpack.c.l.b16 %v563
        %v1426 = vunpack.c.h.b16 %v563
        %v1427 = vunpack.c.l.b16 %v564
        %v1428 = vunpack.c.h.b16 %v564
        %v1429 = vunpack.c.l.b16 %v565
        %v1430 = vunpack.c.h.b16 %v565
        %v1431 = vunpack.c.l.b16 %v566
        %v1432 = vunpack.c.h.b16 %v566
        %v1433 = vunpack.c.l.b16 %v567
        %v1434 = vunpack.c.h.b16 %v567
        %v1435 = vunpack.c.l.b16 %v568
        %v1436 = vunpack.c.h.b16 %v568
        %v1437 = vunpack.c.l.b16 %v569
        %v1438 = vunpack.c.h.b16 %v569
        %v1439 = vunpack.c.l.b16 %v570
        %v1440 = vunpack.c.h.b16 %v570
        %v1441 = vunpack.c.l.b16 %v571
        %v1442 = vunpack.c.h.b16 %v571
        %v1443 = vunpack.c.l.b16 %v572
        %v1444 = vunpack.c.h.b16 %v572
        %v1445 = vunpack.c.l.b16 %v573
        %v1446 = vunpack.c.h.b16 %v573
        %v1447 = vunpack.c.l.b16 %v574
        %v1448 = vunpack.c.h.b16 %v574
        %v1449 = vunpack.c.l.b16 %v575
        %v1450 = vunpack.c.h.b16 %v575
        %v1451 = vunpack.c.l.b16 %v576
        %v1452 = vunpack.c.h.b16 %v576
        %v1453 = vunpack.c.l.b16 %v577
        %v1454 = vunpack.c.h.b16 %v577
        %v1455 = vunpack.c.l.b16 %v578
        %v1456 = vunpack.c.h.b16 %v578
        %v1457 = vunpack.c.l.b16 %v579
        %v1458 = vunpack.c.h.b16 %v579
        %v1459 = vunpack.c.l.b16 %v580
        %v1460 = vunpack.c.h.b16 %v580
        %v1461 = vunpack.c.l.b16 %v581
        %v1462 = vunpack.c.h.b16 %v581
        %v1463 = vunpack.c.l.b16 %v582
        %v1464 = vunpack.c.h.b16 %v582
        %v1465 = vunpack.c.l.b16 %v583
        %v1466 = vunpack.c.h.b16 %v583
        %v1467 = vunpack.c.l.b16 %v584
        %v1468 = vunpack.c.h.b16 %v584
        %v1469 = vunpack.c.l.b16 %v585
        %v1470 = vunpack.c.h.b16 %v585
        %v1471 = vunpack.c.l.b16 %v586
        %v1472 = vunpack.c.h.b16 %v586
        %v1473 = vunpack.c.l.b16 %v587
        %v1474 = vunpack.c.h.b16 %v587
        %v1475 = vunpack.c.l.b16 %v588
        %v1476 = vunpack.c.h.b16 %v588
        %v1477 = vunpack.c.l.b16 %v589
        %v1478 = vunpack.c.h.b16 %v589
        %v1479 = vunpack.c.l.b16 %v590
        %v1480 = vunpack.c.h.b16 %v590
        %v1481 = vunpack.c.l.b16 %v591
        %v1482 = vunpack.c.h.b16 %v591
        %v1483 = vunpack.c.l.b16 %v592
        %v1484 = vunpack.c.h.b16 %v592
        %v1485 = vunpack.c.l.b16 %v593
        %v1486 = vunpack.c.h.b16 %v593
        %v1487 = vunpack.c.l.b16 %v594
        %v1488 = vunpack.c.h.b16 %v594
        %v1489 = vunpack.c.l.b16 %v595
        %v1490 = vunpack.c.h.b16 %v595
        %v1491 = vunpack.c.l.b16 %v596
        %v1492 = vunpack.c.h.b16 %v596
        %v1493 = vunpack.c.l.b16 %v597
        %v1494 = vunpack.c.h.b16 %v597
        %v1495 = vunpack.c.l.b16 %v598
        %v1496 = vunpack.c.h.b16 %v598
        %v1497 = vunpack.c.l.b16 %v599
        %v1498 = vunpack.c.h.b16 %v599
        %v1499 = vunpack.c.l.b16 %v600
        %v1500 = vunpack.c.h.b16 %v600
        %v1501 = vunpack.c.l.b16 %v601
        %v1502 = vunpack.c.h.b16 %v601
        %v1503 = vunpack.c.l.b16 %v602
        %v1504 = vunpack.c.h.b16 %v602
        %v1505 = vunpack.c.l.b16 %v603
        %v1506 = vunpack.c.h.b16 %v603
        %v1507 = vunpack.c.l.b16 %v604
        %v1508 = vunpack.c.h.b16 %v604
        %v1509 = vunpack.c.l.b16 %v605
        %v1510 = vunpack.c.h.b16 %v605
        %v1511 = vunpack.c.l.b16 %v606
        %v1512 = vunpack.c.h.b16 %v606
        %v1513 = vunpack.c.l.b16 %v607
        %v1514 = vunpack.c.h.b16 %v607
        %v1515 = vunpack.c.l.b16 %v608
        %v1516 = vunpack.c.h.b16 %v608
        %v1517 = vunpack.c.l.b16 %v609
        %v1518 = vunpack.c.h.b16 %v609
        %v1519 = vunpack.c.l.b16 %v610
        %v1520 = vunpack.c.h.b16 %v610
        %v1521 = vunpack.c.l.b16 %v611
        %v1522 = vunpack.c.h.b16 %v611
        %v1523 = vunpack.c.l.b16 %v612
        %v1524 = vunpack.c.h.b16 %v612
        %v1525 = vunpack.c.l.b16 %v613
        %v1526 = vunpack.c.h.b16 %v613
        %v1527 = vunpack.c.l.b16 %v614
        %v1528 = vunpack.c.h.b16 %v614
        %v1529 = vunpack.c.l.b16 %v615
        %v1530 = vunpack.c.h.b16 %v615
        %v1531 = vunpack.c.l.b16 %v616
        %v1532 = vunpack.c.h.b16 %v616
        %v1533 = vunpack.c.l.b16 %v617
        %v1534 = vunpack.c.h.b16 %v617
        %v1535 = vunpack.c.l.b16 %v618
        %v1536 = vunpack.c.h.b16 %v618
        %v1537 = vunpack.c.l.b16 %v619
        %v1538 = vunpack.c.h.b16 %v619
        %v1539 = vunpack.c.l.b16 %v620
        %v1540 = vunpack.c.h.b16 %v620
        %v1541 = vunpack.c.l.b16 %v621
        %v1542 = vunpack.c.h.b16 %v621
        %v1543 = vunpack.c.l.b16 %v622
        %v1544 = vunpack.c.h.b16 %v622
        %v1545 = vunpack.c.l.b16 %v623
        %v1546 = vunpack.c.h.b16 %v623
        %v1547 = vunpack.c.l.b16 %v624
        %v1548 = vunpack.c.h.b16 %v624
        %v1549 = vunpack.c.l.b16 %v625
        %v1550 = vunpack.c.h.b16 %v625
        %v1551 = vunpack.c.l.b16 %v626
        %v1552 = vunpack.c.h.b16 %v626
        %v1553 = vunpack.c.l.b16 %v627
        %v1554 = vunpack.c.h.b16 %v627
        %v1555 = vunpack.c.l.b16 %v628
        %v1556 = vunpack.c.h.b16 %v628
        %v1557 = vunpack.c.l.b16 %v629
        %v1558 = vunpack.c.h.b16 %v629
        %v1559 = vunpack.c.l.b16 %v630
        %v1560 = vunpack.c.h.b16 %v630
        %v1561 = vunpack.c.l.b16 %v631
        %v1562 = vunpack.c.h.b16 %v631
        %v1563 = vunpack.c.l.b16 %v632
        %v1564 = vunpack.c.h.b16 %v632
        %v1565 = vunpack.c.l.b16 %v633
        %v1566 = vunpack.c.h.b16 %v633
        %v1567 = vunpack.c.l.b16 %v634
        %v1568 = vunpack.c.h.b16 %v634
        %v1569 = vunpack.c.l.b16 %v635
        %v1570 = vunpack.c.h.b16 %v635
        %v1571 = vunpack.c.l.b16 %v636
        %v1572 = vunpack.c.h.b16 %v636
        %v1573 = vunpack.c.l.b16 %v637
        %v1574 = vunpack.c.h.b16 %v637
        %v1575 = vunpack.c.l.b16 %v638
        %v1576 = vunpack.c.h.b16 %v638
        %v1577 = vunpack.c.l.b16 %v639
        %v1578 = vunpack.c.h.b16 %v639
        %v1579 = vunpack.c.l.b16 %v640
        %v1580 = vunpack.c.h.b16 %v640
        %v1581 = vunpack.c.l.b16 %v641
        %v1582 = vunpack.c.h.b16 %v641
        %v1583 = vunpack.c.l.b16 %v642
        %v1584 = vunpack.c.h.b16 %v642
        %v1585 = vunpack.c.l.b16 %v643
        %v1586 = vunpack.c.h.b16 %v643
        %v1587 = vunpack.c.l.b16 %v644
        %v1588 = vunpack.c.h.b16 %v644
        %v1589 = vunpack.c.l.b16 %v645
        %v1590 = vunpack.c.h.b16 %v645
        %v1591 = vunpack.c.l.b16 %v646
        %v1592 = vunpack.c.h.b16 %v646
        %v1593 = vunpack.c.l.b16 %v647
        %v1594 = vunpack.c.h.b16 %v647
        %v1595 = vunpack.c.l.b16 %v648
        %v1596 = vunpack.c.h.b16 %v648
        %v1597 = vunpack.c.l.b16 %v649
        %v1598 = vunpack.c.h.b16 %v649
        %v1599 = vunpack.c.l.b16 %v650
        %v1600 = vunpack.c.h.b16 %v650
        %v1601 = vunpack.c.l.b16 %v651
        %v1602 = vunpack.c.h.b16 %v651
        %v1603 = vunpack.c.l.b16 %v652
        %v1604 = vunpack.c.h.b16 %v652
        %v1605 = vunpack.c.l.b16 %v653
        %v1606 = vunpack.c.h.b16 %v653
        %v1607 = vunpack.c.l.b16 %v654
        %v1608 = vunpack.c.h.b16 %v654
        %v1609 = vunpack.c.l.b16 %v655
        %v1610 = vunpack.c.h.b16 %v655
        %v1611 = vunpack.c.l.b16 %v656
        %v1612 = vunpack.c.h.b16 %v656
        %v1613 = vunpack.c.l.b16 %v657
        %v1614 = vunpack.c.h.b16 %v657
        %v1615 = vunpack.c.l.b16 %v658
        %v1616 = vunpack.c.h.b16 %v658
        %v1617 = vunpack.c.l.b16 %v659
        %v1618 = vunpack.c.h.b16 %v659
        %v1619 = vunpack.c.l.b16 %v660
        %v1620 = vunpack.c.h.b16 %v660
        %v1621 = vpack.c.b16 %v989, %v981
        %v1622 = vpack.c.b16 %v990, %v982
        %v1623 = vpack.c.b16 %v991, %v983
        %v1624 = vpack.c.b16 %v992, %v984
        %v1625 = vpack.c.b16 %v993, %v985
        %v1626 = vpack.c.b16 %v994, %v986
        %v1627 = vpack.c.b16 %v995, %v987
        %v1628 = vpack.c.b16 %v996, %v988
        %v1629 = vpack.c.b16 %v1005, %v997
        %v1630 = vpack.c.b16 %v1006, %v998
        %v1631 = vpack.c.b16 %v1007, %v999
        %v1632 = vpack.c.b16 %v1008, %v1000
        %v1633 = vpack.c.b16 %v1009, %v1001
        %v1634 = vpack.c.b16 %v1010, %v1002
        %v1635 = vpack.c.b16 %v1011, %v1003
        %v1636 = vpack.c.b16 %v1012, %v1004
        %v1637 = vpack.c.b16 %v1021, %v1013
        %v1638 = vpack.c.b16 %v1022, %v1014
        %v1639 = vpack.c.b16 %v1023, %v1015
        %v1640 = vpack.c.b16 %v1024, %v1016
        %v1641 = vpack.c.b16 %v1025, %v1017
        %v1642 = vpack.c.b16 %v1026, %v1018
        %v1643 = vpack.c.b16 %v1027, %v1019
        %v1644 = vpack.c.b16 %v1028, %v1020
        %v1645 = vpack.c.b16 %v1037, %v1029
        %v1646 = vpack.c.b16 %v1038, %v1030
        %v1647 = vpack.c.b16 %v1039, %v1031
        %v1648 = vpack.c.b16 %v1040, %v1032
        %v1649 = vpack.c.b16 %v1041, %v1033
        %v1650 = vpack.c.b16 %v1042, %v1034
        %v1651 = vpack.c.b16 %v1043, %v1035
        %v1652 = vpack.c.b16 %v1044, %v1036
        %v1653 = vpack.c.b16 %v1053, %v1045
        %v1654 = vpack.c.b16 %v1054, %v1046
        %v1655 = vpack.c.b16 %v1055, %v1047
        %v1656 = vpack.c.b16 %v1056, %v1048
        %v1657 = vpack.c.b16 %v1057, %v1049
        %v1658 = vpack.c.b16 %v1058, %v1050
        %v1659 = vpack.c.b16 %v1059, %v1051
        %v1660 = vpack.c.b16 %v1060, %v1052
        %v1661 = vpack.c.b16 %v1069, %v1061
        %v1662 = vpack.c.b16 %v1070, %v1062
        %v1663 = vpack.c.b16 %v1071, %v1063
        %v1664 = vpack.c.b16 %v1072, %v1064
        %v1665 = vpack.c.b16 %v1073, %v1065
        %v1666 = vpack.c.b16 %v1074, %v1066
        %v1667 = vpack.c.b16 %v1075, %v1067
        %v1668 = vpack.c.b16 %v1076, %v1068
        %v1669 = vpack.c.b16 %v1085, %v1077
        %v1670 = vpack.c.b16 %v1086, %v1078
        %v1671 = vpack.c.b16 %v1087, %v1079
        %v1672 = vpack.c.b16 %v1088, %v1080
        %v1673 = vpack.c.b16 %v1089, %v1081
        %v1674 = vpack.c.b16 %v1090, %v1082
        %v1675 = vpack.c.b16 %v1091, %v1083
        %v1676 = vpack.c.b16 %v1092, %v1084
        %v1677 = vpack.c.b16 %v1101, %v1093
        %v1678 = vpack.c.b16 %v1102, %v1094
        %v1679 = vpack.c.b16 %v1103, %v1095
        %v1680 = vpack.c.b16 %v1104, %v1096
        %v1681 = vpack.c.b16 %v1105, %v1097
        %v1682 = vpack.c.b16 %v1106, %v1098
        %v1683 = vpack.c.b16 %v1107, %v1099
        %v1684 = vpack.c.b16 %v1108, %v1100
        %v1685 = vpack.c.b16 %v1117, %v1109
        %v1686 = vpack.c.b16 %v1118, %v1110
        %v1687 = vpack.c.b16 %v1119, %v1111
        %v1688 = vpack.c.b16 %v1120, %v1112
        %v1689 = vpack.c.b16 %v1121, %v1113
        %v1690 = vpack.c.b16 %v1122, %v1114
        %v1691 = vpack.c.b16 %v1123, %v1115
        %v1692 = vpack.c.b16 %v1124, %v1116
        %v1693 = vpack.c.b16 %v1133, %v1125
        %v1694 = vpack.c.b16 %v1134, %v1126
        %v1695 = vpack.c.b16 %v1135, %v1127
        %v1696 = vpack.c.b16 %v1136, %v1128
        %v1697 = vpack.c.b16 %v1137, %v1129
        %v1698 = vpack.c.b16 %v1138, %v1130
        %v1699 = vpack.c.b16 %v1139, %v1131
        %v1700 = vpack.c.b16 %v1140, %v1132
        %v1701 = vpack.c.b16 %v1149, %v1141
        %v1702 = vpack.c.b16 %v1150, %v1142
        %v1703 = vpack.c.b16 %v1151, %v1143
        %v1704 = vpack.c.b16 %v1152, %v1144
        %v1705 = vpack.c.b16 %v1153, %v1145
        %v1706 = vpack.c.b16 %v1154, %v1146
        %v1707 = vpack.c.b16 %v1155, %v1147
        %v1708 = vpack.c.b16 %v1156, %v1148
        %v1709 = vpack.c.b16 %v1165, %v1157
        %v1710 = vpack.c.b16 %v1166, %v1158
        %v1711 = vpack.c.b16 %v1167, %v1159
        %v1712 = vpack.c.b16 %v1168, %v1160
        %v1713 = vpack.c.b16 %v1169, %v1161
        %v1714 = vpack.c.b16 %v1170, %v1162
        %v1715 = vpack.c.b16 %v1171, %v1163
        %v1716 = vpack.c.b16 %v1172, %v1164
        %v1717 = vpack.c.b16 %v1181, %v1173
        %v1718 = vpack.c.b16 %v1182, %v1174
        %v1719 = vpack.c.b16 %v1183, %v1175
        %v1720 = vpack.c.b16 %v1184, %v1176
        %v1721 = vpack.c.b16 %v1185, %v1177
        %v1722 = vpack.c.b16 %v1186, %v1178
        %v1723 = vpack.c.b16 %v1187, %v1179
        %v1724 = vpack.c.b16 %v1188, %v1180
        %v1725 = vpack.c.b16 %v1197, %v1189
        %v1726 = vpack.c.b16 %v1198, %v1190
        %v1727 = vpack.c.b16 %v1199, %v1191
        %v1728 = vpack.c.b16 %v1200, %v1192
        %v1729 = vpack.c.b16 %v1201, %v1193
        %v1730 = vpack.c.b16 %v1202, %v1194
        %v1731 = vpack.c.b16 %v1203, %v1195
        %v1732 = vpack.c.b16 %v1204, %v1196
        %v1733 = vpack.c.b16 %v1213, %v1205
        %v1734 = vpack.c.b16 %v1214, %v1206
        %v1735 = vpack.c.b16 %v1215, %v1207
        %v1736 = vpack.c.b16 %v1216, %v1208
        %v1737 = vpack.c.b16 %v1217, %v1209
        %v1738 = vpack.c.b16 %v1218, %v1210
        %v1739 = vpack.c.b16 %v1219, %v1211
        %v1740 = vpack.c.b16 %v1220, %v1212
        %v1741 = vpack.c.b16 %v1229, %v1221
        %v1742 = vpack.c.b16 %v1230, %v1222
        %v1743 = vpack.c.b16 %v1231, %v1223
        %v1744 = vpack.c.b16 %v1232, %v1224
        %v1745 = vpack.c.b16 %v1233, %v1225
        %v1746 = vpack.c.b16 %v1234, %v1226
        %v1747 = vpack.c.b16 %v1235, %v1227
        %v1748 = vpack.c.b16 %v1236, %v1228
        %v1749 = vpack.c.b16 %v1245, %v1237
        %v1750 = vpack.c.b16 %v1246, %v1238
        %v1751 = vpack.c.b16 %v1247, %v1239
        %v1752 = vpack.c.b16 %v1248, %v1240
        %v1753 = vpack.c.b16 %v1249, %v1241
        %v1754 = vpack.c.b16 %v1250, %v1242
        %v1755 = vpack.c.b16 %v1251, %v1243
        %v1756 = vpack.c.b16 %v1252, %v1244
        %v1757 = vpack.c.b16 %v1261, %v1253
        %v1758 = vpack.c.b16 %v1262, %v1254
        %v1759 = vpack.c.b16 %v1263, %v1255
        %v1760 = vpack.c.b16 %v1264, %v1256
        %v1761 = vpack.c.b16 %v1265, %v1257
        %v1762 = vpack.c.b16 %v1266, %v1258
        %v1763 = vpack.c.b16 %v1267, %v1259
        %v1764 = vpack.c.b16 %v1268, %v1260
        %v1765 = vpack.c.b16 %v1277, %v1269
        %v1766 = vpack.c.b16 %v1278, %v1270
        %v1767 = vpack.c.b16 %v1279, %v1271
        %v1768 = vpack.c.b16 %v1280, %v1272
        %v1769 = vpack.c.b16 %v1281, %v1273
        %v1770 = vpack.c.b16 %v1282, %v1274
        %v1771 = vpack.c.b16 %v1283, %v1275
        %v1772 = vpack.c.b16 %v1284, %v1276
        %v1773 = vpack.c.b16 %v1293, %v1285
        %v1774 = vpack.c.b16 %v1294, %v1286
        %v1775 = vpack.c.b16 %v1295, %v1287
        %v1776 = vpack.c.b16 %v1296, %v1288
        %v1777 = vpack.c.b16 %v1297, %v1289
        %v1778 = vpack.c.b16 %v1298, %v1290
        %v1779 = vpack.c.b16 %v1299, %v1291
        %v1780 = vpack.c.b16 %v1300, %v1292
        %v1781 = vpack.c.b16 %v1309, %v1301
        %v1782 = vpack.c.b16 %v1310, %v1302
        %v1783 = vpack.c.b16 %v1311, %v1303
        %v1784 = vpack.c.b16 %v1312, %v1304
        %v1785 = vpack.c.b16 %v1313, %v1305
        %v1786 = vpack.c.b16 %v1314, %v1306
        %v1787 = vpack.c.b16 %v1315, %v1307
        %v1788 = vpack.c.b16 %v1316, %v1308
        %v1789 = vpack.c.b16 %v1325, %v1317
        %v1790 = vpack.c.b16 %v1326, %v1318
        %v1791 = vpack.c.b16 %v1327, %v1319
        %v1792 = vpack.c.b16 %v1328, %v1320
        %v1793 = vpack.c.b16 %v1329, %v1321
        %v1794 = vpack.c.b16 %v1330, %v1322
        %v1795 = vpack.c.b16 %v1331, %v1323
        %v1796 = vpack.c.b16 %v1332, %v1324
        %v1797 = vpack.c.b16 %v1341, %v1333
        %v1798 = vpack.c.b16 %v1342, %v1334
        %v1799 = vpack.c.b16 %v1343, %v1335
        %v1800 = vpack.c.b16 %v1344, %v1336
        %v1801 = vpack.c.b16 %v1345, %v1337
        %v1802 = vpack.c.b16 %v1346, %v1338
        %v1803 = vpack.c.b16 %v1347, %v1339
        %v1804 = vpack.c.b16 %v1348, %v1340
        %v1805 = vpack.c.b16 %v1357, %v1349
        %v1806 = vpack.c.b16 %v1358, %v1350
        %v1807 = vpack.c.b16 %v1359, %v1351
        %v1808 = vpack.c.b16 %v1360, %v1352
        %v1809 = vpack.c.b16 %v1361, %v1353
        %v1810 = vpack.c.b16 %v1362, %v1354
        %v1811 = vpack.c.b16 %v1363, %v1355
        %v1812 = vpack.c.b16 %v1364, %v1356
        %v1813 = vpack.c.b16 %v1373, %v1365
        %v1814 = vpack.c.b16 %v1374, %v1366
        %v1815 = vpack.c.b16 %v1375, %v1367
        %v1816 = vpack.c.b16 %v1376, %v1368
        %v1817 = vpack.c.b16 %v1377, %v1369
        %v1818 = vpack.c.b16 %v1378, %v1370
        %v1819 = vpack.c.b16 %v1379, %v1371
        %v1820 = vpack.c.b16 %v1380, %v1372
        %v1821 = vpack.c.b16 %v1389, %v1381
        %v1822 = vpack.c.b16 %v1390, %v1382
        %v1823 = vpack.c.b16 %v1391, %v1383
        %v1824 = vpack.c.b16 %v1392, %v1384
        %v1825 = vpack.c.b16 %v1393, %v1385
        %v1826 = vpack.c.b16 %v1394, %v1386
        %v1827 = vpack.c.b16 %v1395, %v1387
        %v1828 = vpack.c.b16 %v1396, %v1388
        %v1829 = vpack.c.b16 %v1405, %v1397
        %v1830 = vpack.c.b16 %v1406, %v1398
        %v1831 = vpack.c.b16 %v1407, %v1399
        %v1832 = vpack.c.b16 %v1408, %v1400
        %v1833 = vpack.c.b16 %v1409, %v1401
        %v1834 = vpack.c.b16 %v1410, %v1402
        %v1835 = vpack.c.b16 %v1411, %v1403
        %v1836 = vpack.c.b16 %v1412, %v1404
        %v1837 = vpack.c.b16 %v1421, %v1413
        %v1838 = vpack.c.b16 %v1422, %v1414
        %v1839 = vpack.c.b16 %v1423, %v1415
        %v1840 = vpack.c.b16 %v1424, %v1416
        %v1841 = vpack.c.b16 %v1425, %v1417
        %v1842 = vpack.c.b16 %v1426, %v1418
        %v1843 = vpack.c.b16 %v1427, %v1419
        %v1844 = vpack.c.b16 %v1428, %v1420
        %v1845 = vpack.c.b16 %v1437, %v1429
        %v1846 = vpack.c.b16 %v1438, %v1430
        %v1847 = vpack.c.b16 %v1439, %v1431
        %v1848 = vpack.c.b16 %v1440, %v1432
        %v1849 = vpack.c.b16 %v1441, %v1433
        %v1850 = vpack.c.b16 %v1442, %v1434
        %v1851 = vpack.c.b16 %v1443, %v1435
        %v1852 = vpack.c.b16 %v1444, %v1436
        %v1853 = vpack.c.b16 %v1453, %v1445
        %v1854 = vpack.c.b16 %v1454, %v1446
        %v1855 = vpack.c.b16 %v1455, %v1447
        %v1856 = vpack.c.b16 %v1456, %v1448
        %v1857 = vpack.c.b16 %v1457, %v1449
        %v1858 = vpack.c.b16 %v1458, %v1450
        %v1859 = vpack.c.b16 %v1459, %v1451
        %v1860 = vpack.c.b16 %v1460, %v1452
        %v1861 = vpack.c.b16 %v1469, %v1461
        %v1862 = vpack.c.b16 %v1470, %v1462
        %v1863 = vpack.c.b16 %v1471, %v1463
        %v1864 = vpack.c.b16 %v1472, %v1464
        %v1865 = vpack.c.b16 %v1473, %v1465
        %v1866 = vpack.c.b16 %v1474, %v1466
        %v1867 = vpack.c.b16 %v1475, %v1467
        %v1868 = vpack.c.b16 %v1476, %v1468
        %v1869 = vpack.c.b16 %v1485, %v1477
        %v1870 = vpack.c.b16 %v1486, %v1478
        %v1871 = vpack.c.b16 %v1487, %v1479
        %v1872 = vpack.c.b16 %v1488, %v1480
        %v1873 = vpack.c.b16 %v1489, %v1481
        %v1874 = vpack.c.b16 %v1490, %v1482
        %v1875 = vpack.c.b16 %v1491, %v1483
        %v1876 = vpack.c.b16 %v1492, %v1484
        %v1877 = vpack.c.b16 %v1501, %v1493
        %v1878 = vpack.c.b16 %v1502, %v1494
        %v1879 = vpack.c.b16 %v1503, %v1495
        %v1880 = vpack.c.b16 %v1504, %v1496
        %v1881 = vpack.c.b16 %v1505, %v1497
        %v1882 = vpack.c.b16 %v1506, %v1498
        %v1883 = vpack.c.b16 %v1507, %v1499
        %v1884 = vpack.c.b16 %v1508, %v1500
        %v1885 = vpack.c.b16 %v1517, %v1509
        %v1886 = vpack.c.b16 %v1518, %v1510
        %v1887 = vpack.c.b16 %v1519, %v1511
        %v1888 = vpack.c.b16 %v1520, %v1512
        %v1889 = vpack.c.b16 %v1521, %v1513
        %v1890 = vpack.c.b16 %v1522, %v1514
        %v1891 = vpack.c.b16 %v1523, %v1515
        %v1892 = vpack.c.b16 %v1524, %v1516
        %v1893 = vpack.c.b16 %v1533, %v1525
        %v1894 = vpack.c.b16 %v1534, %v1526
        %v1895 = vpack.c.b16 %v1535, %v1527
        %v1896 = vpack.c.b16 %v1536, %v1528
        %v1897 = vpack.c.b16 %v1537, %v1529
        %v1898 = vpack.c.b16 %v1538, %v1530
        %v1899 = vpack.c.b16 %v1539, %v1531
        %v1900 = vpack.c.b16 %v1540, %v1532
        %v1901 = vpack.c.b16 %v1549, %v1541
        %v1902 = vpack.c.b16 %v1550, %v1542
        %v1903 = vpack.c.b16 %v1551, %v1543
        %v1904 = vpack.c.b16 %v1552, %v1544
        %v1905 = vpack.c.b16 %v1553, %v1545
        %v1906 = vpack.c.b16 %v1554, %v1546
        %v1907 = vpack.c.b16 %v1555, %v1547
        %v1908 = vpack.c.b16 %v1556, %v1548
        %v1909 = vpack.c.b16 %v1565, %v1557
        %v1910 = vpack.c.b16 %v1566, %v1558
        %v1911 = vpack.c.b16 %v1567, %v1559
        %v1912 = vpack.c.b16 %v1568, %v1560
        %v1913 = vpack.c.b16 %v1569, %v1561
        %v1914 = vpack.c.b16 %v1570, %v1562
        %v1915 = vpack.c.b16 %v1571, %v1563
        %v1916 = vpack.c.b16 %v1572, %v1564
        %v1917 = vpack.c.b16 %v1581, %v1573
        %v1918 = vpack.c.b16 %v1582, %v1574
        %v1919 = vpack.c.b16 %v1583, %v1575
        %v1920 = vpack.c.b16 %v1584, %v1576
        %v1921 = vpack.c.b16 %v1585, %v1577
        %v1922 = vpack.c.b16 %v1586, %v1578
        %v1923 = vpack.c.b16 %v1587, %v1579
        %v1924 = vpack.c.b16 %v1588, %v1580
        %v1925 = vpack.c.b16 %v1597, %v1589
        %v1926 = vpack.c.b16 %v1598, %v1590
        %v1927 = vpack.c.b16 %v1599, %v1591
        %v1928 = vpack.c.b16 %v1600, %v1592
        %v1929 = vpack.c.b16 %v1601, %v1593
        %v1930 = vpack.c.b16 %v1602, %v1594
        %v1931 = vpack.c.b16 %v1603, %v1595
        %v1932 = vpack.c.b16 %v1604, %v1596
        %v1933 = vpack.c.b16 %v1613, %v1605
        %v1934 = vpack.c.b16 %v1614, %v1606
        %v1935 = vpack.c.b16 %v1615, %v1607
        %v1936 = vpack.c.b16 %v1616, %v1608
        %v1937 = vpack.c.b16 %v1617, %v1609
        %v1938 = vpack.c.b16 %v1618, %v1610
        %v1939 = vpack.c.b16 %v1619, %v1611
        %v1940 = vpack.c.b16 %v1620, %v1612
        %2261 = vmatprep.subr.bf16.mxu0 %v1678
        %2262 = vmatpush1.bf16.msra.mxu0 %v1677
        %2263 = vmatprep.subr.bf16.mxu0 %v1670
        %2264 = vmatpush1.bf16.msra.mxu0 %v1669
        %2265 = vmatprep.subr.bf16.mxu0 %v1662
        %2266 = vmatpush1.bf16.msra.mxu0 %v1661
        %2267 = vmatprep.subr.bf16.mxu0 %v1654
        %2268 = vmatpush1.bf16.msra.mxu0 %v1653
        %2269 = vmatprep.subr.bf16.mxu0 %v1646
        %2270 = vmatpush1.bf16.msra.mxu0 %v1645
        %2271 = vmatprep.subr.bf16.mxu0 %v1638
        %2272 = vmatpush1.bf16.msra.mxu0 %v1637
        %2273 = vmatprep.subr.bf16.mxu0 %v1630
        %2274 = vmatpush1.bf16.msra.mxu0 %v1629
        %2275 = vmatprep.subr.bf16.mxu0 %v1622
        %2276 = vmatpush1.bf16.msra.mxu0 %v1621
        %2277 = vmatprep.subr.bf16.mxu0 %v1742
        %2278 = vmatpush2.bf16.msra.mxu0 %v1741
        %2279 = vmatprep.subr.bf16.mxu0 %v1734
        %2280 = vmatpush2.bf16.msra.mxu0 %v1733
        %2281 = vmatprep.subr.bf16.mxu0 %v1726
        %2282 = vmatpush2.bf16.msra.mxu0 %v1725
        %2283 = vmatprep.subr.bf16.mxu0 %v1718
        %2284 = vmatpush2.bf16.msra.mxu0 %v1717
        %2285 = vmatprep.subr.bf16.mxu0 %v1710
        %2286 = vmatpush2.bf16.msra.mxu0 %v1709
        %2287 = vmatprep.subr.bf16.mxu0 %v1702
        %2288 = vmatpush2.bf16.msra.mxu0 %v1701
        %2289 = vmatprep.subr.bf16.mxu0 %v1694
        %2290 = vmatpush2.bf16.msra.mxu0 %v1693
        %2291 = vmatprep.subr.bf16.mxu0 %v1686
        %2292 = vmatpush2.bf16.msra.mxu0 %v1685
        %2293 = vmatprep.mubr.bf16.mxu0 %v337
        %2294 = vmatmul.mubr.bf16.gmra.mxu0 %v336
        %v2295 = vpop.f32.mrf.mxu0
        %v2296 = vadd.f32 0.0, %v2295
        %v2297 = vpop.f32.mrf.mxu0
        %v2298 = vadd.f32 0.0, %v2297
        %v2299 = vpop.f32.mrf.mxu0
        %v2300 = vpop.f32.mrf.mxu0
        %2301 = vdwg.mxu0
        %2302 = vmatprep.subr.bf16.mxu0 %v1806
        %2303 = vmatpush1.bf16.msra.mxu0 %v1805
        %2304 = vmatprep.subr.bf16.mxu0 %v1798
        %2305 = vmatpush1.bf16.msra.mxu0 %v1797
        %2306 = vmatprep.subr.bf16.mxu0 %v1790
        %2307 = vmatpush1.bf16.msra.mxu0 %v1789
        %2308 = vmatprep.subr.bf16.mxu0 %v1782
        %2309 = vmatpush1.bf16.msra.mxu0 %v1781
        %2310 = vmatprep.subr.bf16.mxu0 %v1774
        %2311 = vmatpush1.bf16.msra.mxu0 %v1773
        %2312 = vmatprep.subr.bf16.mxu0 %v1766
        %2313 = vmatpush1.bf16.msra.mxu0 %v1765
        %2314 = vmatprep.subr.bf16.mxu0 %v1758
        %2315 = vmatpush1.bf16.msra.mxu0 %v1757
        %2316 = vmatprep.subr.bf16.mxu0 %v1750
        %2317 = vmatpush1.bf16.msra.mxu0 %v1749
        %2318 = vmatprep.subr.bf16.mxu0 %v1870
        %2319 = vmatpush2.bf16.msra.mxu0 %v1869
        %2320 = vmatprep.subr.bf16.mxu0 %v1862
        %2321 = vmatpush2.bf16.msra.mxu0 %v1861
        %2322 = vmatprep.subr.bf16.mxu0 %v1854
        %2323 = vmatpush2.bf16.msra.mxu0 %v1853
        %2324 = vmatprep.subr.bf16.mxu0 %v1846
        %2325 = vmatpush2.bf16.msra.mxu0 %v1845
        %2326 = vmatprep.subr.bf16.mxu0 %v1838
        %2327 = vmatpush2.bf16.msra.mxu0 %v1837
        %2328 = vmatprep.subr.bf16.mxu0 %v1830
        %2329 = vmatpush2.bf16.msra.mxu0 %v1829
        %2330 = vmatprep.subr.bf16.mxu0 %v1822
        %2331 = vmatpush2.bf16.msra.mxu0 %v1821
        %2332 = vmatprep.subr.bf16.mxu0 %v1814
        %2333 = vmatpush2.bf16.msra.mxu0 %v1813
        %2334 = vmatprep.mubr.bf16.mxu0 %v339
        %2335 = vmatmul.mubr.bf16.gmra.mxu0 %v338
        %v2336 = vpop.f32.mrf.mxu0
        %v2337 = vadd.f32 %v2296, %v2336
        %v2338 = vpop.f32.mrf.mxu0
        %v2339 = vadd.f32 %v2298, %v2338
        %v2340 = vpop.f32.mrf.mxu0
        %v2341 = vpop.f32.mrf.mxu0
        %2342 = vdwg.mxu0
        %2343 = vmatprep.subr.bf16.mxu0 %v1934
        %2344 = vmatpush1.bf16.msra.mxu0 %v1933
        %2345 = vmatprep.subr.bf16.mxu0 %v1926
        %2346 = vmatpush1.bf16.msra.mxu0 %v1925
        %2347 = vmatprep.subr.bf16.mxu0 %v1918
        %2348 = vmatpush1.bf16.msra.mxu0 %v1917
        %2349 = vmatprep.subr.bf16.mxu0 %v1910
        %2350 = vmatpush1.bf16.msra.mxu0 %v1909
        %2351 = vmatprep.subr.bf16.mxu0 %v1902
        %2352 = vmatpush1.bf16.msra.mxu0 %v1901
        %2353 = vmatprep.subr.bf16.mxu0 %v1894
        %2354 = vmatpush1.bf16.msra.mxu0 %v1893
        %2355 = vmatprep.subr.bf16.mxu0 %v1886
        %2356 = vmatpush1.bf16.msra.mxu0 %v1885
        %2357 = vmatprep.subr.bf16.mxu0 %v1878
        %2358 = vmatpush1.bf16.msra.mxu0 %v1877
        %2359 = vmatprep.subr.bf16.mxu0 0
        %2360 = vmatpush2.bf16.msra.mxu0 0
        %2361 = vmatprep.subr.bf16.mxu0 0
        %2362 = vmatpush2.bf16.msra.mxu0 0
        %2363 = vmatprep.subr.bf16.mxu0 0
        %2364 = vmatpush2.bf16.msra.mxu0 0
        %2365 = vmatprep.subr.bf16.mxu0 0
        %2366 = vmatpush2.bf16.msra.mxu0 0
        %2367 = vmatprep.subr.bf16.mxu0 0
        %2368 = vmatpush2.bf16.msra.mxu0 0
        %2369 = vmatprep.subr.bf16.mxu0 0
        %2370 = vmatpush2.bf16.msra.mxu0 0
        %2371 = vmatprep.subr.bf16.mxu0 0
        %2372 = vmatpush2.bf16.msra.mxu0 0
        %2373 = vmatprep.subr.bf16.mxu0 0
        %2374 = vmatpush2.bf16.msra.mxu0 0
        %2375 = vmatprep.mubr.bf16.mxu0 0
        %2376 = vmatmul.mubr.bf16.gmra.mxu0 %v340
        %v2377 = vpop.f32.mrf.mxu0
        %v2378 = vadd.f32 %v2337, %v2377
        %v2379 = vpop.f32.mrf.mxu0
        %v2380 = vadd.f32 %v2339, %v2379
        %v2381 = vpop.f32.mrf.mxu0
        %v2382 = vpop.f32.mrf.mxu0
        %2383 = vdwg.mxu0
        %2384 = vmatprep.subr.bf16.mxu0 %v1680
        %2385 = vmatpush1.bf16.msra.mxu0 %v1679
        %2386 = vmatprep.subr.bf16.mxu0 %v1672
        %2387 = vmatpush1.bf16.msra.mxu0 %v1671
        %2388 = vmatprep.subr.bf16.mxu0 %v1664
        %2389 = vmatpush1.bf16.msra.mxu0 %v1663
        %2390 = vmatprep.subr.bf16.mxu0 %v1656
        %2391 = vmatpush1.bf16.msra.mxu0 %v1655
        %2392 = vmatprep.subr.bf16.mxu0 %v1648
        %2393 = vmatpush1.bf16.msra.mxu0 %v1647
        %2394 = vmatprep.subr.bf16.mxu0 %v1640
        %2395 = vmatpush1.bf16.msra.mxu0 %v1639
        %2396 = vmatprep.subr.bf16.mxu0 %v1632
        %2397 = vmatpush1.bf16.msra.mxu0 %v1631
        %2398 = vmatprep.subr.bf16.mxu0 %v1624
        %2399 = vmatpush1.bf16.msra.mxu0 %v1623
        %2400 = vmatprep.subr.bf16.mxu0 %v1744
        %2401 = vmatpush2.bf16.msra.mxu0 %v1743
        %2402 = vmatprep.subr.bf16.mxu0 %v1736
        %2403 = vmatpush2.bf16.msra.mxu0 %v1735
        %2404 = vmatprep.subr.bf16.mxu0 %v1728
        %2405 = vmatpush2.bf16.msra.mxu0 %v1727
        %2406 = vmatprep.subr.bf16.mxu0 %v1720
        %2407 = vmatpush2.bf16.msra.mxu0 %v1719
        %2408 = vmatprep.subr.bf16.mxu0 %v1712
        %2409 = vmatpush2.bf16.msra.mxu0 %v1711
        %2410 = vmatprep.subr.bf16.mxu0 %v1704
        %2411 = vmatpush2.bf16.msra.mxu0 %v1703
        %2412 = vmatprep.subr.bf16.mxu0 %v1696
        %2413 = vmatpush2.bf16.msra.mxu0 %v1695
        %2414 = vmatprep.subr.bf16.mxu0 %v1688
        %2415 = vmatpush2.bf16.msra.mxu0 %v1687
        %2416 = vmatprep.mubr.bf16.mxu0 %v337
        %2417 = vmatmul.mubr.bf16.gmra.mxu0 %v336
        %v2418 = vpop.f32.mrf.mxu0
        %v2419 = vadd.f32 0.0, %v2418
        %v2420 = vpop.f32.mrf.mxu0
        %v2421 = vadd.f32 0.0, %v2420
        %v2422 = vpop.f32.mrf.mxu0
        %v2423 = vpop.f32.mrf.mxu0
        %2424 = vdwg.mxu0
        %2425 = vmatprep.subr.bf16.mxu0 %v1808
        %2426 = vmatpush1.bf16.msra.mxu0 %v1807
        %2427 = vmatprep.subr.bf16.mxu0 %v1800
        %2428 = vmatpush1.bf16.msra.mxu0 %v1799
        %2429 = vmatprep.subr.bf16.mxu0 %v1792
        %2430 = vmatpush1.bf16.msra.mxu0 %v1791
        %2431 = vmatprep.subr.bf16.mxu0 %v1784
        %2432 = vmatpush1.bf16.msra.mxu0 %v1783
        %2433 = vmatprep.subr.bf16.mxu0 %v1776
        %2434 = vmatpush1.bf16.msra.mxu0 %v1775
        %2435 = vmatprep.subr.bf16.mxu0 %v1768
        %2436 = vmatpush1.bf16.msra.mxu0 %v1767
        %2437 = vmatprep.subr.bf16.mxu0 %v1760
        %2438 = vmatpush1.bf16.msra.mxu0 %v1759
        %2439 = vmatprep.subr.bf16.mxu0 %v1752
        %2440 = vmatpush1.bf16.msra.mxu0 %v1751
        %2441 = vmatprep.subr.bf16.mxu0 %v1872
        %2442 = vmatpush2.bf16.msra.mxu0 %v1871
        %2443 = vmatprep.subr.bf16.mxu0 %v1864
        %2444 = vmatpush2.bf16.msra.mxu0 %v1863
        %2445 = vmatprep.subr.bf16.mxu0 %v1856
        %2446 = vmatpush2.bf16.msra.mxu0 %v1855
        %2447 = vmatprep.subr.bf16.mxu0 %v1848
        %2448 = vmatpush2.bf16.msra.mxu0 %v1847
        %2449 = vmatprep.subr.bf16.mxu0 %v1840
        %2450 = vmatpush2.bf16.msra.mxu0 %v1839
        %2451 = vmatprep.subr.bf16.mxu0 %v1832
        %2452 = vmatpush2.bf16.msra.mxu0 %v1831
        %2453 = vmatprep.subr.bf16.mxu0 %v1824
        %2454 = vmatpush2.bf16.msra.mxu0 %v1823
        %2455 = vmatprep.subr.bf16.mxu0 %v1816
        %2456 = vmatpush2.bf16.msra.mxu0 %v1815
        %2457 = vmatprep.mubr.bf16.mxu0 %v339
        %2458 = vmatmul.mubr.bf16.gmra.mxu0 %v338
        %v2459 = vpop.f32.mrf.mxu0
        %v2460 = vadd.f32 %v2419, %v2459
        %v2461 = vpop.f32.mrf.mxu0
        %v2462 = vadd.f32 %v2421, %v2461
        %v2463 = vpop.f32.mrf.mxu0
        %v2464 = vpop.f32.mrf.mxu0
        %2465 = vdwg.mxu0
        %2466 = vmatprep.subr.bf16.mxu0 %v1936
        %2467 = vmatpush1.bf16.msra.mxu0 %v1935
        %2468 = vmatprep.subr.bf16.mxu0 %v1928
        %2469 = vmatpush1.bf16.msra.mxu0 %v1927
        %2470 = vmatprep.subr.bf16.mxu0 %v1920
        %2471 = vmatpush1.bf16.msra.mxu0 %v1919
        %2472 = vmatprep.subr.bf16.mxu0 %v1912
        %2473 = vmatpush1.bf16.msra.mxu0 %v1911
        %2474 = vmatprep.subr.bf16.mxu0 %v1904
        %2475 = vmatpush1.bf16.msra.mxu0 %v1903
        %2476 = vmatprep.subr.bf16.mxu0 %v1896
        %2477 = vmatpush1.bf16.msra.mxu0 %v1895
        %2478 = vmatprep.subr.bf16.mxu0 %v1888
        %2479 = vmatpush1.bf16.msra.mxu0 %v1887
        %2480 = vmatprep.subr.bf16.mxu0 %v1880
        %2481 = vmatpush1.bf16.msra.mxu0 %v1879
        %2482 = vmatprep.subr.bf16.mxu0 0
        %2483 = vmatpush2.bf16.msra.mxu0 0
        %2484 = vmatprep.subr.bf16.mxu0 0
        %2485 = vmatpush2.bf16.msra.mxu0 0
        %2486 = vmatprep.subr.bf16.mxu0 0
        %2487 = vmatpush2.bf16.msra.mxu0 0
        %2488 = vmatprep.subr.bf16.mxu0 0
        %2489 = vmatpush2.bf16.msra.mxu0 0
        %2490 = vmatprep.subr.bf16.mxu0 0
        %2491 = vmatpush2.bf16.msra.mxu0 0
        %2492 = vmatprep.subr.bf16.mxu0 0
        %2493 = vmatpush2.bf16.msra.mxu0 0
        %2494 = vmatprep.subr.bf16.mxu0 0
        %2495 = vmatpush2.bf16.msra.mxu0 0
        %2496 = vmatprep.subr.bf16.mxu0 0
        %2497 = vmatpush2.bf16.msra.mxu0 0
        %2498 = vmatprep.mubr.bf16.mxu0 0
        %2499 = vmatmul.mubr.bf16.gmra.mxu0 %v340
        %v2500 = vpop.f32.mrf.mxu0
        %v2501 = vadd.f32 %v2460, %v2500
        %v2502 = vpop.f32.mrf.mxu0
        %v2503 = vadd.f32 %v2462, %v2502
        %v2504 = vpop.f32.mrf.mxu0
        %v2505 = vpop.f32.mrf.mxu0
        %2506 = vdwg.mxu0
        %2507 = vmatprep.subr.bf16.mxu0 %v1682
        %2508 = vmatpush1.bf16.msra.mxu0 %v1681
        %2509 = vmatprep.subr.bf16.mxu0 %v1674
        %2510 = vmatpush1.bf16.msra.mxu0 %v1673
        %2511 = vmatprep.subr.bf16.mxu0 %v1666
        %2512 = vmatpush1.bf16.msra.mxu0 %v1665
        %2513 = vmatprep.subr.bf16.mxu0 %v1658
        %2514 = vmatpush1.bf16.msra.mxu0 %v1657
        %2515 = vmatprep.subr.bf16.mxu0 %v1650
        %2516 = vmatpush1.bf16.msra.mxu0 %v1649
        %2517 = vmatprep.subr.bf16.mxu0 %v1642
        %2518 = vmatpush1.bf16.msra.mxu0 %v1641
        %2519 = vmatprep.subr.bf16.mxu0 %v1634
        %2520 = vmatpush1.bf16.msra.mxu0 %v1633
        %2521 = vmatprep.subr.bf16.mxu0 %v1626
        %2522 = vmatpush1.bf16.msra.mxu0 %v1625
        %2523 = vmatprep.subr.bf16.mxu0 %v1746
        %2524 = vmatpush2.bf16.msra.mxu0 %v1745
        %2525 = vmatprep.subr.bf16.mxu0 %v1738
        %2526 = vmatpush2.bf16.msra.mxu0 %v1737
        %2527 = vmatprep.subr.bf16.mxu0 %v1730
        %2528 = vmatpush2.bf16.msra.mxu0 %v1729
        %2529 = vmatprep.subr.bf16.mxu0 %v1722
        %2530 = vmatpush2.bf16.msra.mxu0 %v1721
        %2531 = vmatprep.subr.bf16.mxu0 %v1714
        %2532 = vmatpush2.bf16.msra.mxu0 %v1713
        %2533 = vmatprep.subr.bf16.mxu0 %v1706
        %2534 = vmatpush2.bf16.msra.mxu0 %v1705
        %2535 = vmatprep.subr.bf16.mxu0 %v1698
        %2536 = vmatpush2.bf16.msra.mxu0 %v1697
        %2537 = vmatprep.subr.bf16.mxu0 %v1690
        %2538 = vmatpush2.bf16.msra.mxu0 %v1689
        %2539 = vmatprep.mubr.bf16.mxu0 %v337
        %2540 = vmatmul.mubr.bf16.gmra.mxu0 %v336
        %v2541 = vpop.f32.mrf.mxu0
        %v2542 = vadd.f32 0.0, %v2541
        %v2543 = vpop.f32.mrf.mxu0
        %v2544 = vadd.f32 0.0, %v2543
        %v2545 = vpop.f32.mrf.mxu0
        %v2546 = vpop.f32.mrf.mxu0
        %2547 = vdwg.mxu0
        %2548 = vmatprep.subr.bf16.mxu0 %v1810
        %2549 = vmatpush1.bf16.msra.mxu0 %v1809
        %2550 = vmatprep.subr.bf16.mxu0 %v1802
        %2551 = vmatpush1.bf16.msra.mxu0 %v1801
        %2552 = vmatprep.subr.bf16.mxu0 %v1794
        %2553 = vmatpush1.bf16.msra.mxu0 %v1793
        %2554 = vmatprep.subr.bf16.mxu0 %v1786
        %2555 = vmatpush1.bf16.msra.mxu0 %v1785
        %2556 = vmatprep.subr.bf16.mxu0 %v1778
        %2557 = vmatpush1.bf16.msra.mxu0 %v1777
        %2558 = vmatprep.subr.bf16.mxu0 %v1770
        %2559 = vmatpush1.bf16.msra.mxu0 %v1769
        %2560 = vmatprep.subr.bf16.mxu0 %v1762
        %2561 = vmatpush1.bf16.msra.mxu0 %v1761
        %2562 = vmatprep.subr.bf16.mxu0 %v1754
        %2563 = vmatpush1.bf16.msra.mxu0 %v1753
        %2564 = vmatprep.subr.bf16.mxu0 %v1874
        %2565 = vmatpush2.bf16.msra.mxu0 %v1873
        %2566 = vmatprep.subr.bf16.mxu0 %v1866
        %2567 = vmatpush2.bf16.msra.mxu0 %v1865
        %2568 = vmatprep.subr.bf16.mxu0 %v1858
        %2569 = vmatpush2.bf16.msra.mxu0 %v1857
        %2570 = vmatprep.subr.bf16.mxu0 %v1850
        %2571 = vmatpush2.bf16.msra.mxu0 %v1849
        %2572 = vmatprep.subr.bf16.mxu0 %v1842
        %2573 = vmatpush2.bf16.msra.mxu0 %v1841
        %2574 = vmatprep.subr.bf16.mxu0 %v1834
        %2575 = vmatpush2.bf16.msra.mxu0 %v1833
        %2576 = vmatprep.subr.bf16.mxu0 %v1826
        %2577 = vmatpush2.bf16.msra.mxu0 %v1825
        %2578 = vmatprep.subr.bf16.mxu0 %v1818
        %2579 = vmatpush2.bf16.msra.mxu0 %v1817
        %2580 = vmatprep.mubr.bf16.mxu0 %v339
        %2581 = vmatmul.mubr.bf16.gmra.mxu0 %v338
        %v2582 = vpop.f32.mrf.mxu0
        %v2583 = vadd.f32 %v2542, %v2582
        %v2584 = vpop.f32.mrf.mxu0
        %v2585 = vadd.f32 %v2544, %v2584
        %v2586 = vpop.f32.mrf.mxu0
        %v2587 = vpop.f32.mrf.mxu0
        %2588 = vdwg.mxu0
        %2589 = vmatprep.subr.bf16.mxu0 %v1938
        %2590 = vmatpush1.bf16.msra.mxu0 %v1937
        %2591 = vmatprep.subr.bf16.mxu0 %v1930
        %2592 = vmatpush1.bf16.msra.mxu0 %v1929
        %2593 = vmatprep.subr.bf16.mxu0 %v1922
        %2594 = vmatpush1.bf16.msra.mxu0 %v1921
        %2595 = vmatprep.subr.bf16.mxu0 %v1914
        %2596 = vmatpush1.bf16.msra.mxu0 %v1913
        %2597 = vmatprep.subr.bf16.mxu0 %v1906
        %2598 = vmatpush1.bf16.msra.mxu0 %v1905
        %2599 = vmatprep.subr.bf16.mxu0 %v1898
        %2600 = vmatpush1.bf16.msra.mxu0 %v1897
        %2601 = vmatprep.subr.bf16.mxu0 %v1890
        %2602 = vmatpush1.bf16.msra.mxu0 %v1889
        %2603 = vmatprep.subr.bf16.mxu0 %v1882
        %2604 = vmatpush1.bf16.msra.mxu0 %v1881
        %2605 = vmatprep.subr.bf16.mxu0 0
        %2606 = vmatpush2.bf16.msra.mxu0 0
        %2607 = vmatprep.subr.bf16.mxu0 0
        %2608 = vmatpush2.bf16.msra.mxu0 0
        %2609 = vmatprep.subr.bf16.mxu0 0
        %2610 = vmatpush2.bf16.msra.mxu0 0
        %2611 = vmatprep.subr.bf16.mxu0 0
        %2612 = vmatpush2.bf16.msra.mxu0 0
        %2613 = vmatprep.subr.bf16.mxu0 0
        %2614 = vmatpush2.bf16.msra.mxu0 0
        %2615 = vmatprep.subr.bf16.mxu0 0
        %2616 = vmatpush2.bf16.msra.mxu0 0
        %2617 = vmatprep.subr.bf16.mxu0 0
        %2618 = vmatpush2.bf16.msra.mxu0 0
        %2619 = vmatprep.subr.bf16.mxu0 0
        %2620 = vmatpush2.bf16.msra.mxu0 0
        %2621 = vmatprep.mubr.bf16.mxu0 0
        %2622 = vmatmul.mubr.bf16.gmra.mxu0 %v340
        %v2623 = vpop.f32.mrf.mxu0
        %v2624 = vadd.f32 %v2583, %v2623
        %v2625 = vpop.f32.mrf.mxu0
        %v2626 = vadd.f32 %v2585, %v2625
        %v2627 = vpop.f32.mrf.mxu0
        %v2628 = vpop.f32.mrf.mxu0
        %2629 = vdwg.mxu0
        %2630 = vmatprep.subr.bf16.mxu0 %v1684
        %2631 = vmatpush1.bf16.msra.mxu0 %v1683
        %2632 = vmatprep.subr.bf16.mxu0 %v1676
        %2633 = vmatpush1.bf16.msra.mxu0 %v1675
        %2634 = vmatprep.subr.bf16.mxu0 %v1668
        %2635 = vmatpush1.bf16.msra.mxu0 %v1667
        %2636 = vmatprep.subr.bf16.mxu0 %v1660
        %2637 = vmatpush1.bf16.msra.mxu0 %v1659
        %2638 = vmatprep.subr.bf16.mxu0 %v1652
        %2639 = vmatpush1.bf16.msra.mxu0 %v1651
        %2640 = vmatprep.subr.bf16.mxu0 %v1644
        %2641 = vmatpush1.bf16.msra.mxu0 %v1643
        %2642 = vmatprep.subr.bf16.mxu0 %v1636
        %2643 = vmatpush1.bf16.msra.mxu0 %v1635
        %2644 = vmatprep.subr.bf16.mxu0 %v1628
        %2645 = vmatpush1.bf16.msra.mxu0 %v1627
        %2646 = vmatprep.subr.bf16.mxu0 %v1748
        %2647 = vmatpush2.bf16.msra.mxu0 %v1747
        %2648 = vmatprep.subr.bf16.mxu0 %v1740
        %2649 = vmatpush2.bf16.msra.mxu0 %v1739
        %2650 = vmatprep.subr.bf16.mxu0 %v1732
        %2651 = vmatpush2.bf16.msra.mxu0 %v1731
        %2652 = vmatprep.subr.bf16.mxu0 %v1724
        %2653 = vmatpush2.bf16.msra.mxu0 %v1723
        %2654 = vmatprep.subr.bf16.mxu0 %v1716
        %2655 = vmatpush2.bf16.msra.mxu0 %v1715
        %2656 = vmatprep.subr.bf16.mxu0 %v1708
        %2657 = vmatpush2.bf16.msra.mxu0 %v1707
        %2658 = vmatprep.subr.bf16.mxu0 %v1700
        %2659 = vmatpush2.bf16.msra.mxu0 %v1699
        %2660 = vmatprep.subr.bf16.mxu0 %v1692
        %2661 = vmatpush2.bf16.msra.mxu0 %v1691
        %2662 = vmatprep.mubr.bf16.mxu0 %v337
        %2663 = vmatmul.mubr.bf16.gmra.mxu0 %v336
        %v2664 = vpop.f32.mrf.mxu0
        %v2665 = vadd.f32 0.0, %v2664
        %v2666 = vpop.f32.mrf.mxu0
        %v2667 = vadd.f32 0.0, %v2666
        %v2668 = vpop.f32.mrf.mxu0
        %v2669 = vpop.f32.mrf.mxu0
        %2670 = vdwg.mxu0
        %2671 = vmatprep.subr.bf16.mxu0 %v1812
        %2672 = vmatpush1.bf16.msra.mxu0 %v1811
        %2673 = vmatprep.subr.bf16.mxu0 %v1804
        %2674 = vmatpush1.bf16.msra.mxu0 %v1803
        %2675 = vmatprep.subr.bf16.mxu0 %v1796
        %2676 = vmatpush1.bf16.msra.mxu0 %v1795
        %2677 = vmatprep.subr.bf16.mxu0 %v1788
        %2678 = vmatpush1.bf16.msra.mxu0 %v1787
        %2679 = vmatprep.subr.bf16.mxu0 %v1780
        %2680 = vmatpush1.bf16.msra.mxu0 %v1779
        %2681 = vmatprep.subr.bf16.mxu0 %v1772
        %2682 = vmatpush1.bf16.msra.mxu0 %v1771
        %2683 = vmatprep.subr.bf16.mxu0 %v1764
        %2684 = vmatpush1.bf16.msra.mxu0 %v1763
        %2685 = vmatprep.subr.bf16.mxu0 %v1756
        %2686 = vmatpush1.bf16.msra.mxu0 %v1755
        %2687 = vmatprep.subr.bf16.mxu0 %v1876
        %2688 = vmatpush2.bf16.msra.mxu0 %v1875
        %2689 = vmatprep.subr.bf16.mxu0 %v1868
        %2690 = vmatpush2.bf16.msra.mxu0 %v1867
        %2691 = vmatprep.subr.bf16.mxu0 %v1860
        %2692 = vmatpush2.bf16.msra.mxu0 %v1859
        %2693 = vmatprep.subr.bf16.mxu0 %v1852
        %2694 = vmatpush2.bf16.msra.mxu0 %v1851
        %2695 = vmatprep.subr.bf16.mxu0 %v1844
        %2696 = vmatpush2.bf16.msra.mxu0 %v1843
        %2697 = vmatprep.subr.bf16.mxu0 %v1836
        %2698 = vmatpush2.bf16.msra.mxu0 %v1835
        %2699 = vmatprep.subr.bf16.mxu0 %v1828
        %2700 = vmatpush2.bf16.msra.mxu0 %v1827
        %2701 = vmatprep.subr.bf16.mxu0 %v1820
        %2702 = vmatpush2.bf16.msra.mxu0 %v1819
        %2703 = vmatprep.mubr.bf16.mxu0 %v339
        %2704 = vmatmul.mubr.bf16.gmra.mxu0 %v338
        %v2705 = vpop.f32.mrf.mxu0
        %v2706 = vadd.f32 %v2665, %v2705
        %v2707 = vpop.f32.mrf.mxu0
        %v2708 = vadd.f32 %v2667, %v2707
        %v2709 = vpop.f32.mrf.mxu0
        %v2710 = vpop.f32.mrf.mxu0
        %2711 = vdwg.mxu0
        %2712 = vmatprep.subr.bf16.mxu0 %v1940
        %2713 = vmatpush1.bf16.msra.mxu0 %v1939
        %2714 = vmatprep.subr.bf16.mxu0 %v1932
        %2715 = vmatpush1.bf16.msra.mxu0 %v1931
        %2716 = vmatprep.subr.bf16.mxu0 %v1924
        %2717 = vmatpush1.bf16.msra.mxu0 %v1923
        %2718 = vmatprep.subr.bf16.mxu0 %v1916
        %2719 = vmatpush1.bf16.msra.mxu0 %v1915
        %2720 = vmatprep.subr.bf16.mxu0 %v1908
        %2721 = vmatpush1.bf16.msra.mxu0 %v1907
        %2722 = vmatprep.subr.bf16.mxu0 %v1900
        %2723 = vmatpush1.bf16.msra.mxu0 %v1899
        %2724 = vmatprep.subr.bf16.mxu0 %v1892
        %2725 = vmatpush1.bf16.msra.mxu0 %v1891
        %2726 = vmatprep.subr.bf16.mxu0 %v1884
        %2727 = vmatpush1.bf16.msra.mxu0 %v1883
        %2728 = vmatprep.subr.bf16.mxu0 0
        %2729 = vmatpush2.bf16.msra.mxu0 0
        %2730 = vmatprep.subr.bf16.mxu0 0
        %2731 = vmatpush2.bf16.msra.mxu0 0
        %2732 = vmatprep.subr.bf16.mxu0 0
        %2733 = vmatpush2.bf16.msra.mxu0 0
        %2734 = vmatprep.subr.bf16.mxu0 0
        %2735 = vmatpush2.bf16.msra.mxu0 0
        %2736 = vmatprep.subr.bf16.mxu0 0
        %2737 = vmatpush2.bf16.msra.mxu0 0
        %2738 = vmatprep.subr.bf16.mxu0 0
        %2739 = vmatpush2.bf16.msra.mxu0 0
        %2740 = vmatprep.subr.bf16.mxu0 0
        %2741 = vmatpush2.bf16.msra.mxu0 0
        %2742 = vmatprep.subr.bf16.mxu0 0
        %2743 = vmatpush2.bf16.msra.mxu0 0
        %2744 = vmatprep.mubr.bf16.mxu0 0
        %2745 = vmatmul.mubr.bf16.gmra.mxu0 %v340
        %v2746 = vpop.f32.mrf.mxu0
        %v2747 = vadd.f32 %v2706, %v2746
        %v2748 = vpop.f32.mrf.mxu0
        %v2749 = vadd.f32 %v2708, %v2748
        %v2750 = vpop.f32.mrf.mxu0
        %v2751 = vpop.f32.mrf.mxu0
        %2752 = vdwg.mxu0
        %v2761 = vcombine.low %v2378, %v2380
        %v2762 = vcombine.low %v2501, %v2503
        %v2764 = vunpack.c.l.s4 1983009808
        %v2765 = vunpack.c.0.s8 %v2764
        %v2766 = vlaneseq
        %v2767 = vshrl.u32 %v2766, 7
        %v2768 = vsub.s32 %v2765, %v2767
        %v2769 = vrot.slane %v2761, %v2768
        %v2771 = vunpack.c.l.s4 1983009808
        %v2772 = vunpack.c.0.s8 %v2771
        %v2773 = vlaneseq
        %v2774 = vshrl.u32 %v2773, 7
        %v2775 = vsub.s32 %v2772, %v2774
        %v2776 = vrot.slane %v2762, %v2775
        %v2777 = vcombine.low %v2769, %v2776
        %v2778 = vcombine.low %v2624, %v2626
        %v2779 = vcombine.low %v2747, %v2749
        %v2781 = vunpack.c.l.s4 1983009808
        %v2782 = vunpack.c.0.s8 %v2781
        %v2783 = vlaneseq
        %v2784 = vshrl.u32 %v2783, 7
        %v2785 = vsub.s32 %v2782, %v2784
        %v2786 = vrot.slane %v2778, %v2785
        %v2788 = vunpack.c.l.s4 1983009808
        %v2789 = vunpack.c.0.s8 %v2788
        %v2790 = vlaneseq
        %v2791 = vshrl.u32 %v2790, 7
        %v2792 = vsub.s32 %v2789, %v2791
        %v2793 = vrot.slane %v2779, %v2792
        %v2794 = vcombine.low %v2786, %v2793
        %v2797 = vadd.f32 %v301, %v2777
        %v2798 = vadd.f32 %v302, %v2794
        %2799 = vst [vmem:[#allocation2] sm:$0xff] %v2797
        %2800 = vst [vmem:[#allocation2 + $0x8] sm:$0xff] %v2798
        %p2801 = scmp.eq.s32.totalorder %s21, 4
        // Predicated region
        $region53: #{forward.7} parent=47 // pred_check
          %p2802 = pneg %p2801
        $region54: #{forward.7} parent=47 // pred_check_branch
          %2804 = sbr.rel (%p2802) target = $region56
        $region55: #{forward.7} parent=47 // pred_region
          %v2805 = vld [vmem:[#allocation2] sm:$0xff]
          %v2806 = vld [vmem:[#allocation2 + $0x8] sm:$0xff]
          %v2807 = vld [vmem:[%s2] sm:$0xff]
          %v2809 = vlaneseq
          %v2810 = vshrl.u32 %v2809, 7
          %v2811 = vsub.s32 0, %v2810
          %v2812 = vrot.slane %v2807, %v2811
          %v2813 = vlaneseq
          %v2814 = vshrl.u32 %v2813, 7
          %v2815 = vsub.s32 1, %v2814
          %v2816 = vrot.slane %v2807, %v2815
          %v2817 = vlaneseq
          %v2818 = vshrl.u32 %v2817, 7
          %v2819 = vsub.s32 2, %v2818
          %v2820 = vrot.slane %v2807, %v2819
          %v2821 = vlaneseq
          %v2822 = vshrl.u32 %v2821, 7
          %v2823 = vsub.s32 3, %v2822
          %v2824 = vrot.slane %v2807, %v2823
          %v2825 = vlaneseq
          %v2826 = vshrl.u32 %v2825, 7
          %v2827 = vsub.s32 4, %v2826
          %v2828 = vrot.slane %v2807, %v2827
          %v2829 = vlaneseq
          %v2830 = vshrl.u32 %v2829, 7
          %v2831 = vsub.s32 5, %v2830
          %v2832 = vrot.slane %v2807, %v2831
          %v2833 = vlaneseq
          %v2834 = vshrl.u32 %v2833, 7
          %v2835 = vsub.s32 6, %v2834
          %v2836 = vrot.slane %v2807, %v2835
          %v2837 = vlaneseq
          %v2838 = vshrl.u32 %v2837, 7
          %v2839 = vsub.s32 7, %v2838
          %v2840 = vrot.slane %v2807, %v2839
          %v2841 = vcombine.low %v2812, %v2816
          %v2842 = vcombine.low %v2820, %v2824
          %v2844 = vunpack.c.l.s4 1983009808
          %v2845 = vunpack.c.0.s8 %v2844
          %v2846 = vlaneseq
          %v2847 = vshrl.u32 %v2846, 7
          %v2848 = vsub.s32 %v2845, %v2847
          %v2849 = vrot.slane %v2841, %v2848
          %v2851 = vunpack.c.l.s4 1983009808
          %v2852 = vunpack.c.0.s8 %v2851
          %v2853 = vlaneseq
          %v2854 = vshrl.u32 %v2853, 7
          %v2855 = vsub.s32 %v2852, %v2854
          %v2856 = vrot.slane %v2842, %v2855
          %v2857 = vcombine.low %v2849, %v2856
          %v2858 = vcombine.low %v2828, %v2832
          %v2859 = vcombine.low %v2836, %v2840
          %v2861 = vunpack.c.l.s4 1983009808
          %v2862 = vunpack.c.0.s8 %v2861
          %v2863 = vlaneseq
          %v2864 = vshrl.u32 %v2863, 7
          %v2865 = vsub.s32 %v2862, %v2864
          %v2866 = vrot.slane %v2858, %v2865
          %v2868 = vunpack.c.l.s4 1983009808
          %v2869 = vunpack.c.0.s8 %v2868
          %v2870 = vlaneseq
          %v2871 = vshrl.u32 %v2870, 7
          %v2872 = vsub.s32 %v2869, %v2871
          %v2873 = vrot.slane %v2859, %v2872
          %v2874 = vcombine.low %v2866, %v2873
          %v2877 = vadd.f32 %v2805, %v2857
          %v2878 = vadd.f32 %v2806, %v2874
          %v2879 = vmax.f32 %v2877, 0.0
          %v2880 = vmax.f32 %v2878, 0.0
          %v2881 = vld [vmem:[%s3] sm:$0xff]
          %v2882 = vld [vmem:[%s3 + $0x8] sm:$0xff]
          %v2883 = vld [vmem:[%s3 + $0x10] sm:$0xff]
          %v2884 = vld [vmem:[%s3 + $0x18] sm:$0xff]
          %v2885 = vld [vmem:[%s3 + $0x20] sm:$0xff]
          %v2886 = vld [vmem:[%s3 + $0x28] sm:$0xff]
          %v2887 = vld [vmem:[%s3 + $0x30] sm:$0xff]
          %v2888 = vld [vmem:[%s3 + $0x38] sm:$0xff]
          %v2889 = vld [vmem:[%s3 + $0x40] sm:$0xff]
          %v2890 = vld [vmem:[%s3 + $0x48] sm:$0xff]
          %v2891 = vld [vmem:[%s3 + $0x50] sm:$0xff]
          %v2892 = vld [vmem:[%s3 + $0x58] sm:$0xff]
          %v2893 = vld [vmem:[%s3 + $0x60] sm:$0xff]
          %v2894 = vld [vmem:[%s3 + $0x68] sm:$0xff]
          %v2895 = vld [vmem:[%s3 + $0x70] sm:$0xff]
          %v2896 = vld [vmem:[%s3 + $0x78] sm:$0xff]
          %v2897 = vld [vmem:[%s3 + $0x80] sm:$0xff]
          %v2898 = vld [vmem:[%s3 + $0x88] sm:$0xff]
          %v2899 = vld [vmem:[%s3 + $0x90] sm:$0xff]
          %v2900 = vld [vmem:[%s3 + $0x98] sm:$0xff]
          %v2901 = vld [vmem:[%s3 + $0xa0] sm:$0xff]
          %v2902 = vld [vmem:[%s3 + $0xa8] sm:$0xff]
          %v2903 = vld [vmem:[%s3 + $0xb0] sm:$0xff]
          %v2904 = vld [vmem:[%s3 + $0xb8] sm:$0xff]
          %v2905 = vld [vmem:[%s3 + $0xc0] sm:$0xff]
          %v2906 = vld [vmem:[%s3 + $0xc8] sm:$0xff]
          %v2907 = vld [vmem:[%s3 + $0xd0] sm:$0xff]
          %v2908 = vld [vmem:[%s3 + $0xd8] sm:$0xff]
          %v2909 = vld [vmem:[%s3 + $0xe0] sm:$0xff]
          %v2910 = vld [vmem:[%s3 + $0xe8] sm:$0xff]
          %v2911 = vld [vmem:[%s3 + $0xf0] sm:$0xff]
          %v2912 = vld [vmem:[%s3 + $0xf8] sm:$0xff]
          %v2913 = vld [vmem:[%s3 + $0x100] sm:$0xff]
          %v2914 = vld [vmem:[%s3 + $0x108] sm:$0xff]
          %v2915 = vld [vmem:[%s3 + $0x110] sm:$0xff]
          %v2916 = vld [vmem:[%s3 + $0x118] sm:$0xff]
          %v2917 = vld [vmem:[%s3 + $0x120] sm:$0xff]
          %v2918 = vld [vmem:[%s3 + $0x128] sm:$0xff]
          %v2919 = vld [vmem:[%s3 + $0x130] sm:$0xff]
          %v2920 = vld [vmem:[%s3 + $0x138] sm:$0xff]
          %v2921 = vld [vmem:[%s3 + $0x140] sm:$0xff]
          %v2922 = vld [vmem:[%s3 + $0x148] sm:$0xff]
          %v2923 = vld [vmem:[%s3 + $0x150] sm:$0xff]
          %v2924 = vld [vmem:[%s3 + $0x158] sm:$0xff]
          %v2925 = vld [vmem:[%s3 + $0x160] sm:$0xff]
          %v2926 = vld [vmem:[%s3 + $0x168] sm:$0xff]
          %v2927 = vld [vmem:[%s3 + $0x170] sm:$0xff]
          %v2928 = vld [vmem:[%s3 + $0x178] sm:$0xff]
          %v2929 = vld [vmem:[%s3 + $0x180] sm:$0xff]
          %v2930 = vld [vmem:[%s3 + $0x188] sm:$0xff]
          %v2931 = vld [vmem:[%s3 + $0x190] sm:$0xff]
          %v2932 = vld [vmem:[%s3 + $0x198] sm:$0xff]
          %v2933 = vld [vmem:[%s3 + $0x1a0] sm:$0xff]
          %v2934 = vld [vmem:[%s3 + $0x1a8] sm:$0xff]
          %v2935 = vld [vmem:[%s3 + $0x1b0] sm:$0xff]
          %v2936 = vld [vmem:[%s3 + $0x1b8] sm:$0xff]
          %v2937 = vld [vmem:[%s3 + $0x1c0] sm:$0xff]
          %v2938 = vld [vmem:[%s3 + $0x1c8] sm:$0xff]
          %v2939 = vld [vmem:[%s3 + $0x1d0] sm:$0xff]
          %v2940 = vld [vmem:[%s3 + $0x1d8] sm:$0xff]
          %v2941 = vld [vmem:[%s3 + $0x1e0] sm:$0xff]
          %v2942 = vld [vmem:[%s3 + $0x1e8] sm:$0xff]
          %v2943 = vld [vmem:[%s3 + $0x1f0] sm:$0xff]
          %v2944 = vld [vmem:[%s3 + $0x1f8] sm:$0xff]
          %v2945 = vld [vmem:[#allocation3] sm:$0x1]
          %v2947 = vlaneseq
          %v2948 = vshrl.u32 %v2947, 7
          %v2949 = vsub.s32 0, %v2948
          %v2950 = vrot.slane %v2945, %v2949
          %v2953 = vcombine.high %v2879, %v2879
          %v2955 = vunpack.c.l.s4 1983009808
          %v2956 = vunpack.c.0.s8 %v2955
          %v2957 = vlaneseq
          %v2958 = vshrl.u32 %v2957, 7
          %v2959 = vsub.s32 %v2956, %v2958
          %v2960 = vrot.slane %v2879, %v2959
          %v2962 = vunpack.c.l.s4 1983009808
          %v2963 = vunpack.c.0.s8 %v2962
          %v2964 = vlaneseq
          %v2965 = vshrl.u32 %v2964, 7
          %v2966 = vsub.s32 %v2963, %v2965
          %v2967 = vrot.slane %v2953, %v2966
          %v2968 = vcombine.high %v2960, %v2960
          %v2969 = vcombine.high %v2967, %v2967
          %2974 = vmatprep.subr.mxu0 0.0
          %2975 = vmatpush1.msra.mxu0 %v2896
          %2976 = vmatprep.subr.mxu0 0.0
          %2977 = vmatpush1.msra.mxu0 %v2895
          %2978 = vmatprep.subr.mxu0 0.0
          %2979 = vmatpush1.msra.mxu0 %v2894
          %2980 = vmatprep.subr.mxu0 0.0
          %2981 = vmatpush1.msra.mxu0 %v2893
          %2982 = vmatprep.subr.mxu0 0.0
          %2983 = vmatpush1.msra.mxu0 %v2892
          %2984 = vmatprep.subr.mxu0 0.0
          %2985 = vmatpush1.msra.mxu0 %v2891
          %2986 = vmatprep.subr.mxu0 0.0
          %2987 = vmatpush1.msra.mxu0 %v2890
          %2988 = vmatprep.subr.mxu0 0.0
          %2989 = vmatpush1.msra.mxu0 %v2889
          %2990 = vmatprep.subr.mxu0 0.0
          %2991 = vmatpush1.msra.mxu0 %v2888
          %2992 = vmatprep.subr.mxu0 0.0
          %2993 = vmatpush1.msra.mxu0 %v2887
          %2994 = vmatprep.subr.mxu0 0.0
          %2995 = vmatpush1.msra.mxu0 %v2886
          %2996 = vmatprep.subr.mxu0 0.0
          %2997 = vmatpush1.msra.mxu0 %v2885
          %2998 = vmatprep.subr.mxu0 0.0
          %2999 = vmatpush1.msra.mxu0 %v2884
          %3000 = vmatprep.subr.mxu0 0.0
          %3001 = vmatpush1.msra.mxu0 %v2883
          %3002 = vmatprep.subr.mxu0 0.0
          %3003 = vmatpush1.msra.mxu0 %v2882
          %3004 = vmatprep.subr.mxu0 0.0
          %3005 = vmatpush1.msra.mxu0 %v2881
          %3006 = vmatprep.subr.mxu0 0.0
          %3007 = vmatpush2.msra.mxu0 %v2912
          %3008 = vmatprep.subr.mxu0 0.0
          %3009 = vmatpush2.msra.mxu0 %v2911
          %3010 = vmatprep.subr.mxu0 0.0
          %3011 = vmatpush2.msra.mxu0 %v2910
          %3012 = vmatprep.subr.mxu0 0.0
          %3013 = vmatpush2.msra.mxu0 %v2909
          %3014 = vmatprep.subr.mxu0 0.0
          %3015 = vmatpush2.msra.mxu0 %v2908
          %3016 = vmatprep.subr.mxu0 0.0
          %3017 = vmatpush2.msra.mxu0 %v2907
          %3018 = vmatprep.subr.mxu0 0.0
          %3019 = vmatpush2.msra.mxu0 %v2906
          %3020 = vmatprep.subr.mxu0 0.0
          %3021 = vmatpush2.msra.mxu0 %v2905
          %3022 = vmatprep.subr.mxu0 0.0
          %3023 = vmatpush2.msra.mxu0 %v2904
          %3024 = vmatprep.subr.mxu0 0.0
          %3025 = vmatpush2.msra.mxu0 %v2903
          %3026 = vmatprep.subr.mxu0 0.0
          %3027 = vmatpush2.msra.mxu0 %v2902
          %3028 = vmatprep.subr.mxu0 0.0
          %3029 = vmatpush2.msra.mxu0 %v2901
          %3030 = vmatprep.subr.mxu0 0.0
          %3031 = vmatpush2.msra.mxu0 %v2900
          %3032 = vmatprep.subr.mxu0 0.0
          %3033 = vmatpush2.msra.mxu0 %v2899
          %3034 = vmatprep.subr.mxu0 0.0
          %3035 = vmatpush2.msra.mxu0 %v2898
          %3036 = vmatprep.subr.mxu0 0.0
          %3037 = vmatpush2.msra.mxu0 %v2897
          %3038 = vmatprep.mubr.f32.mxu0 %v2968
          %3039 = vmatmul.mubr.f32.gmra.mxu0 %v2960
          %v3040 = vpop.f32.mrf.mxu0
          %v3041 = vadd.f32 %v2950, %v3040
          %v3042 = vpop.f32.mrf.mxu0
          %3043 = vdwg.mxu0
          %3044 = vmatprep.subr.mxu0 0.0
          %3045 = vmatpush1.msra.mxu0 %v2928
          %3046 = vmatprep.subr.mxu0 0.0
          %3047 = vmatpush1.msra.mxu0 %v2927
          %3048 = vmatprep.subr.mxu0 0.0
          %3049 = vmatpush1.msra.mxu0 %v2926
          %3050 = vmatprep.subr.mxu0 0.0
          %3051 = vmatpush1.msra.mxu0 %v2925
          %3052 = vmatprep.subr.mxu0 0.0
          %3053 = vmatpush1.msra.mxu0 %v2924
          %3054 = vmatprep.subr.mxu0 0.0
          %3055 = vmatpush1.msra.mxu0 %v2923
          %3056 = vmatprep.subr.mxu0 0.0
          %3057 = vmatpush1.msra.mxu0 %v2922
          %3058 = vmatprep.subr.mxu0 0.0
          %3059 = vmatpush1.msra.mxu0 %v2921
          %3060 = vmatprep.subr.mxu0 0.0
          %3061 = vmatpush1.msra.mxu0 %v2920
          %3062 = vmatprep.subr.mxu0 0.0
          %3063 = vmatpush1.msra.mxu0 %v2919
          %3064 = vmatprep.subr.mxu0 0.0
          %3065 = vmatpush1.msra.mxu0 %v2918
          %3066 = vmatprep.subr.mxu0 0.0
          %3067 = vmatpush1.msra.mxu0 %v2917
          %3068 = vmatprep.subr.mxu0 0.0
          %3069 = vmatpush1.msra.mxu0 %v2916
          %3070 = vmatprep.subr.mxu0 0.0
          %3071 = vmatpush1.msra.mxu0 %v2915
          %3072 = vmatprep.subr.mxu0 0.0
          %3073 = vmatpush1.msra.mxu0 %v2914
          %3074 = vmatprep.subr.mxu0 0.0
          %3075 = vmatpush1.msra.mxu0 %v2913
          %3076 = vmatprep.subr.mxu0 0.0
          %3077 = vmatpush2.msra.mxu0 %v2944
          %3078 = vmatprep.subr.mxu0 0.0
          %3079 = vmatpush2.msra.mxu0 %v2943
          %3080 = vmatprep.subr.mxu0 0.0
          %3081 = vmatpush2.msra.mxu0 %v2942
          %3082 = vmatprep.subr.mxu0 0.0
          %3083 = vmatpush2.msra.mxu0 %v2941
          %3084 = vmatprep.subr.mxu0 0.0
          %3085 = vmatpush2.msra.mxu0 %v2940
          %3086 = vmatprep.subr.mxu0 0.0
          %3087 = vmatpush2.msra.mxu0 %v2939
          %3088 = vmatprep.subr.mxu0 0.0
          %3089 = vmatpush2.msra.mxu0 %v2938
          %3090 = vmatprep.subr.mxu0 0.0
          %3091 = vmatpush2.msra.mxu0 %v2937
          %3092 = vmatprep.subr.mxu0 0.0
          %3093 = vmatpush2.msra.mxu0 %v2936
          %3094 = vmatprep.subr.mxu0 0.0
          %3095 = vmatpush2.msra.mxu0 %v2935
          %3096 = vmatprep.subr.mxu0 0.0
          %3097 = vmatpush2.msra.mxu0 %v2934
          %3098 = vmatprep.subr.mxu0 0.0
          %3099 = vmatpush2.msra.mxu0 %v2933
          %3100 = vmatprep.subr.mxu0 0.0
          %3101 = vmatpush2.msra.mxu0 %v2932
          %3102 = vmatprep.subr.mxu0 0.0
          %3103 = vmatpush2.msra.mxu0 %v2931
          %3104 = vmatprep.subr.mxu0 0.0
          %3105 = vmatpush2.msra.mxu0 %v2930
          %3106 = vmatprep.subr.mxu0 0.0
          %3107 = vmatpush2.msra.mxu0 %v2929
          %3108 = vmatprep.mubr.f32.mxu0 %v2969
          %3109 = vmatmul.mubr.f32.gmra.mxu0 %v2967
          %v3110 = vpop.f32.mrf.mxu0
          %v3111 = vadd.f32 %v3041, %v3110
          %v3112 = vpop.f32.mrf.mxu0
          %3113 = vdwg.mxu0
          %v3114 = vld [vmem:[%s5] sm:$0xff]
          %v3115 = vld [vmem:[%s5 + $0x8] sm:$0xff]
          %v3116 = vld [vmem:[%s5 + $0x10] sm:$0xff]
          %v3117 = vld [vmem:[%s5 + $0x18] sm:$0xff]
          %v3118 = vld [vmem:[%s5 + $0x20] sm:$0xff]
          %v3119 = vld [vmem:[%s5 + $0x28] sm:$0xff]
          %v3120 = vld [vmem:[%s5 + $0x30] sm:$0xff]
          %v3121 = vld [vmem:[%s5 + $0x38] sm:$0xff]
          %v3122 = vld [vmem:[%s5 + $0x40] sm:$0xff]
          %v3123 = vld [vmem:[%s5 + $0x48] sm:$0xff]
          %v3124 = vld [vmem:[%s5 + $0x50] sm:$0xff]
          %v3125 = vld [vmem:[%s5 + $0x58] sm:$0xff]
          %v3126 = vld [vmem:[%s5 + $0x60] sm:$0xff]
          %v3127 = vld [vmem:[%s5 + $0x68] sm:$0xff]
          %v3128 = vld [vmem:[%s5 + $0x70] sm:$0xff]
          %v3129 = vld [vmem:[%s5 + $0x78] sm:$0xff]
          %v3130 = vld [vmem:[%s5 + $0x80] sm:$0xff]
          %v3131 = vld [vmem:[%s5 + $0x88] sm:$0xff]
          %v3132 = vld [vmem:[%s5 + $0x90] sm:$0xff]
          %v3133 = vld [vmem:[%s5 + $0x98] sm:$0xff]
          %v3134 = vld [vmem:[%s5 + $0xa0] sm:$0xff]
          %v3135 = vld [vmem:[%s5 + $0xa8] sm:$0xff]
          %v3136 = vld [vmem:[%s5 + $0xb0] sm:$0xff]
          %v3137 = vld [vmem:[%s5 + $0xb8] sm:$0xff]
          %v3138 = vld [vmem:[%s5 + $0xc0] sm:$0xff]
          %v3139 = vld [vmem:[%s5 + $0xc8] sm:$0xff]
          %v3140 = vld [vmem:[%s5 + $0xd0] sm:$0xff]
          %v3141 = vld [vmem:[%s5 + $0xd8] sm:$0xff]
          %v3142 = vld [vmem:[%s5 + $0xe0] sm:$0xff]
          %v3143 = vld [vmem:[%s5 + $0xe8] sm:$0xff]
          %v3144 = vld [vmem:[%s5 + $0xf0] sm:$0xff]
          %v3145 = vld [vmem:[%s5 + $0xf8] sm:$0xff]
          %v3146 = vld [vmem:[%s5 + $0x100] sm:$0xff]
          %v3147 = vld [vmem:[%s5 + $0x108] sm:$0xff]
          %v3148 = vld [vmem:[%s5 + $0x110] sm:$0xff]
          %v3149 = vld [vmem:[%s5 + $0x118] sm:$0xff]
          %v3150 = vld [vmem:[%s5 + $0x120] sm:$0xff]
          %v3151 = vld [vmem:[%s5 + $0x128] sm:$0xff]
          %v3152 = vld [vmem:[%s5 + $0x130] sm:$0xff]
          %v3153 = vld [vmem:[%s5 + $0x138] sm:$0xff]
          %v3154 = vld [vmem:[%s5 + $0x140] sm:$0xff]
          %v3155 = vld [vmem:[%s5 + $0x148] sm:$0xff]
          %v3156 = vld [vmem:[%s5 + $0x150] sm:$0xff]
          %v3157 = vld [vmem:[%s5 + $0x158] sm:$0xff]
          %v3158 = vld [vmem:[%s5 + $0x160] sm:$0xff]
          %v3159 = vld [vmem:[%s5 + $0x168] sm:$0xff]
          %v3160 = vld [vmem:[%s5 + $0x170] sm:$0xff]
          %v3161 = vld [vmem:[%s5 + $0x178] sm:$0xff]
          %v3162 = vld [vmem:[%s5 + $0x180] sm:$0xff]
          %v3163 = vld [vmem:[%s5 + $0x188] sm:$0xff]
          %v3164 = vld [vmem:[%s5 + $0x190] sm:$0xff]
          %v3165 = vld [vmem:[%s5 + $0x198] sm:$0xff]
          %v3166 = vld [vmem:[%s5 + $0x1a0] sm:$0xff]
          %v3167 = vld [vmem:[%s5 + $0x1a8] sm:$0xff]
          %v3168 = vld [vmem:[%s5 + $0x1b0] sm:$0xff]
          %v3169 = vld [vmem:[%s5 + $0x1b8] sm:$0xff]
          %v3170 = vld [vmem:[%s5 + $0x1c0] sm:$0xff]
          %v3171 = vld [vmem:[%s5 + $0x1c8] sm:$0xff]
          %v3172 = vld [vmem:[%s5 + $0x1d0] sm:$0xff]
          %v3173 = vld [vmem:[%s5 + $0x1d8] sm:$0xff]
          %v3174 = vld [vmem:[%s5 + $0x1e0] sm:$0xff]
          %v3175 = vld [vmem:[%s5 + $0x1e8] sm:$0xff]
          %v3176 = vld [vmem:[%s5 + $0x1f0] sm:$0xff]
          %v3177 = vld [vmem:[%s5 + $0x1f8] sm:$0xff]
          %v3178 = vld [vmem:[%s6] sm:$0x1]
          %v3180 = vlaneseq
          %v3181 = vshrl.u32 %v3180, 7
          %v3182 = vsub.s32 0, %v3181
          %v3183 = vrot.slane %v3178, %v3182
          %v3186 = vcombine.high %v2880, %v2880
          %v3188 = vunpack.c.l.s4 1983009808
          %v3189 = vunpack.c.0.s8 %v3188
          %v3190 = vlaneseq
          %v3191 = vshrl.u32 %v3190, 7
          %v3192 = vsub.s32 %v3189, %v3191
          %v3193 = vrot.slane %v2880, %v3192
          %v3195 = vunpack.c.l.s4 1983009808
          %v3196 = vunpack.c.0.s8 %v3195
          %v3197 = vlaneseq
          %v3198 = vshrl.u32 %v3197, 7
          %v3199 = vsub.s32 %v3196, %v3198
          %v3200 = vrot.slane %v3186, %v3199
          %v3201 = vcombine.high %v3193, %v3193
          %v3202 = vcombine.high %v3200, %v3200
          %3207 = vmatprep.subr.mxu0 0.0
          %3208 = vmatpush1.msra.mxu0 %v3129
          %3209 = vmatprep.subr.mxu0 0.0
          %3210 = vmatpush1.msra.mxu0 %v3128
          %3211 = vmatprep.subr.mxu0 0.0
          %3212 = vmatpush1.msra.mxu0 %v3127
          %3213 = vmatprep.subr.mxu0 0.0
          %3214 = vmatpush1.msra.mxu0 %v3126
          %3215 = vmatprep.subr.mxu0 0.0
          %3216 = vmatpush1.msra.mxu0 %v3125
          %3217 = vmatprep.subr.mxu0 0.0
          %3218 = vmatpush1.msra.mxu0 %v3124
          %3219 = vmatprep.subr.mxu0 0.0
          %3220 = vmatpush1.msra.mxu0 %v3123
          %3221 = vmatprep.subr.mxu0 0.0
          %3222 = vmatpush1.msra.mxu0 %v3122
          %3223 = vmatprep.subr.mxu0 0.0
          %3224 = vmatpush1.msra.mxu0 %v3121
          %3225 = vmatprep.subr.mxu0 0.0
          %3226 = vmatpush1.msra.mxu0 %v3120
          %3227 = vmatprep.subr.mxu0 0.0
          %3228 = vmatpush1.msra.mxu0 %v3119
          %3229 = vmatprep.subr.mxu0 0.0
          %3230 = vmatpush1.msra.mxu0 %v3118
          %3231 = vmatprep.subr.mxu0 0.0
          %3232 = vmatpush1.msra.mxu0 %v3117
          %3233 = vmatprep.subr.mxu0 0.0
          %3234 = vmatpush1.msra.mxu0 %v3116
          %3235 = vmatprep.subr.mxu0 0.0
          %3236 = vmatpush1.msra.mxu0 %v3115
          %3237 = vmatprep.subr.mxu0 0.0
          %3238 = vmatpush1.msra.mxu0 %v3114
          %3239 = vmatprep.subr.mxu0 0.0
          %3240 = vmatpush2.msra.mxu0 %v3145
          %3241 = vmatprep.subr.mxu0 0.0
          %3242 = vmatpush2.msra.mxu0 %v3144
          %3243 = vmatprep.subr.mxu0 0.0
          %3244 = vmatpush2.msra.mxu0 %v3143
          %3245 = vmatprep.subr.mxu0 0.0
          %3246 = vmatpush2.msra.mxu0 %v3142
          %3247 = vmatprep.subr.mxu0 0.0
          %3248 = vmatpush2.msra.mxu0 %v3141
          %3249 = vmatprep.subr.mxu0 0.0
          %3250 = vmatpush2.msra.mxu0 %v3140
          %3251 = vmatprep.subr.mxu0 0.0
          %3252 = vmatpush2.msra.mxu0 %v3139
          %3253 = vmatprep.subr.mxu0 0.0
          %3254 = vmatpush2.msra.mxu0 %v3138
          %3255 = vmatprep.subr.mxu0 0.0
          %3256 = vmatpush2.msra.mxu0 %v3137
          %3257 = vmatprep.subr.mxu0 0.0
          %3258 = vmatpush2.msra.mxu0 %v3136
          %3259 = vmatprep.subr.mxu0 0.0
          %3260 = vmatpush2.msra.mxu0 %v3135
          %3261 = vmatprep.subr.mxu0 0.0
          %3262 = vmatpush2.msra.mxu0 %v3134
          %3263 = vmatprep.subr.mxu0 0.0
          %3264 = vmatpush2.msra.mxu0 %v3133
          %3265 = vmatprep.subr.mxu0 0.0
          %3266 = vmatpush2.msra.mxu0 %v3132
          %3267 = vmatprep.subr.mxu0 0.0
          %3268 = vmatpush2.msra.mxu0 %v3131
          %3269 = vmatprep.subr.mxu0 0.0
          %3270 = vmatpush2.msra.mxu0 %v3130
          %3271 = vmatprep.mubr.f32.mxu0 %v3201
          %3272 = vmatmul.mubr.f32.gmra.mxu0 %v3193
          %v3273 = vpop.f32.mrf.mxu0
          %v3274 = vadd.f32 %v3183, %v3273
          %v3275 = vpop.f32.mrf.mxu0
          %3276 = vdwg.mxu0
          %3277 = vmatprep.subr.mxu0 0.0
          %3278 = vmatpush1.msra.mxu0 %v3161
          %3279 = vmatprep.subr.mxu0 0.0
          %3280 = vmatpush1.msra.mxu0 %v3160
          %3281 = vmatprep.subr.mxu0 0.0
          %3282 = vmatpush1.msra.mxu0 %v3159
          %3283 = vmatprep.subr.mxu0 0.0
          %3284 = vmatpush1.msra.mxu0 %v3158
          %3285 = vmatprep.subr.mxu0 0.0
          %3286 = vmatpush1.msra.mxu0 %v3157
          %3287 = vmatprep.subr.mxu0 0.0
          %3288 = vmatpush1.msra.mxu0 %v3156
          %3289 = vmatprep.subr.mxu0 0.0
          %3290 = vmatpush1.msra.mxu0 %v3155
          %3291 = vmatprep.subr.mxu0 0.0
          %3292 = vmatpush1.msra.mxu0 %v3154
          %3293 = vmatprep.subr.mxu0 0.0
          %3294 = vmatpush1.msra.mxu0 %v3153
          %3295 = vmatprep.subr.mxu0 0.0
          %3296 = vmatpush1.msra.mxu0 %v3152
          %3297 = vmatprep.subr.mxu0 0.0
          %3298 = vmatpush1.msra.mxu0 %v3151
          %3299 = vmatprep.subr.mxu0 0.0
          %3300 = vmatpush1.msra.mxu0 %v3150
          %3301 = vmatprep.subr.mxu0 0.0
          %3302 = vmatpush1.msra.mxu0 %v3149
          %3303 = vmatprep.subr.mxu0 0.0
          %3304 = vmatpush1.msra.mxu0 %v3148
          %3305 = vmatprep.subr.mxu0 0.0
          %3306 = vmatpush1.msra.mxu0 %v3147
          %3307 = vmatprep.subr.mxu0 0.0
          %3308 = vmatpush1.msra.mxu0 %v3146
          %3309 = vmatprep.subr.mxu0 0.0
          %3310 = vmatpush2.msra.mxu0 %v3177
          %3311 = vmatprep.subr.mxu0 0.0
          %3312 = vmatpush2.msra.mxu0 %v3176
          %3313 = vmatprep.subr.mxu0 0.0
          %3314 = vmatpush2.msra.mxu0 %v3175
          %3315 = vmatprep.subr.mxu0 0.0
          %3316 = vmatpush2.msra.mxu0 %v3174
          %3317 = vmatprep.subr.mxu0 0.0
          %3318 = vmatpush2.msra.mxu0 %v3173
          %3319 = vmatprep.subr.mxu0 0.0
          %3320 = vmatpush2.msra.mxu0 %v3172
          %3321 = vmatprep.subr.mxu0 0.0
          %3322 = vmatpush2.msra.mxu0 %v3171
          %3323 = vmatprep.subr.mxu0 0.0
          %3324 = vmatpush2.msra.mxu0 %v3170
          %3325 = vmatprep.subr.mxu0 0.0
          %3326 = vmatpush2.msra.mxu0 %v3169
          %3327 = vmatprep.subr.mxu0 0.0
          %3328 = vmatpush2.msra.mxu0 %v3168
          %3329 = vmatprep.subr.mxu0 0.0
          %3330 = vmatpush2.msra.mxu0 %v3167
          %3331 = vmatprep.subr.mxu0 0.0
          %3332 = vmatpush2.msra.mxu0 %v3166
          %3333 = vmatprep.subr.mxu0 0.0
          %3334 = vmatpush2.msra.mxu0 %v3165
          %3335 = vmatprep.subr.mxu0 0.0
          %3336 = vmatpush2.msra.mxu0 %v3164
          %3337 = vmatprep.subr.mxu0 0.0
          %3338 = vmatpush2.msra.mxu0 %v3163
          %3339 = vmatprep.subr.mxu0 0.0
          %3340 = vmatpush2.msra.mxu0 %v3162
          %3341 = vmatprep.mubr.f32.mxu0 %v3202
          %3342 = vmatmul.mubr.f32.gmra.mxu0 %v3200
          %v3343 = vpop.f32.mrf.mxu0
          %v3344 = vadd.f32 %v3274, %v3343
          %v3345 = vpop.f32.mrf.mxu0
          %3346 = vdwg.mxu0
          %3348 = vset.pattern.permute.xlu0 0
          %3349 = vperm.xlu0 %3348, %v3111
          %v3350 = vpop.permute.xlu0 %3349
          %v3352 = vadd.f32 %v3350, %v3344
          %vm3353 = vcmask 41984
          %v3354 = vsel %vm3353, %v3344, 0.0
          %3355 = vadd.xlane.f32.xlu0 %v3354
          %v3356 = vpop.xlane.xlu0 %3355
          %v3357 = vrcp.pop 6.0
          %v3358 = vmul.f32 %v3356, %v3357
          %v3359 = vsub.f32 %v3352, %v3358
          %3360 = vst.msk [vmem:[#allocation4] sm:$0x3] %vm3353, %v3359
        $region56: #{forward.7} parent=47 // pred_fallthru
          _
        // Predicated region
        $region57: #{forward.7} parent=47 // pred_check
          %p3361 = pneg %p191
        $region58: #{forward.7} parent=47 // pred_check_branch
          %3363 = sbr.rel (%p3361) target = $region60
        $region59: #{forward.7} parent=47 // pred_region
          %s3365 = ssub.s32 32, 32
          %3366 = vsyncadd [#allocation5], %s3365
          %s3368 = sshll.u32 [#allocation4], 4
          %s3369 = int_to_ptr.vmem [resolvable:$true] %s3368
          %3371 = dma.vmem_to_hbm [thread:$0]  %s3369, 32, %s7, [#allocation5]
        $region60: #{forward.7} parent=47 // pred_fallthru
          _
        // Predicated region
        $region61: #{forward.7} parent=47 // pred_check
          %p3372 = pneg %p191
        $region62: #{forward.7} parent=47 // pred_check_branch
          %3374 = sbr.rel (%p3372) target = $region64
        $region63: #{forward.7} parent=47 // pred_region
          %3375 = dma.done [#allocation5], 32
        $region64: #{forward.7} parent=47 // pred_fallthru
          _
      $region48: #{forward.7} parent=5 // pred_fallthru
        _
      %p3376 = scmp.le.s32.totalorder 2, %s16
      // Predicated region
      $region65: #{forward.7} parent=5 // pred_check
        %p3377 = pneg %p3376
      $region66: #{forward.7} parent=5 // pred_check_branch
        %3379 = sbr.rel (%p3377) target = $region68
      $region67: #{forward.7} parent=5 // pred_region
        %s3380 = ssub.s32 %s16, 2
      $region68: #{forward.7} parent=5 // pred_fallthru
        _
    $region6: #{forward.7} parent=1 // loop_footer
      %s20 = sadd.s32 1, %s16
    $region7: #{forward.7} parent=1 // loop_footer_branch
      %15 = sbr.rel target = $region3
    $region8: #{forward.7} parent=1 // loop_exit
      _
    %3381 = vsyncpa [#allocation5], 1
    %s3382 = scalar_lea.sflag [#allocation5], 1
    %3383 = vsyncpa %s3382, 1

</llo_original>
